<compile_context>
chip_gen: v7x
topology: tpu7x:2x2x1
jax: 0.10.0
libtpu: 0.0.40
codegen_flags: <defaults>
</compile_context>

<pallas_src>
import functools

import jax
import jax.numpy as jnp
import numpy as np
from jax import lax
from jax.experimental import pallas as pl
from jax.experimental.pallas import tpu as pltpu

EPS = 1e-5
KSIZE = 3
TAPS = tuple((dh, dw) for dh in (-1, 0, 1) for dw in (-1, 0, 1))  # row-major 3x3


def resblock_kernel(mask_ref, x_ref, w1_ref, g1_ref, b1_ref,
                    w2_ref, g2_ref, b2_ref, out_ref, p_ref, *, W):
    """Fused Resblock on lane-dense (C, N*H*W) slabs.

    mask_ref : (9, N*H*W)   f32 VMEM  1.0 where the shifted tap is in-bounds
    x_ref    : (C, N*H*W)   f32 VMEM  input, channel-major / spatially flat
    w*_ref   : (C, C*9)     f32 VMEM  conv weights, columns ordered (kh, kw, ci)
    g*/b*    : (C, 1)       f32 VMEM  BatchNorm affine params
    out_ref  : (C, N*H*W)   f32 VMEM  output (lane-dense store)
    p_ref    : (C*9, N*H*W) f32 VMEM  scratch: im2col patch matrix
    """
    C, NHW = x_ref.shape
    inv_nhw = 1.0 / NHW

    def build_patches(y):
        # 9 shifted views, built ONCE per conv (hoisted out of any channel
        # loop).  Zero padding == roll along the flat (n,h,w) axis + boundary
        # mask; rolls go to the XLU, masks to the VPU, both cheap.
        for idx, (dh, dw) in enumerate(TAPS):
            off = dh * W + dw
            shifted = y if off == 0 else pltpu.roll(y, shift=(-off) % NHW, axis=1)
            if dh == 0 and dw == 0:
                p_ref[idx * C:(idx + 1) * C, :] = shifted
            else:
                p_ref[idx * C:(idx + 1) * C, :] = shifted * mask_ref[idx:idx + 1, :]

    def conv3x3(y, w_ref):
        build_patches(y)
        # one MXU matmul replaces C*C*9 scalar-broadcast VPU MACs
        return jnp.dot(w_ref[...], p_ref[...],
                       preferred_element_type=jnp.float32,
                       precision=lax.Precision.HIGHEST)

    def bn_train(y, g_ref, b_ref):
        # single-pass batch statistics (biased variance), per channel row
        s = jnp.sum(y, axis=1, keepdims=True)
        ss = jnp.sum(y * y, axis=1, keepdims=True)
        mean = s * inv_nhw
        var = ss * inv_nhw - mean * mean
        scale = g_ref[...] * lax.rsqrt(var + EPS)
        return (y - mean) * scale + b_ref[...]

    x = x_ref[...]
    # stage 1: ReLU(BN(conv3x3(x)))  -- y1 stays on-chip, no HBM round trip
    y1 = jnp.maximum(bn_train(conv3x3(x, w1_ref), g1_ref, b1_ref), 0.0)
    # stage 2: ReLU(BN(conv3x3(y1)) + x)
    y2 = bn_train(conv3x3(y1, w2_ref), g2_ref, b2_ref) + x
    out_ref[...] = jnp.maximum(y2, 0.0)


def _tap_masks(N, H, W):
    """(9, N*H*W) f32: 1.0 where the (dh,dw)-shifted sample is inside the image."""
    hh = np.arange(H)[:, None]
    ww = np.arange(W)[None, :]
    rows = []
    for dh, dw in TAPS:
        valid = ((hh + dh >= 0) & (hh + dh < H) &
                 (ww + dw >= 0) & (ww + dw < W))
        rows.append(np.broadcast_to(valid, (N, H, W)).reshape(-1))
    return np.stack(rows).astype(np.float32)


@jax.jit
def resblock_forward(x, w1, g1, b1, w2, g2, b2):
    """ReLU(BN(conv(ReLU(BN(conv(x))))) + x), training-mode BN, NCHW in/out."""
    N, C, H, W = x.shape
    NHW = N * H * W

    # layout plumbing in XLA: NCHW -> lane-dense (C, N*H*W) slabs
    x_flat = x.transpose(1, 0, 2, 3).reshape(C, NHW)
    # weight columns ordered (kh, kw, ci) to match the patch-row order
    wm1 = w1.transpose(0, 2, 3, 1).reshape(C, C * KSIZE * KSIZE)
    wm2 = w2.transpose(0, 2, 3, 1).reshape(C, C * KSIZE * KSIZE)
    masks = _tap_masks(N, H, W)  # trace-time constant

    vmem = pl.BlockSpec(memory_space=pltpu.MemorySpace.VMEM)
    out_flat = pl.pallas_call(
        functools.partial(resblock_kernel, W=W),
        out_shape=jax.ShapeDtypeStruct((C, NHW), jnp.float32),
        in_specs=[vmem] * 8,
        out_specs=vmem,
        scratch_shapes=[pltpu.VMEM((C * KSIZE * KSIZE, NHW), jnp.float32)],
    )(masks, x_flat, wm1, g1.reshape(C, 1), b1.reshape(C, 1),
      wm2, g2.reshape(C, 1), b2.reshape(C, 1))

    return out_flat.reshape(C, N, H, W).transpose(1, 0, 2, 3)


# ----------------------------- numpy reference -----------------------------
def _ref_conv(xn, wn):
    N, C, H, W = xn.shape
    xp = np.pad(xn, ((0, 0), (0, 0), (1, 1), (1, 1)))
    out = np.zeros_like(xn)
    for co in range(C):
        for ci in range(C):
            for kh in range(KSIZE):
                for kw in range(KSIZE):
                    out[:, co] += wn[co, ci, kh, kw] * xp[:, ci, kh:kh + H, kw:kw + W]
    return out


def _ref_bn(y, g, b):
    mean = y.mean(axis=(0, 2, 3), keepdims=True)
    var = y.var(axis=(0, 2, 3), keepdims=True)  # biased, like PyTorch train-mode BN
    return g[None, :, None, None] * (y - mean) / np.sqrt(var + EPS) + b[None, :, None, None]


def ref_forward(x, w1, g1, b1, w2, g2, b2):
    y = np.maximum(_ref_bn(_ref_conv(x, w1), g1, b1), 0.0)
    y = _ref_bn(_ref_conv(y, w2), g2, b2) + x
    return np.maximum(y, 0.0)


if __name__ == "__main__":
    key = jax.random.PRNGKey(0)
    kx, kw1, kw2 = jax.random.split(key, 3)

    N, C, H, W = 2, 3, 16, 16  # Resblock is hard-wired to 3 channels
    x = jax.random.normal(kx, (N, C, H, W), dtype=jnp.float32)

    # Deterministic parameter init (shapes from nn.Conv2d(3,3,3) / nn.BatchNorm2d(3)).
    w1 = 0.2 * jax.random.normal(kw1, (C, C, KSIZE, KSIZE), dtype=jnp.float32)
    w2 = 0.2 * jax.random.normal(kw2, (C, C, KSIZE, KSIZE), dtype=jnp.float32)
    g1 = 1.0 + 0.1 * jnp.arange(C, dtype=jnp.float32)
    b1 = 0.05 * jnp.arange(C, dtype=jnp.float32)
    g2 = 1.0 - 0.1 * jnp.arange(C, dtype=jnp.float32)
    b2 = -0.05 * jnp.arange(C, dtype=jnp.float32)

    out = jax.block_until_ready(resblock_forward(x, w1, g1, b1, w2, g2, b2))

    f64 = lambda a: np.asarray(a).astype(np.float64)
    expected = ref_forward(f64(x), f64(w1), f64(g1), f64(b1),
                           f64(w2), f64(g2), f64(b2))
    np.testing.assert_allclose(np.asarray(out), expected, rtol=1e-4, atol=1e-4)

    print("KERNEL_OK")
</pallas_src>

<mosaic_0001>
module attributes {stable_mosaic.version = 11 : i64} {
  func.func @resblock_kernel(%arg0: memref<9x512xf32, #tpu.memory_space<vmem>>, %arg1: memref<3x512xf32, #tpu.memory_space<vmem>>, %arg2: memref<3x27xf32, #tpu.memory_space<vmem>>, %arg3: memref<3x1xf32, #tpu.memory_space<vmem>>, %arg4: memref<3x1xf32, #tpu.memory_space<vmem>>, %arg5: memref<3x27xf32, #tpu.memory_space<vmem>>, %arg6: memref<3x1xf32, #tpu.memory_space<vmem>>, %arg7: memref<3x1xf32, #tpu.memory_space<vmem>>, %arg8: memref<3x512xf32, #tpu.memory_space<vmem>>, %arg9: memref<27x512xf32, #tpu.memory_space<vmem>>) attributes {dimension_semantics = [], scalar_prefetch = 0 : i64, scratch_operands = 1 : i64, tpu.core_type = #tpu.core_type<tc>} {
    %c0 = arith.constant 0 : index
    %c0_0 = arith.constant 0 : index
    %0 = vector.load %arg1[%c0, %c0_0] : memref<3x512xf32, #tpu.memory_space<vmem>>, vector<3x512xf32>
    %c17_i32 = arith.constant 17 : i32
    %1 = tpu.dynamic_rotate %0 by %c17_i32 dim 1 : vector<3x512xf32>, i32 -> vector<3x512xf32>
    %c0_1 = arith.constant 0 : index
    %c0_2 = arith.constant 0 : index
    %2 = vector.load %arg0[%c0_1, %c0_2] : memref<9x512xf32, #tpu.memory_space<vmem>>, vector<1x512xf32>
    %3 = vector.broadcast %2 : vector<1x512xf32> to vector<3x512xf32>
    %4 = arith.mulf %1, %3 : vector<3x512xf32>
    %c0_3 = arith.constant 0 : index
    %c0_4 = arith.constant 0 : index
    %5 = vector.load %arg9[%c0_3, %c0_4] : memref<27x512xf32, #tpu.memory_space<vmem>>, vector<3x512xf32>
    tpu.vector_store %arg9[%c0_3, %c0_4], %4 {strides = array<i32>} : memref<27x512xf32, #tpu.memory_space<vmem>>, vector<3x512xf32>,
    %c16_i32 = arith.constant 16 : i32
    %6 = tpu.dynamic_rotate %0 by %c16_i32 dim 1 : vector<3x512xf32>, i32 -> vector<3x512xf32>
    %c1 = arith.constant 1 : index
    %c0_5 = arith.constant 0 : index
    %7 = vector.load %arg0[%c1, %c0_5] : memref<9x512xf32, #tpu.memory_space<vmem>>, vector<1x512xf32>
    %8 = vector.broadcast %7 : vector<1x512xf32> to vector<3x512xf32>
    %9 = arith.mulf %6, %8 : vector<3x512xf32>
    %c3 = arith.constant 3 : index
    %c0_6 = arith.constant 0 : index
    %10 = vector.load %arg9[%c3, %c0_6] : memref<27x512xf32, #tpu.memory_space<vmem>>, vector<3x512xf32>
    tpu.vector_store %arg9[%c3, %c0_6], %9 {strides = array<i32>} : memref<27x512xf32, #tpu.memory_space<vmem>>, vector<3x512xf32>,
    %c15_i32 = arith.constant 15 : i32
    %11 = tpu.dynamic_rotate %0 by %c15_i32 dim 1 : vector<3x512xf32>, i32 -> vector<3x512xf32>
    %c2 = arith.constant 2 : index
    %c0_7 = arith.constant 0 : index
    %12 = vector.load %arg0[%c2, %c0_7] : memref<9x512xf32, #tpu.memory_space<vmem>>, vector<1x512xf32>
    %13 = vector.broadcast %12 : vector<1x512xf32> to vector<3x512xf32>
    %14 = arith.mulf %11, %13 : vector<3x512xf32>
    %c6 = arith.constant 6 : index
    %c0_8 = arith.constant 0 : index
    %15 = vector.load %arg9[%c6, %c0_8] : memref<27x512xf32, #tpu.memory_space<vmem>>, vector<3x512xf32>
    tpu.vector_store %arg9[%c6, %c0_8], %14 {strides = array<i32>} : memref<27x512xf32, #tpu.memory_space<vmem>>, vector<3x512xf32>,
    %c1_i32 = arith.constant 1 : i32
    %16 = tpu.dynamic_rotate %0 by %c1_i32 dim 1 : vector<3x512xf32>, i32 -> vector<3x512xf32>
    %c3_9 = arith.constant 3 : index
    %c0_10 = arith.constant 0 : index
    %17 = vector.load %arg0[%c3_9, %c0_10] : memref<9x512xf32, #tpu.memory_space<vmem>>, vector<1x512xf32>
    %18 = vector.broadcast %17 : vector<1x512xf32> to vector<3x512xf32>
    %19 = arith.mulf %16, %18 : vector<3x512xf32>
    %c9 = arith.constant 9 : index
    %c0_11 = arith.constant 0 : index
    %20 = vector.load %arg9[%c9, %c0_11] : memref<27x512xf32, #tpu.memory_space<vmem>>, vector<3x512xf32>
    tpu.vector_store %arg9[%c9, %c0_11], %19 {strides = array<i32>} : memref<27x512xf32, #tpu.memory_space<vmem>>, vector<3x512xf32>,
    %c12 = arith.constant 12 : index
    %c0_12 = arith.constant 0 : index
    %21 = vector.load %arg9[%c12, %c0_12] : memref<27x512xf32, #tpu.memory_space<vmem>>, vector<3x512xf32>
    tpu.vector_store %arg9[%c12, %c0_12], %0 {strides = array<i32>} : memref<27x512xf32, #tpu.memory_space<vmem>>, vector<3x512xf32>,
    %c511_i32 = arith.constant 511 : i32
    %22 = tpu.dynamic_rotate %0 by %c511_i32 dim 1 : vector<3x512xf32>, i32 -> vector<3x512xf32>
    %c5 = arith.constant 5 : index
    %c0_13 = arith.constant 0 : index
    %23 = vector.load %arg0[%c5, %c0_13] : memref<9x512xf32, #tpu.memory_space<vmem>>, vector<1x512xf32>
    %24 = vector.broadcast %23 : vector<1x512xf32> to vector<3x512xf32>
    %25 = arith.mulf %22, %24 : vector<3x512xf32>
    %c15 = arith.constant 15 : index
    %c0_14 = arith.constant 0 : index
    %26 = vector.load %arg9[%c15, %c0_14] : memref<27x512xf32, #tpu.memory_space<vmem>>, vector<3x512xf32>
    tpu.vector_store %arg9[%c15, %c0_14], %25 {strides = array<i32>} : memref<27x512xf32, #tpu.memory_space<vmem>>, vector<3x512xf32>,
    %c497_i32 = arith.constant 497 : i32
    %27 = tpu.dynamic_rotate %0 by %c497_i32 dim 1 : vector<3x512xf32>, i32 -> vector<3x512xf32>
    %c6_15 = arith.constant 6 : index
    %c0_16 = arith.constant 0 : index
    %28 = vector.load %arg0[%c6_15, %c0_16] : memref<9x512xf32, #tpu.memory_space<vmem>>, vector<1x512xf32>
    %29 = vector.broadcast %28 : vector<1x512xf32> to vector<3x512xf32>
    %30 = arith.mulf %27, %29 : vector<3x512xf32>
    %c18 = arith.constant 18 : index
    %c0_17 = arith.constant 0 : index
    %31 = vector.load %arg9[%c18, %c0_17] : memref<27x512xf32, #tpu.memory_space<vmem>>, vector<3x512xf32>
    tpu.vector_store %arg9[%c18, %c0_17], %30 {strides = array<i32>} : memref<27x512xf32, #tpu.memory_space<vmem>>, vector<3x512xf32>,
    %c496_i32 = arith.constant 496 : i32
    %32 = tpu.dynamic_rotate %0 by %c496_i32 dim 1 : vector<3x512xf32>, i32 -> vector<3x512xf32>
    %c7 = arith.constant 7 : index
    %c0_18 = arith.constant 0 : index
    %33 = vector.load %arg0[%c7, %c0_18] : memref<9x512xf32, #tpu.memory_space<vmem>>, vector<1x512xf32>
    %34 = vector.broadcast %33 : vector<1x512xf32> to vector<3x512xf32>
    %35 = arith.mulf %32, %34 : vector<3x512xf32>
    %c21 = arith.constant 21 : index
    %c0_19 = arith.constant 0 : index
    %36 = vector.load %arg9[%c21, %c0_19] : memref<27x512xf32, #tpu.memory_space<vmem>>, vector<3x512xf32>
    tpu.vector_store %arg9[%c21, %c0_19], %35 {strides = array<i32>} : memref<27x512xf32, #tpu.memory_space<vmem>>, vector<3x512xf32>,
    %c495_i32 = arith.constant 495 : i32
    %37 = tpu.dynamic_rotate %0 by %c495_i32 dim 1 : vector<3x512xf32>, i32 -> vector<3x512xf32>
    %c8 = arith.constant 8 : index
    %c0_20 = arith.constant 0 : index
    %38 = vector.load %arg0[%c8, %c0_20] : memref<9x512xf32, #tpu.memory_space<vmem>>, vector<1x512xf32>
    %39 = vector.broadcast %38 : vector<1x512xf32> to vector<3x512xf32>
    %40 = arith.mulf %37, %39 : vector<3x512xf32>
    %c24 = arith.constant 24 : index
    %c0_21 = arith.constant 0 : index
    %41 = vector.load %arg9[%c24, %c0_21] : memref<27x512xf32, #tpu.memory_space<vmem>>, vector<3x512xf32>
    tpu.vector_store %arg9[%c24, %c0_21], %40 {strides = array<i32>} : memref<27x512xf32, #tpu.memory_space<vmem>>, vector<3x512xf32>,
    %c0_22 = arith.constant 0 : index
    %c0_23 = arith.constant 0 : index
    %42 = vector.load %arg2[%c0_22, %c0_23] : memref<3x27xf32, #tpu.memory_space<vmem>>, vector<3x27xf32>
    %c0_24 = arith.constant 0 : index
    %c0_25 = arith.constant 0 : index
    %43 = vector.load %arg9[%c0_24, %c0_25] : memref<27x512xf32, #tpu.memory_space<vmem>>, vector<27x512xf32>
    %cst = arith.constant dense<0.000000e+00> : vector<3x512xf32>
    %44 = tpu.matmul %42, %43, %cst {dimension_numbers = #tpu.dot_dimension_numbers<[1], [0], [0], [1], [0, 0, 1, 1], [], []>, precision = #tpu.contract_precision<fp32>} : vector<3x27xf32>, vector<27x512xf32>, vector<3x512xf32> -> vector<3x512xf32>
    %cst_26 = arith.constant dense<0.000000e+00> : vector<3xf32>
    %45 = vector.multi_reduction <add>, %44, %cst_26 [1] : vector<3x512xf32> to vector<3xf32>
    %46 = vector.shape_cast %45 : vector<3xf32> to vector<3x1xf32>
    %47 = arith.mulf %44, %44 : vector<3x512xf32>
    %cst_27 = arith.constant dense<0.000000e+00> : vector<3xf32>
    %48 = vector.multi_reduction <add>, %47, %cst_27 [1] : vector<3x512xf32> to vector<3xf32>
    %49 = vector.shape_cast %48 : vector<3xf32> to vector<3x1xf32>
    %cst_28 = arith.constant 0.001953125 : f32
    %50 = vector.broadcast %cst_28 : f32 to vector<3x1xf32>
    %51 = arith.mulf %46, %50 : vector<3x1xf32>
    %cst_29 = arith.constant 0.001953125 : f32
    %52 = vector.broadcast %cst_29 : f32 to vector<3x1xf32>
    %53 = arith.mulf %49, %52 : vector<3x1xf32>
    %54 = arith.mulf %51, %51 : vector<3x1xf32>
    %55 = arith.subf %53, %54 : vector<3x1xf32>
    %c0_30 = arith.constant 0 : index
    %c0_31 = arith.constant 0 : index
    %56 = vector.load %arg3[%c0_30, %c0_31] : memref<3x1xf32, #tpu.memory_space<vmem>>, vector<3x1xf32>
    %cst_32 = arith.constant 9.99999974E-6 : f32
    %57 = vector.broadcast %cst_32 : f32 to vector<3x1xf32>
    %58 = arith.addf %55, %57 : vector<3x1xf32>
    %59 = math.rsqrt %58 : vector<3x1xf32>
    %60 = arith.mulf %56, %59 : vector<3x1xf32>
    %61 = vector.broadcast %51 : vector<3x1xf32> to vector<3x512xf32>
    %62 = arith.subf %44, %61 : vector<3x512xf32>
    %63 = vector.broadcast %60 : vector<3x1xf32> to vector<3x512xf32>
    %64 = arith.mulf %62, %63 : vector<3x512xf32>
    %c0_33 = arith.constant 0 : index
    %c0_34 = arith.constant 0 : index
    %65 = vector.load %arg4[%c0_33, %c0_34] : memref<3x1xf32, #tpu.memory_space<vmem>>, vector<3x1xf32>
    %66 = vector.broadcast %65 : vector<3x1xf32> to vector<3x512xf32>
    %67 = arith.addf %64, %66 : vector<3x512xf32>
    %cst_35 = arith.constant 0.000000e+00 : f32
    %68 = vector.broadcast %cst_35 : f32 to vector<3x512xf32>
    %69 = arith.maximumf %67, %68 : vector<3x512xf32>
    %c17_i32_36 = arith.constant 17 : i32
    %70 = tpu.dynamic_rotate %69 by %c17_i32_36 dim 1 : vector<3x512xf32>, i32 -> vector<3x512xf32>
    %c0_37 = arith.constant 0 : index
    %c0_38 = arith.constant 0 : index
    %71 = vector.load %arg0[%c0_37, %c0_38] : memref<9x512xf32, #tpu.memory_space<vmem>>, vector<1x512xf32>
    %72 = vector.broadcast %71 : vector<1x512xf32> to vector<3x512xf32>
    %73 = arith.mulf %70, %72 : vector<3x512xf32>
    %c0_39 = arith.constant 0 : index
    %c0_40 = arith.constant 0 : index
    %74 = vector.load %arg9[%c0_39, %c0_40] : memref<27x512xf32, #tpu.memory_space<vmem>>, vector<3x512xf32>
    tpu.vector_store %arg9[%c0_39, %c0_40], %73 {strides = array<i32>} : memref<27x512xf32, #tpu.memory_space<vmem>>, vector<3x512xf32>,
    %c16_i32_41 = arith.constant 16 : i32
    %75 = tpu.dynamic_rotate %69 by %c16_i32_41 dim 1 : vector<3x512xf32>, i32 -> vector<3x512xf32>
    %c1_42 = arith.constant 1 : index
    %c0_43 = arith.constant 0 : index
    %76 = vector.load %arg0[%c1_42, %c0_43] : memref<9x512xf32, #tpu.memory_space<vmem>>, vector<1x512xf32>
    %77 = vector.broadcast %76 : vector<1x512xf32> to vector<3x512xf32>
    %78 = arith.mulf %75, %77 : vector<3x512xf32>
    %c3_44 = arith.constant 3 : index
    %c0_45 = arith.constant 0 : index
    %79 = vector.load %arg9[%c3_44, %c0_45] : memref<27x512xf32, #tpu.memory_space<vmem>>, vector<3x512xf32>
    tpu.vector_store %arg9[%c3_44, %c0_45], %78 {strides = array<i32>} : memref<27x512xf32, #tpu.memory_space<vmem>>, vector<3x512xf32>,
    %c15_i32_46 = arith.constant 15 : i32
    %80 = tpu.dynamic_rotate %69 by %c15_i32_46 dim 1 : vector<3x512xf32>, i32 -> vector<3x512xf32>
    %c2_47 = arith.constant 2 : index
    %c0_48 = arith.constant 0 : index
    %81 = vector.load %arg0[%c2_47, %c0_48] : memref<9x512xf32, #tpu.memory_space<vmem>>, vector<1x512xf32>
    %82 = vector.broadcast %81 : vector<1x512xf32> to vector<3x512xf32>
    %83 = arith.mulf %80, %82 : vector<3x512xf32>
    %c6_49 = arith.constant 6 : index
    %c0_50 = arith.constant 0 : index
    %84 = vector.load %arg9[%c6_49, %c0_50] : memref<27x512xf32, #tpu.memory_space<vmem>>, vector<3x512xf32>
    tpu.vector_store %arg9[%c6_49, %c0_50], %83 {strides = array<i32>} : memref<27x512xf32, #tpu.memory_space<vmem>>, vector<3x512xf32>,
    %c1_i32_51 = arith.constant 1 : i32
    %85 = tpu.dynamic_rotate %69 by %c1_i32_51 dim 1 : vector<3x512xf32>, i32 -> vector<3x512xf32>
    %c3_52 = arith.constant 3 : index
    %c0_53 = arith.constant 0 : index
    %86 = vector.load %arg0[%c3_52, %c0_53] : memref<9x512xf32, #tpu.memory_space<vmem>>, vector<1x512xf32>
    %87 = vector.broadcast %86 : vector<1x512xf32> to vector<3x512xf32>
    %88 = arith.mulf %85, %87 : vector<3x512xf32>
    %c9_54 = arith.constant 9 : index
    %c0_55 = arith.constant 0 : index
    %89 = vector.load %arg9[%c9_54, %c0_55] : memref<27x512xf32, #tpu.memory_space<vmem>>, vector<3x512xf32>
    tpu.vector_store %arg9[%c9_54, %c0_55], %88 {strides = array<i32>} : memref<27x512xf32, #tpu.memory_space<vmem>>, vector<3x512xf32>,
    %c12_56 = arith.constant 12 : index
    %c0_57 = arith.constant 0 : index
    %90 = vector.load %arg9[%c12_56, %c0_57] : memref<27x512xf32, #tpu.memory_space<vmem>>, vector<3x512xf32>
    tpu.vector_store %arg9[%c12_56, %c0_57], %69 {strides = array<i32>} : memref<27x512xf32, #tpu.memory_space<vmem>>, vector<3x512xf32>,
    %c511_i32_58 = arith.constant 511 : i32
    %91 = tpu.dynamic_rotate %69 by %c511_i32_58 dim 1 : vector<3x512xf32>, i32 -> vector<3x512xf32>
    %c5_59 = arith.constant 5 : index
    %c0_60 = arith.constant 0 : index
    %92 = vector.load %arg0[%c5_59, %c0_60] : memref<9x512xf32, #tpu.memory_space<vmem>>, vector<1x512xf32>
    %93 = vector.broadcast %92 : vector<1x512xf32> to vector<3x512xf32>
    %94 = arith.mulf %91, %93 : vector<3x512xf32>
    %c15_61 = arith.constant 15 : index
    %c0_62 = arith.constant 0 : index
    %95 = vector.load %arg9[%c15_61, %c0_62] : memref<27x512xf32, #tpu.memory_space<vmem>>, vector<3x512xf32>
    tpu.vector_store %arg9[%c15_61, %c0_62], %94 {strides = array<i32>} : memref<27x512xf32, #tpu.memory_space<vmem>>, vector<3x512xf32>,
    %c497_i32_63 = arith.constant 497 : i32
    %96 = tpu.dynamic_rotate %69 by %c497_i32_63 dim 1 : vector<3x512xf32>, i32 -> vector<3x512xf32>
    %c6_64 = arith.constant 6 : index
    %c0_65 = arith.constant 0 : index
    %97 = vector.load %arg0[%c6_64, %c0_65] : memref<9x512xf32, #tpu.memory_space<vmem>>, vector<1x512xf32>
    %98 = vector.broadcast %97 : vector<1x512xf32> to vector<3x512xf32>
    %99 = arith.mulf %96, %98 : vector<3x512xf32>
    %c18_66 = arith.constant 18 : index
    %c0_67 = arith.constant 0 : index
    %100 = vector.load %arg9[%c18_66, %c0_67] : memref<27x512xf32, #tpu.memory_space<vmem>>, vector<3x512xf32>
    tpu.vector_store %arg9[%c18_66, %c0_67], %99 {strides = array<i32>} : memref<27x512xf32, #tpu.memory_space<vmem>>, vector<3x512xf32>,
    %c496_i32_68 = arith.constant 496 : i32
    %101 = tpu.dynamic_rotate %69 by %c496_i32_68 dim 1 : vector<3x512xf32>, i32 -> vector<3x512xf32>
    %c7_69 = arith.constant 7 : index
    %c0_70 = arith.constant 0 : index
    %102 = vector.load %arg0[%c7_69, %c0_70] : memref<9x512xf32, #tpu.memory_space<vmem>>, vector<1x512xf32>
    %103 = vector.broadcast %102 : vector<1x512xf32> to vector<3x512xf32>
    %104 = arith.mulf %101, %103 : vector<3x512xf32>
    %c21_71 = arith.constant 21 : index
    %c0_72 = arith.constant 0 : index
    %105 = vector.load %arg9[%c21_71, %c0_72] : memref<27x512xf32, #tpu.memory_space<vmem>>, vector<3x512xf32>
    tpu.vector_store %arg9[%c21_71, %c0_72], %104 {strides = array<i32>} : memref<27x512xf32, #tpu.memory_space<vmem>>, vector<3x512xf32>,
    %c495_i32_73 = arith.constant 495 : i32
    %106 = tpu.dynamic_rotate %69 by %c495_i32_73 dim 1 : vector<3x512xf32>, i32 -> vector<3x512xf32>
    %c8_74 = arith.constant 8 : index
    %c0_75 = arith.constant 0 : index
    %107 = vector.load %arg0[%c8_74, %c0_75] : memref<9x512xf32, #tpu.memory_space<vmem>>, vector<1x512xf32>
    %108 = vector.broadcast %107 : vector<1x512xf32> to vector<3x512xf32>
    %109 = arith.mulf %106, %108 : vector<3x512xf32>
    %c24_76 = arith.constant 24 : index
    %c0_77 = arith.constant 0 : index
    %110 = vector.load %arg9[%c24_76, %c0_77] : memref<27x512xf32, #tpu.memory_space<vmem>>, vector<3x512xf32>
    tpu.vector_store %arg9[%c24_76, %c0_77], %109 {strides = array<i32>} : memref<27x512xf32, #tpu.memory_space<vmem>>, vector<3x512xf32>,
    %c0_78 = arith.constant 0 : index
    %c0_79 = arith.constant 0 : index
    %111 = vector.load %arg5[%c0_78, %c0_79] : memref<3x27xf32, #tpu.memory_space<vmem>>, vector<3x27xf32>
    %c0_80 = arith.constant 0 : index
    %c0_81 = arith.constant 0 : index
    %112 = vector.load %arg9[%c0_80, %c0_81] : memref<27x512xf32, #tpu.memory_space<vmem>>, vector<27x512xf32>
    %cst_82 = arith.constant dense<0.000000e+00> : vector<3x512xf32>
    %113 = tpu.matmul %111, %112, %cst_82 {dimension_numbers = #tpu.dot_dimension_numbers<[1], [0], [0], [1], [0, 0, 1, 1], [], []>, precision = #tpu.contract_precision<fp32>} : vector<3x27xf32>, vector<27x512xf32>, vector<3x512xf32> -> vector<3x512xf32>
    %cst_83 = arith.constant dense<0.000000e+00> : vector<3xf32>
    %114 = vector.multi_reduction <add>, %113, %cst_83 [1] : vector<3x512xf32> to vector<3xf32>
    %115 = vector.shape_cast %114 : vector<3xf32> to vector<3x1xf32>
    %116 = arith.mulf %113, %113 : vector<3x512xf32>
    %cst_84 = arith.constant dense<0.000000e+00> : vector<3xf32>
    %117 = vector.multi_reduction <add>, %116, %cst_84 [1] : vector<3x512xf32> to vector<3xf32>
    %118 = vector.shape_cast %117 : vector<3xf32> to vector<3x1xf32>
    %cst_85 = arith.constant 0.001953125 : f32
    %119 = vector.broadcast %cst_85 : f32 to vector<3x1xf32>
    %120 = arith.mulf %115, %119 : vector<3x1xf32>
    %cst_86 = arith.constant 0.001953125 : f32
    %121 = vector.broadcast %cst_86 : f32 to vector<3x1xf32>
    %122 = arith.mulf %118, %121 : vector<3x1xf32>
    %123 = arith.mulf %120, %120 : vector<3x1xf32>
    %124 = arith.subf %122, %123 : vector<3x1xf32>
    %c0_87 = arith.constant 0 : index
    %c0_88 = arith.constant 0 : index
    %125 = vector.load %arg6[%c0_87, %c0_88] : memref<3x1xf32, #tpu.memory_space<vmem>>, vector<3x1xf32>
    %cst_89 = arith.constant 9.99999974E-6 : f32
    %126 = vector.broadcast %cst_89 : f32 to vector<3x1xf32>
    %127 = arith.addf %124, %126 : vector<3x1xf32>
    %128 = math.rsqrt %127 : vector<3x1xf32>
    %129 = arith.mulf %125, %128 : vector<3x1xf32>
    %130 = vector.broadcast %120 : vector<3x1xf32> to vector<3x512xf32>
    %131 = arith.subf %113, %130 : vector<3x512xf32>
    %132 = vector.broadcast %129 : vector<3x1xf32> to vector<3x512xf32>
    %133 = arith.mulf %131, %132 : vector<3x512xf32>
    %c0_90 = arith.constant 0 : index
    %c0_91 = arith.constant 0 : index
    %134 = vector.load %arg7[%c0_90, %c0_91] : memref<3x1xf32, #tpu.memory_space<vmem>>, vector<3x1xf32>
    %135 = vector.broadcast %134 : vector<3x1xf32> to vector<3x512xf32>
    %136 = arith.addf %133, %135 : vector<3x512xf32>
    %137 = arith.addf %136, %0 : vector<3x512xf32>
    %cst_92 = arith.constant 0.000000e+00 : f32
    %138 = vector.broadcast %cst_92 : f32 to vector<3x512xf32>
    %139 = arith.maximumf %137, %138 : vector<3x512xf32>
    %c0_93 = arith.constant 0 : index
    %c0_94 = arith.constant 0 : index
    %140 = vector.load %arg8[%c0_93, %c0_94] : memref<3x512xf32, #tpu.memory_space<vmem>>, vector<3x512xf32>
    tpu.vector_store %arg8[%c0_93, %c0_94], %139 {strides = array<i32>} : memref<3x512xf32, #tpu.memory_space<vmem>>, vector<3x512xf32>,
    return
  }
}

</mosaic_0001>

<llo_original>
// kernel: resblock_forward.1
$region0: #{resblock_forward.1}
  #allocation0 [shape = 'u32[]', space=smem, size = 0x4, offset = 0x4, fixed_abs, tag = 'smem constant byte address 0x4 - core index']
  #allocation1 [shape = 'u32[144,128]{1,0:T(1,128)}', space=vmem, size = 0x12000, scoped, tag = 'internal scratch']
  #allocation2 [shape = 'f32[27,512]{1,0:T(8,128)}', space=vmem, size = 0x10000, scoped, tag = 'scratch operand']
  %s0 = inlined_call_operand.vmem [shape: f32[9,512], index: 0, kind: input, shape index: {}]
  %s1 = inlined_call_operand.vmem [shape: f32[3,512], index: 1, kind: input, shape index: {}]
  %s2 = inlined_call_operand.vmem [shape: f32[3,27], index: 2, kind: input, shape index: {}]
  %s3 = inlined_call_operand.vmem [shape: f32[3,1], index: 3, kind: input, shape index: {}]
  %s4 = inlined_call_operand.vmem [shape: f32[3,1], index: 4, kind: input, shape index: {}]
  %s5 = inlined_call_operand.vmem [shape: f32[3,27], index: 5, kind: input, shape index: {}]
  %s6 = inlined_call_operand.vmem [shape: f32[3,1], index: 6, kind: input, shape index: {}]
  %s7 = inlined_call_operand.vmem [shape: f32[3,1], index: 7, kind: input, shape index: {}]
  %s8 = inlined_call_operand.vmem [shape: f32[3,512], index: 8, kind: output, shape index: {}]
  %s9 = sld [smem:[#allocation0]]
  $region42: #{resblock_forward.1} parent=0
    _
  %s11 = ssub.s32 1, %s9
  %s12 = scalar_select 0, %s11, %s9
  // Predicated region
  $region2: #{resblock_forward.1} parent=0 // pred_check
    _
  $region3: #{resblock_forward.1} parent=0 // pred_check_branch
    %14 = sbr.rel (0) target = $region5
  $region4: #{resblock_forward.1} parent=0 // pred_region
    _
  $region5: #{resblock_forward.1} parent=0 // pred_fallthru
    _
  // Predicated region
  $region6: #{resblock_forward.1} parent=0 // pred_check
    _
  $region7: #{resblock_forward.1} parent=0 // pred_check_branch
    %16 = sbr.rel (0) target = $region9
  $region8: #{resblock_forward.1} parent=0 // pred_region
    _
  $region9: #{resblock_forward.1} parent=0 // pred_fallthru
    _
  // Predicated region
  $region10: #{resblock_forward.1} parent=0 // pred_check
    _
  $region11: #{resblock_forward.1} parent=0 // pred_check_branch
    %18 = sbr.rel (0) target = $region13
  $region12: #{resblock_forward.1} parent=0 // pred_region
    _
  $region13: #{resblock_forward.1} parent=0 // pred_fallthru
    _
  // Predicated region
  $region14: #{resblock_forward.1} parent=0 // pred_check
    _
  $region15: #{resblock_forward.1} parent=0 // pred_check_branch
    %20 = sbr.rel (0) target = $region17
  $region16: #{resblock_forward.1} parent=0 // pred_region
    _
  $region17: #{resblock_forward.1} parent=0 // pred_fallthru
    _
  // Predicated region
  $region18: #{resblock_forward.1} parent=0 // pred_check
    _
  $region19: #{resblock_forward.1} parent=0 // pred_check_branch
    %22 = sbr.rel (0) target = $region21
  $region20: #{resblock_forward.1} parent=0 // pred_region
    _
  $region21: #{resblock_forward.1} parent=0 // pred_fallthru
    _
  // Predicated region
  $region22: #{resblock_forward.1} parent=0 // pred_check
    _
  $region23: #{resblock_forward.1} parent=0 // pred_check_branch
    %24 = sbr.rel (0) target = $region25
  $region24: #{resblock_forward.1} parent=0 // pred_region
    _
  $region25: #{resblock_forward.1} parent=0 // pred_fallthru
    _
  // Predicated region
  $region26: #{resblock_forward.1} parent=0 // pred_check
    _
  $region27: #{resblock_forward.1} parent=0 // pred_check_branch
    %26 = sbr.rel (0) target = $region29
  $region28: #{resblock_forward.1} parent=0 // pred_region
    _
  $region29: #{resblock_forward.1} parent=0 // pred_fallthru
    _
  // Predicated region
  $region30: #{resblock_forward.1} parent=0 // pred_check
    _
  $region31: #{resblock_forward.1} parent=0 // pred_check_branch
    %28 = sbr.rel (0) target = $region33
  $region32: #{resblock_forward.1} parent=0 // pred_region
    _
  $region33: #{resblock_forward.1} parent=0 // pred_fallthru
    _
  %v29 = vld [vmem:[%s1] sm:$0x77]
  %v30 = vld [vmem:[%s1 + $0x8] sm:$0x77]
  %v33 = vcombine.high %v29, %v29
  %v34 = vcombine.high %v30, %v30
  %37 = vrot.lane.b32.xlu0 %v29, 17
  %v38 = vpop.permute.xlu0 %37
  %39 = vrot.lane.b32.xlu0 %v33, 17
  %v40 = vpop.permute.xlu0 %39
  %41 = vrot.lane.b32.xlu0 %v30, 17
  %v42 = vpop.permute.xlu0 %41
  %43 = vrot.lane.b32.xlu0 %v34, 17
  %v44 = vpop.permute.xlu0 %43
  %v45 = vlaneseq
  %v46 = vand.u32 %v45, 127
  %vm47 = vcmp.lt.s32.totalorder %v46, 17
  %v48 = vsel %vm47, %v42, %v44
  %v49 = vsel %vm47, %v40, %v42
  %v50 = vsel %vm47, %v38, %v40
  %v51 = vsel %vm47, %v44, %v38
  %v52 = vld [vmem:[%s0] ss:$8 sm:$0xf]
  %v54 = vlaneseq
  %v55 = vshrl.u32 %v54, 7
  %v56 = vsub.s32 0, %v55
  %v57 = vrot.slane %v52, %v56
  %v58 = vlaneseq
  %v59 = vshrl.u32 %v58, 7
  %v60 = vsub.s32 1, %v59
  %v61 = vrot.slane %v52, %v60
  %v62 = vlaneseq
  %v63 = vshrl.u32 %v62, 7
  %v64 = vsub.s32 2, %v63
  %v65 = vrot.slane %v52, %v64
  %v66 = vlaneseq
  %v67 = vshrl.u32 %v66, 7
  %v68 = vsub.s32 3, %v67
  %v69 = vrot.slane %v52, %v68
  %v74 = vmul.f32 %v51, %v57
  %v75 = vmul.f32 %v50, %v61
  %v76 = vmul.f32 %v49, %v65
  %v77 = vmul.f32 %v48, %v69
  %78 = vst [vmem:[#allocation2] sm:$0x7] %v74
  %79 = vst [vmem:[#allocation2 + $0x8] sm:$0x7] %v75
  %80 = vst [vmem:[#allocation2 + $0x10] sm:$0x7] %v76
  %81 = vst [vmem:[#allocation2 + $0x18] sm:$0x7] %v77
  %82 = vrot.lane.b32.xlu0 %v29, 16
  %v83 = vpop.permute.xlu0 %82
  %84 = vrot.lane.b32.xlu0 %v33, 16
  %v85 = vpop.permute.xlu0 %84
  %86 = vrot.lane.b32.xlu0 %v30, 16
  %v87 = vpop.permute.xlu0 %86
  %88 = vrot.lane.b32.xlu0 %v34, 16
  %v89 = vpop.permute.xlu0 %88
  %vm90 = vcmp.lt.s32.totalorder %v46, 16
  %v91 = vsel %vm90, %v87, %v89
  %v92 = vsel %vm90, %v85, %v87
  %v93 = vsel %vm90, %v83, %v85
  %v94 = vsel %vm90, %v89, %v83
  %s95 = scalar_lea.vmem %s0, 1
  %v96 = vld [vmem:[%s95] ss:$8 sm:$0xf]
  %v98 = vlaneseq
  %v99 = vshrl.u32 %v98, 7
  %v100 = vsub.s32 0, %v99
  %v101 = vrot.slane %v96, %v100
  %v102 = vlaneseq
  %v103 = vshrl.u32 %v102, 7
  %v104 = vsub.s32 1, %v103
  %v105 = vrot.slane %v96, %v104
  %v106 = vlaneseq
  %v107 = vshrl.u32 %v106, 7
  %v108 = vsub.s32 2, %v107
  %v109 = vrot.slane %v96, %v108
  %v110 = vlaneseq
  %v111 = vshrl.u32 %v110, 7
  %v112 = vsub.s32 3, %v111
  %v113 = vrot.slane %v96, %v112
  %v118 = vmul.f32 %v94, %v101
  %v119 = vmul.f32 %v93, %v105
  %v120 = vmul.f32 %v92, %v109
  %v121 = vmul.f32 %v91, %v113
  %v126 = vrot.slane %v118, 5
  %v127 = vrot.slane %v119, 5
  %v128 = vrot.slane %v120, 5
  %v129 = vrot.slane %v121, 5
  %134 = vst [vmem:[#allocation2] sm:$0x38] %v126
  %135 = vst [vmem:[#allocation2 + $0x8] sm:$0x38] %v127
  %136 = vst [vmem:[#allocation2 + $0x10] sm:$0x38] %v128
  %137 = vst [vmem:[#allocation2 + $0x18] sm:$0x38] %v129
  %138 = vrot.lane.b32.xlu0 %v29, 15
  %v139 = vpop.permute.xlu0 %138
  %140 = vrot.lane.b32.xlu0 %v33, 15
  %v141 = vpop.permute.xlu0 %140
  %142 = vrot.lane.b32.xlu0 %v30, 15
  %v143 = vpop.permute.xlu0 %142
  %144 = vrot.lane.b32.xlu0 %v34, 15
  %v145 = vpop.permute.xlu0 %144
  %vm146 = vcmp.lt.s32.totalorder %v46, 15
  %v147 = vsel %vm146, %v143, %v145
  %v148 = vsel %vm146, %v141, %v143
  %v149 = vsel %vm146, %v139, %v141
  %v150 = vsel %vm146, %v145, %v139
  %s151 = scalar_lea.vmem %s0, 2
  %v152 = vld [vmem:[%s151] ss:$8 sm:$0xf]
  %v154 = vlaneseq
  %v155 = vshrl.u32 %v154, 7
  %v156 = vsub.s32 0, %v155
  %v157 = vrot.slane %v152, %v156
  %v158 = vlaneseq
  %v159 = vshrl.u32 %v158, 7
  %v160 = vsub.s32 1, %v159
  %v161 = vrot.slane %v152, %v160
  %v162 = vlaneseq
  %v163 = vshrl.u32 %v162, 7
  %v164 = vsub.s32 2, %v163
  %v165 = vrot.slane %v152, %v164
  %v166 = vlaneseq
  %v167 = vshrl.u32 %v166, 7
  %v168 = vsub.s32 3, %v167
  %v169 = vrot.slane %v152, %v168
  %v174 = vmul.f32 %v150, %v157
  %v175 = vmul.f32 %v149, %v161
  %v176 = vmul.f32 %v148, %v165
  %v177 = vmul.f32 %v147, %v169
  %v182 = vrot.slane %v174, 2
  %v183 = vrot.slane %v175, 2
  %v184 = vrot.slane %v176, 2
  %v185 = vrot.slane %v177, 2
  %190 = vst [vmem:[#allocation2] sm:$0xc0] %v182
  %191 = vst [vmem:[#allocation2 + $0x8] sm:$0xc0] %v183
  %192 = vst [vmem:[#allocation2 + $0x10] sm:$0xc0] %v184
  %193 = vst [vmem:[#allocation2 + $0x18] sm:$0xc0] %v185
  %194 = vst [vmem:[#allocation2 + $0x20] sm:$0x1] %v182
  %195 = vst [vmem:[#allocation2 + $0x28] sm:$0x1] %v183
  %196 = vst [vmem:[#allocation2 + $0x30] sm:$0x1] %v184
  %197 = vst [vmem:[#allocation2 + $0x38] sm:$0x1] %v185
  %198 = vrot.lane.b32.xlu0 %v29, 1
  %v199 = vpop.permute.xlu0 %198
  %200 = vrot.lane.b32.xlu0 %v33, 1
  %v201 = vpop.permute.xlu0 %200
  %202 = vrot.lane.b32.xlu0 %v30, 1
  %v203 = vpop.permute.xlu0 %202
  %204 = vrot.lane.b32.xlu0 %v34, 1
  %v205 = vpop.permute.xlu0 %204
  %vm206 = vcmp.lt.s32.totalorder %v46, 1
  %v207 = vsel %vm206, %v203, %v205
  %v208 = vsel %vm206, %v201, %v203
  %v209 = vsel %vm206, %v199, %v201
  %v210 = vsel %vm206, %v205, %v199
  %s211 = scalar_lea.vmem %s0, 3
  %v212 = vld [vmem:[%s211] ss:$8 sm:$0xf]
  %v214 = vlaneseq
  %v215 = vshrl.u32 %v214, 7
  %v216 = vsub.s32 0, %v215
  %v217 = vrot.slane %v212, %v216
  %v218 = vlaneseq
  %v219 = vshrl.u32 %v218, 7
  %v220 = vsub.s32 1, %v219
  %v221 = vrot.slane %v212, %v220
  %v222 = vlaneseq
  %v223 = vshrl.u32 %v222, 7
  %v224 = vsub.s32 2, %v223
  %v225 = vrot.slane %v212, %v224
  %v226 = vlaneseq
  %v227 = vshrl.u32 %v226, 7
  %v228 = vsub.s32 3, %v227
  %v229 = vrot.slane %v212, %v228
  %v234 = vmul.f32 %v210, %v217
  %v235 = vmul.f32 %v209, %v221
  %v236 = vmul.f32 %v208, %v225
  %v237 = vmul.f32 %v207, %v229
  %v242 = vrot.slane %v234, 7
  %v243 = vrot.slane %v235, 7
  %v244 = vrot.slane %v236, 7
  %v245 = vrot.slane %v237, 7
  %250 = vst [vmem:[#allocation2 + $0x20] sm:$0xe] %v242
  %251 = vst [vmem:[#allocation2 + $0x28] sm:$0xe] %v243
  %252 = vst [vmem:[#allocation2 + $0x30] sm:$0xe] %v244
  %253 = vst [vmem:[#allocation2 + $0x38] sm:$0xe] %v245
  %v254 = vcombine.low %v29, %v29
  %v255 = vcombine.low %v30, %v30
  %258 = vst [vmem:[#allocation2 + $0x20] sm:$0x70] %v254
  %259 = vst [vmem:[#allocation2 + $0x28] sm:$0x70] %v29
  %260 = vst [vmem:[#allocation2 + $0x30] sm:$0x70] %v255
  %261 = vst [vmem:[#allocation2 + $0x38] sm:$0x70] %v30
  %262 = vrot.lane.b32.xlu0 %v29, 127
  %v263 = vpop.permute.xlu0 %262
  %264 = vrot.lane.b32.xlu0 %v33, 127
  %v265 = vpop.permute.xlu0 %264
  %266 = vrot.lane.b32.xlu0 %v30, 127
  %v267 = vpop.permute.xlu0 %266
  %268 = vrot.lane.b32.xlu0 %v34, 127
  %v269 = vpop.permute.xlu0 %268
  %vm270 = vcmp.lt.s32.totalorder %v46, 127
  %v271 = vsel %vm270, %v267, %v269
  %v272 = vsel %vm270, %v265, %v267
  %v273 = vsel %vm270, %v263, %v265
  %v274 = vsel %vm270, %v269, %v263
  %s275 = scalar_lea.vmem %s0, 5
  %v276 = vld [vmem:[%s275] ss:$8 sm:$0xf]
  %v278 = vlaneseq
  %v279 = vshrl.u32 %v278, 7
  %v280 = vsub.s32 0, %v279
  %v281 = vrot.slane %v276, %v280
  %v282 = vlaneseq
  %v283 = vshrl.u32 %v282, 7
  %v284 = vsub.s32 1, %v283
  %v285 = vrot.slane %v276, %v284
  %v286 = vlaneseq
  %v287 = vshrl.u32 %v286, 7
  %v288 = vsub.s32 2, %v287
  %v289 = vrot.slane %v276, %v288
  %v290 = vlaneseq
  %v291 = vshrl.u32 %v290, 7
  %v292 = vsub.s32 3, %v291
  %v293 = vrot.slane %v276, %v292
  %v298 = vmul.f32 %v273, %v281
  %v299 = vmul.f32 %v272, %v285
  %v300 = vmul.f32 %v271, %v289
  %v301 = vmul.f32 %v274, %v293
  %v306 = vrot.slane %v298, 1
  %v307 = vrot.slane %v299, 1
  %v308 = vrot.slane %v300, 1
  %v309 = vrot.slane %v301, 1
  %314 = vst [vmem:[#allocation2 + $0x20] sm:$0x80] %v306
  %315 = vst [vmem:[#allocation2 + $0x28] sm:$0x80] %v307
  %316 = vst [vmem:[#allocation2 + $0x30] sm:$0x80] %v308
  %317 = vst [vmem:[#allocation2 + $0x38] sm:$0x80] %v309
  %318 = vst [vmem:[#allocation2 + $0x40] sm:$0x3] %v306
  %319 = vst [vmem:[#allocation2 + $0x48] sm:$0x3] %v307
  %320 = vst [vmem:[#allocation2 + $0x50] sm:$0x3] %v308
  %321 = vst [vmem:[#allocation2 + $0x58] sm:$0x3] %v309
  %322 = vrot.lane.b32.xlu0 %v29, 113
  %v323 = vpop.permute.xlu0 %322
  %324 = vrot.lane.b32.xlu0 %v33, 113
  %v325 = vpop.permute.xlu0 %324
  %326 = vrot.lane.b32.xlu0 %v30, 113
  %v327 = vpop.permute.xlu0 %326
  %328 = vrot.lane.b32.xlu0 %v34, 113
  %v329 = vpop.permute.xlu0 %328
  %vm330 = vcmp.lt.s32.totalorder %v46, 113
  %v331 = vsel %vm330, %v327, %v329
  %v332 = vsel %vm330, %v325, %v327
  %v333 = vsel %vm330, %v323, %v325
  %v334 = vsel %vm330, %v329, %v323
  %s335 = scalar_lea.vmem %s0, 6
  %v336 = vld [vmem:[%s335] ss:$8 sm:$0xf]
  %v338 = vlaneseq
  %v339 = vshrl.u32 %v338, 7
  %v340 = vsub.s32 0, %v339
  %v341 = vrot.slane %v336, %v340
  %v342 = vlaneseq
  %v343 = vshrl.u32 %v342, 7
  %v344 = vsub.s32 1, %v343
  %v345 = vrot.slane %v336, %v344
  %v346 = vlaneseq
  %v347 = vshrl.u32 %v346, 7
  %v348 = vsub.s32 2, %v347
  %v349 = vrot.slane %v336, %v348
  %v350 = vlaneseq
  %v351 = vshrl.u32 %v350, 7
  %v352 = vsub.s32 3, %v351
  %v353 = vrot.slane %v336, %v352
  %v358 = vmul.f32 %v333, %v341
  %v359 = vmul.f32 %v332, %v345
  %v360 = vmul.f32 %v331, %v349
  %v361 = vmul.f32 %v334, %v353
  %v366 = vrot.slane %v358, 6
  %v367 = vrot.slane %v359, 6
  %v368 = vrot.slane %v360, 6
  %v369 = vrot.slane %v361, 6
  %374 = vst [vmem:[#allocation2 + $0x40] sm:$0x1c] %v366
  %375 = vst [vmem:[#allocation2 + $0x48] sm:$0x1c] %v367
  %376 = vst [vmem:[#allocation2 + $0x50] sm:$0x1c] %v368
  %377 = vst [vmem:[#allocation2 + $0x58] sm:$0x1c] %v369
  %378 = vrot.lane.b32.xlu0 %v29, 112
  %v379 = vpop.permute.xlu0 %378
  %380 = vrot.lane.b32.xlu0 %v33, 112
  %v381 = vpop.permute.xlu0 %380
  %382 = vrot.lane.b32.xlu0 %v30, 112
  %v383 = vpop.permute.xlu0 %382
  %384 = vrot.lane.b32.xlu0 %v34, 112
  %v385 = vpop.permute.xlu0 %384
  %vm386 = vcmp.lt.s32.totalorder %v46, 112
  %v387 = vsel %vm386, %v383, %v385
  %v388 = vsel %vm386, %v381, %v383
  %v389 = vsel %vm386, %v379, %v381
  %v390 = vsel %vm386, %v385, %v379
  %s391 = scalar_lea.vmem %s0, 7
  %v392 = vld [vmem:[%s391] ss:$8 sm:$0xf]
  %v394 = vlaneseq
  %v395 = vshrl.u32 %v394, 7
  %v396 = vsub.s32 0, %v395
  %v397 = vrot.slane %v392, %v396
  %v398 = vlaneseq
  %v399 = vshrl.u32 %v398, 7
  %v400 = vsub.s32 1, %v399
  %v401 = vrot.slane %v392, %v400
  %v402 = vlaneseq
  %v403 = vshrl.u32 %v402, 7
  %v404 = vsub.s32 2, %v403
  %v405 = vrot.slane %v392, %v404
  %v406 = vlaneseq
  %v407 = vshrl.u32 %v406, 7
  %v408 = vsub.s32 3, %v407
  %v409 = vrot.slane %v392, %v408
  %v414 = vmul.f32 %v389, %v397
  %v415 = vmul.f32 %v388, %v401
  %v416 = vmul.f32 %v387, %v405
  %v417 = vmul.f32 %v390, %v409
  %v422 = vrot.slane %v414, 3
  %v423 = vrot.slane %v415, 3
  %v424 = vrot.slane %v416, 3
  %v425 = vrot.slane %v417, 3
  %430 = vst [vmem:[#allocation2 + $0x40] sm:$0xe0] %v422
  %431 = vst [vmem:[#allocation2 + $0x48] sm:$0xe0] %v423
  %432 = vst [vmem:[#allocation2 + $0x50] sm:$0xe0] %v424
  %433 = vst [vmem:[#allocation2 + $0x58] sm:$0xe0] %v425
  %434 = vrot.lane.b32.xlu0 %v29, 111
  %v435 = vpop.permute.xlu0 %434
  %436 = vrot.lane.b32.xlu0 %v33, 111
  %v437 = vpop.permute.xlu0 %436
  %438 = vrot.lane.b32.xlu0 %v30, 111
  %v439 = vpop.permute.xlu0 %438
  %440 = vrot.lane.b32.xlu0 %v34, 111
  %v441 = vpop.permute.xlu0 %440
  %vm442 = vcmp.lt.s32.totalorder %v46, 111
  %v443 = vsel %vm442, %v439, %v441
  %v444 = vsel %vm442, %v437, %v439
  %v445 = vsel %vm442, %v435, %v437
  %v446 = vsel %vm442, %v441, %v435
  %s447 = scalar_lea.vmem %s0, 32
  %v448 = vld [vmem:[%s447] ss:$8 sm:$0xf]
  %v450 = vlaneseq
  %v451 = vshrl.u32 %v450, 7
  %v452 = vsub.s32 0, %v451
  %v453 = vrot.slane %v448, %v452
  %v454 = vlaneseq
  %v455 = vshrl.u32 %v454, 7
  %v456 = vsub.s32 1, %v455
  %v457 = vrot.slane %v448, %v456
  %v458 = vlaneseq
  %v459 = vshrl.u32 %v458, 7
  %v460 = vsub.s32 2, %v459
  %v461 = vrot.slane %v448, %v460
  %v462 = vlaneseq
  %v463 = vshrl.u32 %v462, 7
  %v464 = vsub.s32 3, %v463
  %v465 = vrot.slane %v448, %v464
  %v470 = vmul.f32 %v445, %v453
  %v471 = vmul.f32 %v444, %v457
  %v472 = vmul.f32 %v443, %v461
  %v473 = vmul.f32 %v446, %v465
  %474 = vst [vmem:[#allocation2 + $0x60] sm:$0x7] %v470
  %475 = vst [vmem:[#allocation2 + $0x68] sm:$0x7] %v471
  %476 = vst [vmem:[#allocation2 + $0x70] sm:$0x7] %v472
  %477 = vst [vmem:[#allocation2 + $0x78] sm:$0x7] %v473
  %v478 = vld [vmem:[%s2] sm:$0x7]
  %v479 = vld [vmem:[#allocation2] sm:$0xff]
  %v480 = vld [vmem:[#allocation2 + $0x8] sm:$0xff]
  %v481 = vld [vmem:[#allocation2 + $0x10] sm:$0xff]
  %v482 = vld [vmem:[#allocation2 + $0x18] sm:$0xff]
  %v483 = vld [vmem:[#allocation2 + $0x20] sm:$0xff]
  %v484 = vld [vmem:[#allocation2 + $0x28] sm:$0xff]
  %v485 = vld [vmem:[#allocation2 + $0x30] sm:$0xff]
  %v486 = vld [vmem:[#allocation2 + $0x38] sm:$0xff]
  %v487 = vld [vmem:[#allocation2 + $0x40] sm:$0xff]
  %v488 = vld [vmem:[#allocation2 + $0x48] sm:$0xff]
  %v489 = vld [vmem:[#allocation2 + $0x50] sm:$0xff]
  %v490 = vld [vmem:[#allocation2 + $0x58] sm:$0xff]
  %v491 = vld [vmem:[#allocation2 + $0x60] sm:$0x7]
  %v492 = vld [vmem:[#allocation2 + $0x68] sm:$0x7]
  %v493 = vld [vmem:[#allocation2 + $0x70] sm:$0x7]
  %v494 = vld [vmem:[#allocation2 + $0x78] sm:$0x7]
  %vm495 = vcmask 220160
  %v497 = vsel %vm495, %v478, 0
  %vm499 = vcmask 1042432
  %v501 = vsel %vm499, %v491, 0
  %v504 = vsel %vm499, %v492, 0
  %v507 = vsel %vm499, %v493, 0
  %v510 = vsel %vm499, %v494, 0
  %v512 = vand.u32 %v480, 4294901760
  %513 = vmatprep.subr.mxu0 %v512
  %v514 = vand.u32 %v479, 4294901760
  %515 = vmatpush1.msra.mxu0 %v514
  %v516 = vand.u32 %v484, 4294901760
  %517 = vmatprep.subr.mxu0 %v516
  %v518 = vand.u32 %v483, 4294901760
  %519 = vmatpush1.msra.mxu0 %v518
  %v520 = vand.u32 %v488, 4294901760
  %521 = vmatprep.subr.mxu0 %v520
  %v522 = vand.u32 %v487, 4294901760
  %523 = vmatpush1.msra.mxu0 %v522
  %v524 = vand.u32 %v504, 4294901760
  %525 = vmatprep.subr.mxu0 %v524
  %v526 = vand.u32 %v501, 4294901760
  %527 = vmatpush1.msra.mxu0 %v526
  %528 = vmatprep.subr.mxu0 0.0
  %529 = vmatpush1.msra.mxu0 0.0
  %530 = vmatprep.subr.mxu0 0.0
  %531 = vmatpush1.msra.mxu0 0.0
  %532 = vmatprep.subr.mxu0 0.0
  %533 = vmatpush1.msra.mxu0 0.0
  %534 = vmatprep.subr.mxu0 0.0
  %535 = vmatpush1.msra.mxu0 0.0
  %536 = vmatprep.subr.mxu0 0.0
  %537 = vmatpush1.msra.mxu0 0.0
  %538 = vmatprep.subr.mxu0 0.0
  %539 = vmatpush1.msra.mxu0 0.0
  %540 = vmatprep.subr.mxu0 0.0
  %541 = vmatpush1.msra.mxu0 0.0
  %542 = vmatprep.subr.mxu0 0.0
  %543 = vmatpush1.msra.mxu0 0.0
  %544 = vmatprep.subr.mxu0 0.0
  %545 = vmatpush1.msra.mxu0 0.0
  %546 = vmatprep.subr.mxu0 0.0
  %547 = vmatpush1.msra.mxu0 0.0
  %548 = vmatprep.subr.mxu0 0.0
  %549 = vmatpush1.msra.mxu0 0.0
  %550 = vmatprep.subr.mxu0 0.0
  %551 = vmatpush1.msra.mxu0 0.0
  %552 = vmatprep.subr.mxu0 0.0
  %553 = vmatpush1.msra.mxu0 0.0
  %554 = vmatprep.subr.mxu0 0.0
  %555 = vmatpush1.msra.mxu0 0.0
  %556 = vmatprep.subr.mxu0 0.0
  %557 = vmatpush1.msra.mxu0 0.0
  %558 = vmatprep.subr.mxu0 0.0
  %559 = vmatpush1.msra.mxu0 0.0
  %560 = vmatprep.subr.mxu0 0.0
  %561 = vmatpush1.msra.mxu0 0.0
  %562 = vmatprep.subr.mxu0 0.0
  %563 = vmatpush1.msra.mxu0 0.0
  %564 = vmatprep.subr.mxu0 0.0
  %565 = vmatpush1.msra.mxu0 0.0
  %566 = vmatprep.subr.mxu0 0.0
  %567 = vmatpush1.msra.mxu0 0.0
  %568 = vmatprep.subr.mxu0 0.0
  %569 = vmatpush1.msra.mxu0 0.0
  %570 = vmatprep.subr.mxu0 0.0
  %571 = vmatpush1.msra.mxu0 0.0
  %572 = vmatprep.subr.mxu0 0.0
  %573 = vmatpush1.msra.mxu0 0.0
  %574 = vmatprep.subr.mxu0 0.0
  %575 = vmatpush1.msra.mxu0 0.0
  %576 = vmatprep.subr.mxu0 0.0
  %577 = vmatpush1.msra.mxu0 0.0
  %578 = vmatprep.subr.mxu0 0.0
  %579 = vmatpush1.msra.mxu0 0.0
  %580 = vmatprep.subr.mxu0 0.0
  %581 = vmatpush1.msra.mxu0 0.0
  %582 = vmatprep.subr.mxu0 0.0
  %583 = vmatpush1.msra.mxu0 0.0
  %584 = vmatprep.mubr.f32.mxu0 0.0
  %v585 = vand.u32 %v497, 4294901760
  %v586 = vsub.f32 %v497, %v585
  %v587 = vand.u32 %v586, 4294901760
  %v588 = vsub.f32 %v586, %v587
  %v589 = vand.u32 %v588, 4294901760
  %590 = vmatmul.mubr.f32.gmra.mrb[0].mxu0 %v589
  %v591 = vpop.f32.mrb[0].mxu0
  %v592 = vadd.f32 0.0, %v591
  %v593 = vpop.f32.mrb[0].mxu0
  %v594 = vadd.f32 0.0, %v593
  %595 = vdwg.mxu0
  %v596 = vand.u32 %v480, 4294901760
  %v597 = vsub.f32 %v480, %v596
  %v598 = vand.u32 %v597, 4294901760
  %v599 = vsub.f32 %v597, %v598
  %v600 = vand.u32 %v599, 4294901760
  %601 = vmatprep.subr.mxu0 %v600
  %v602 = vand.u32 %v479, 4294901760
  %v603 = vsub.f32 %v479, %v602
  %v604 = vand.u32 %v603, 4294901760
  %v605 = vsub.f32 %v603, %v604
  %v606 = vand.u32 %v605, 4294901760
  %607 = vmatpush1.msra.mxu0 %v606
  %v608 = vand.u32 %v484, 4294901760
  %v609 = vsub.f32 %v484, %v608
  %v610 = vand.u32 %v609, 4294901760
  %v611 = vsub.f32 %v609, %v610
  %v612 = vand.u32 %v611, 4294901760
  %613 = vmatprep.subr.mxu0 %v612
  %v614 = vand.u32 %v483, 4294901760
  %v615 = vsub.f32 %v483, %v614
  %v616 = vand.u32 %v615, 4294901760
  %v617 = vsub.f32 %v615, %v616
  %v618 = vand.u32 %v617, 4294901760
  %619 = vmatpush1.msra.mxu0 %v618
  %v620 = vand.u32 %v488, 4294901760
  %v621 = vsub.f32 %v488, %v620
  %v622 = vand.u32 %v621, 4294901760
  %v623 = vsub.f32 %v621, %v622
  %v624 = vand.u32 %v623, 4294901760
  %625 = vmatprep.subr.mxu0 %v624
  %v626 = vand.u32 %v487, 4294901760
  %v627 = vsub.f32 %v487, %v626
  %v628 = vand.u32 %v627, 4294901760
  %v629 = vsub.f32 %v627, %v628
  %v630 = vand.u32 %v629, 4294901760
  %631 = vmatpush1.msra.mxu0 %v630
  %v632 = vand.u32 %v504, 4294901760
  %v633 = vsub.f32 %v504, %v632
  %v634 = vand.u32 %v633, 4294901760
  %v635 = vsub.f32 %v633, %v634
  %v636 = vand.u32 %v635, 4294901760
  %637 = vmatprep.subr.mxu0 %v636
  %v638 = vand.u32 %v501, 4294901760
  %v639 = vsub.f32 %v501, %v638
  %v640 = vand.u32 %v639, 4294901760
  %v641 = vsub.f32 %v639, %v640
  %v642 = vand.u32 %v641, 4294901760
  %643 = vmatpush1.msra.mxu0 %v642
  %644 = vmatprep.subr.mxu0 0.0
  %645 = vmatpush1.msra.mxu0 0.0
  %646 = vmatprep.subr.mxu0 0.0
  %647 = vmatpush1.msra.mxu0 0.0
  %648 = vmatprep.subr.mxu0 0.0
  %649 = vmatpush1.msra.mxu0 0.0
  %650 = vmatprep.subr.mxu0 0.0
  %651 = vmatpush1.msra.mxu0 0.0
  %652 = vmatprep.subr.mxu0 0.0
  %653 = vmatpush1.msra.mxu0 0.0
  %654 = vmatprep.subr.mxu0 0.0
  %655 = vmatpush1.msra.mxu0 0.0
  %656 = vmatprep.subr.mxu0 0.0
  %657 = vmatpush1.msra.mxu0 0.0
  %658 = vmatprep.subr.mxu0 0.0
  %659 = vmatpush1.msra.mxu0 0.0
  %660 = vmatprep.subr.mxu0 0.0
  %661 = vmatpush1.msra.mxu0 0.0
  %662 = vmatprep.subr.mxu0 0.0
  %663 = vmatpush1.msra.mxu0 0.0
  %664 = vmatprep.subr.mxu0 0.0
  %665 = vmatpush1.msra.mxu0 0.0
  %666 = vmatprep.subr.mxu0 0.0
  %667 = vmatpush1.msra.mxu0 0.0
  %668 = vmatprep.subr.mxu0 0.0
  %669 = vmatpush1.msra.mxu0 0.0
  %670 = vmatprep.subr.mxu0 0.0
  %671 = vmatpush1.msra.mxu0 0.0
  %672 = vmatprep.subr.mxu0 0.0
  %673 = vmatpush1.msra.mxu0 0.0
  %674 = vmatprep.subr.mxu0 0.0
  %675 = vmatpush1.msra.mxu0 0.0
  %676 = vmatprep.subr.mxu0 0.0
  %677 = vmatpush1.msra.mxu0 0.0
  %678 = vmatprep.subr.mxu0 0.0
  %679 = vmatpush1.msra.mxu0 0.0
  %680 = vmatprep.subr.mxu0 0.0
  %681 = vmatpush1.msra.mxu0 0.0
  %682 = vmatprep.subr.mxu0 0.0
  %683 = vmatpush1.msra.mxu0 0.0
  %684 = vmatprep.subr.mxu0 0.0
  %685 = vmatpush1.msra.mxu0 0.0
  %686 = vmatprep.subr.mxu0 0.0
  %687 = vmatpush1.msra.mxu0 0.0
  %688 = vmatprep.subr.mxu0 0.0
  %689 = vmatpush1.msra.mxu0 0.0
  %690 = vmatprep.subr.mxu0 0.0
  %691 = vmatpush1.msra.mxu0 0.0
  %692 = vmatprep.subr.mxu0 0.0
  %693 = vmatpush1.msra.mxu0 0.0
  %694 = vmatprep.subr.mxu0 0.0
  %695 = vmatpush1.msra.mxu0 0.0
  %696 = vmatprep.subr.mxu0 0.0
  %697 = vmatpush1.msra.mxu0 0.0
  %698 = vmatprep.subr.mxu0 0.0
  %699 = vmatpush1.msra.mxu0 0.0
  %700 = vmatprep.mubr.f32.mxu0 0.0
  %v701 = vand.u32 %v497, 4294901760
  %702 = vmatmul.mubr.f32.gmra.mrb[0].mxu0 %v701
  %v703 = vpop.f32.mrb[0].mxu0
  %v704 = vadd.f32 %v592, %v703
  %v705 = vpop.f32.mrb[0].mxu0
  %v706 = vadd.f32 %v594, %v705
  %707 = vdwg.mxu0
  %v708 = vand.u32 %v480, 4294901760
  %v709 = vsub.f32 %v480, %v708
  %710 = vmatprep.subr.mxu0 %v709
  %v711 = vand.u32 %v479, 4294901760
  %v712 = vsub.f32 %v479, %v711
  %713 = vmatpush1.msra.mxu0 %v712
  %v714 = vand.u32 %v484, 4294901760
  %v715 = vsub.f32 %v484, %v714
  %716 = vmatprep.subr.mxu0 %v715
  %v717 = vand.u32 %v483, 4294901760
  %v718 = vsub.f32 %v483, %v717
  %719 = vmatpush1.msra.mxu0 %v718
  %v720 = vand.u32 %v488, 4294901760
  %v721 = vsub.f32 %v488, %v720
  %722 = vmatprep.subr.mxu0 %v721
  %v723 = vand.u32 %v487, 4294901760
  %v724 = vsub.f32 %v487, %v723
  %725 = vmatpush1.msra.mxu0 %v724
  %v726 = vand.u32 %v504, 4294901760
  %v727 = vsub.f32 %v504, %v726
  %728 = vmatprep.subr.mxu0 %v727
  %v729 = vand.u32 %v501, 4294901760
  %v730 = vsub.f32 %v501, %v729
  %731 = vmatpush1.msra.mxu0 %v730
  %732 = vmatprep.subr.mxu0 0.0
  %733 = vmatpush1.msra.mxu0 0.0
  %734 = vmatprep.subr.mxu0 0.0
  %735 = vmatpush1.msra.mxu0 0.0
  %736 = vmatprep.subr.mxu0 0.0
  %737 = vmatpush1.msra.mxu0 0.0
  %738 = vmatprep.subr.mxu0 0.0
  %739 = vmatpush1.msra.mxu0 0.0
  %740 = vmatprep.subr.mxu0 0.0
  %741 = vmatpush1.msra.mxu0 0.0
  %742 = vmatprep.subr.mxu0 0.0
  %743 = vmatpush1.msra.mxu0 0.0
  %744 = vmatprep.subr.mxu0 0.0
  %745 = vmatpush1.msra.mxu0 0.0
  %746 = vmatprep.subr.mxu0 0.0
  %747 = vmatpush1.msra.mxu0 0.0
  %748 = vmatprep.subr.mxu0 0.0
  %749 = vmatpush1.msra.mxu0 0.0
  %750 = vmatprep.subr.mxu0 0.0
  %751 = vmatpush1.msra.mxu0 0.0
  %752 = vmatprep.subr.mxu0 0.0
  %753 = vmatpush1.msra.mxu0 0.0
  %754 = vmatprep.subr.mxu0 0.0
  %755 = vmatpush1.msra.mxu0 0.0
  %756 = vmatprep.subr.mxu0 0.0
  %757 = vmatpush1.msra.mxu0 0.0
  %758 = vmatprep.subr.mxu0 0.0
  %759 = vmatpush1.msra.mxu0 0.0
  %760 = vmatprep.subr.mxu0 0.0
  %761 = vmatpush1.msra.mxu0 0.0
  %762 = vmatprep.subr.mxu0 0.0
  %763 = vmatpush1.msra.mxu0 0.0
  %764 = vmatprep.subr.mxu0 0.0
  %765 = vmatpush1.msra.mxu0 0.0
  %766 = vmatprep.subr.mxu0 0.0
  %767 = vmatpush1.msra.mxu0 0.0
  %768 = vmatprep.subr.mxu0 0.0
  %769 = vmatpush1.msra.mxu0 0.0
  %770 = vmatprep.subr.mxu0 0.0
  %771 = vmatpush1.msra.mxu0 0.0
  %772 = vmatprep.subr.mxu0 0.0
  %773 = vmatpush1.msra.mxu0 0.0
  %774 = vmatprep.subr.mxu0 0.0
  %775 = vmatpush1.msra.mxu0 0.0
  %776 = vmatprep.subr.mxu0 0.0
  %777 = vmatpush1.msra.mxu0 0.0
  %778 = vmatprep.subr.mxu0 0.0
  %779 = vmatpush1.msra.mxu0 0.0
  %780 = vmatprep.subr.mxu0 0.0
  %781 = vmatpush1.msra.mxu0 0.0
  %782 = vmatprep.subr.mxu0 0.0
  %783 = vmatpush1.msra.mxu0 0.0
  %784 = vmatprep.subr.mxu0 0.0
  %785 = vmatpush1.msra.mxu0 0.0
  %786 = vmatprep.subr.mxu0 0.0
  %787 = vmatpush1.msra.mxu0 0.0
  %788 = vmatprep.mubr.f32.mxu0 0.0
  %v789 = vand.u32 %v497, 4294901760
  %v790 = vsub.f32 %v497, %v789
  %791 = vmatmul.mubr.f32.gmra.mrb[0].mxu0 %v790
  %v792 = vpop.f32.mrb[0].mxu0
  %v793 = vadd.f32 %v704, %v792
  %v794 = vpop.f32.mrb[0].mxu0
  %v795 = vadd.f32 %v706, %v794
  %796 = vdwg.mxu0
  %v797 = vand.u32 %v480, 4294901760
  %798 = vmatprep.subr.mxu0 %v797
  %v799 = vand.u32 %v479, 4294901760
  %800 = vmatpush1.msra.mxu0 %v799
  %v801 = vand.u32 %v484, 4294901760
  %802 = vmatprep.subr.mxu0 %v801
  %v803 = vand.u32 %v483, 4294901760
  %804 = vmatpush1.msra.mxu0 %v803
  %v805 = vand.u32 %v488, 4294901760
  %806 = vmatprep.subr.mxu0 %v805
  %v807 = vand.u32 %v487, 4294901760
  %808 = vmatpush1.msra.mxu0 %v807
  %v809 = vand.u32 %v504, 4294901760
  %810 = vmatprep.subr.mxu0 %v809
  %v811 = vand.u32 %v501, 4294901760
  %812 = vmatpush1.msra.mxu0 %v811
  %813 = vmatprep.subr.mxu0 0.0
  %814 = vmatpush1.msra.mxu0 0.0
  %815 = vmatprep.subr.mxu0 0.0
  %816 = vmatpush1.msra.mxu0 0.0
  %817 = vmatprep.subr.mxu0 0.0
  %818 = vmatpush1.msra.mxu0 0.0
  %819 = vmatprep.subr.mxu0 0.0
  %820 = vmatpush1.msra.mxu0 0.0
  %821 = vmatprep.subr.mxu0 0.0
  %822 = vmatpush1.msra.mxu0 0.0
  %823 = vmatprep.subr.mxu0 0.0
  %824 = vmatpush1.msra.mxu0 0.0
  %825 = vmatprep.subr.mxu0 0.0
  %826 = vmatpush1.msra.mxu0 0.0
  %827 = vmatprep.subr.mxu0 0.0
  %828 = vmatpush1.msra.mxu0 0.0
  %829 = vmatprep.subr.mxu0 0.0
  %830 = vmatpush1.msra.mxu0 0.0
  %831 = vmatprep.subr.mxu0 0.0
  %832 = vmatpush1.msra.mxu0 0.0
  %833 = vmatprep.subr.mxu0 0.0
  %834 = vmatpush1.msra.mxu0 0.0
  %835 = vmatprep.subr.mxu0 0.0
  %836 = vmatpush1.msra.mxu0 0.0
  %837 = vmatprep.subr.mxu0 0.0
  %838 = vmatpush1.msra.mxu0 0.0
  %839 = vmatprep.subr.mxu0 0.0
  %840 = vmatpush1.msra.mxu0 0.0
  %841 = vmatprep.subr.mxu0 0.0
  %842 = vmatpush1.msra.mxu0 0.0
  %843 = vmatprep.subr.mxu0 0.0
  %844 = vmatpush1.msra.mxu0 0.0
  %845 = vmatprep.subr.mxu0 0.0
  %846 = vmatpush1.msra.mxu0 0.0
  %847 = vmatprep.subr.mxu0 0.0
  %848 = vmatpush1.msra.mxu0 0.0
  %849 = vmatprep.subr.mxu0 0.0
  %850 = vmatpush1.msra.mxu0 0.0
  %851 = vmatprep.subr.mxu0 0.0
  %852 = vmatpush1.msra.mxu0 0.0
  %853 = vmatprep.subr.mxu0 0.0
  %854 = vmatpush1.msra.mxu0 0.0
  %855 = vmatprep.subr.mxu0 0.0
  %856 = vmatpush1.msra.mxu0 0.0
  %857 = vmatprep.subr.mxu0 0.0
  %858 = vmatpush1.msra.mxu0 0.0
  %859 = vmatprep.subr.mxu0 0.0
  %860 = vmatpush1.msra.mxu0 0.0
  %861 = vmatprep.subr.mxu0 0.0
  %862 = vmatpush1.msra.mxu0 0.0
  %863 = vmatprep.subr.mxu0 0.0
  %864 = vmatpush1.msra.mxu0 0.0
  %865 = vmatprep.subr.mxu0 0.0
  %866 = vmatpush1.msra.mxu0 0.0
  %867 = vmatprep.subr.mxu0 0.0
  %868 = vmatpush1.msra.mxu0 0.0
  %869 = vmatprep.mubr.f32.mxu0 0.0
  %v870 = vand.u32 %v497, 4294901760
  %v871 = vsub.f32 %v497, %v870
  %v872 = vand.u32 %v871, 4294901760
  %873 = vmatmul.mubr.f32.gmra.mrb[0].mxu0 %v872
  %v874 = vpop.f32.mrb[0].mxu0
  %v875 = vadd.f32 %v793, %v874
  %v876 = vpop.f32.mrb[0].mxu0
  %v877 = vadd.f32 %v795, %v876
  %878 = vdwg.mxu0
  %v879 = vand.u32 %v480, 4294901760
  %v880 = vsub.f32 %v480, %v879
  %v881 = vand.u32 %v880, 4294901760
  %882 = vmatprep.subr.mxu0 %v881
  %v883 = vand.u32 %v479, 4294901760
  %v884 = vsub.f32 %v479, %v883
  %v885 = vand.u32 %v884, 4294901760
  %886 = vmatpush1.msra.mxu0 %v885
  %v887 = vand.u32 %v484, 4294901760
  %v888 = vsub.f32 %v484, %v887
  %v889 = vand.u32 %v888, 4294901760
  %890 = vmatprep.subr.mxu0 %v889
  %v891 = vand.u32 %v483, 4294901760
  %v892 = vsub.f32 %v483, %v891
  %v893 = vand.u32 %v892, 4294901760
  %894 = vmatpush1.msra.mxu0 %v893
  %v895 = vand.u32 %v488, 4294901760
  %v896 = vsub.f32 %v488, %v895
  %v897 = vand.u32 %v896, 4294901760
  %898 = vmatprep.subr.mxu0 %v897
  %v899 = vand.u32 %v487, 4294901760
  %v900 = vsub.f32 %v487, %v899
  %v901 = vand.u32 %v900, 4294901760
  %902 = vmatpush1.msra.mxu0 %v901
  %v903 = vand.u32 %v504, 4294901760
  %v904 = vsub.f32 %v504, %v903
  %v905 = vand.u32 %v904, 4294901760
  %906 = vmatprep.subr.mxu0 %v905
  %v907 = vand.u32 %v501, 4294901760
  %v908 = vsub.f32 %v501, %v907
  %v909 = vand.u32 %v908, 4294901760
  %910 = vmatpush1.msra.mxu0 %v909
  %911 = vmatprep.subr.mxu0 0.0
  %912 = vmatpush1.msra.mxu0 0.0
  %913 = vmatprep.subr.mxu0 0.0
  %914 = vmatpush1.msra.mxu0 0.0
  %915 = vmatprep.subr.mxu0 0.0
  %916 = vmatpush1.msra.mxu0 0.0
  %917 = vmatprep.subr.mxu0 0.0
  %918 = vmatpush1.msra.mxu0 0.0
  %919 = vmatprep.subr.mxu0 0.0
  %920 = vmatpush1.msra.mxu0 0.0
  %921 = vmatprep.subr.mxu0 0.0
  %922 = vmatpush1.msra.mxu0 0.0
  %923 = vmatprep.subr.mxu0 0.0
  %924 = vmatpush1.msra.mxu0 0.0
  %925 = vmatprep.subr.mxu0 0.0
  %926 = vmatpush1.msra.mxu0 0.0
  %927 = vmatprep.subr.mxu0 0.0
  %928 = vmatpush1.msra.mxu0 0.0
  %929 = vmatprep.subr.mxu0 0.0
  %930 = vmatpush1.msra.mxu0 0.0
  %931 = vmatprep.subr.mxu0 0.0
  %932 = vmatpush1.msra.mxu0 0.0
  %933 = vmatprep.subr.mxu0 0.0
  %934 = vmatpush1.msra.mxu0 0.0
  %935 = vmatprep.subr.mxu0 0.0
  %936 = vmatpush1.msra.mxu0 0.0
  %937 = vmatprep.subr.mxu0 0.0
  %938 = vmatpush1.msra.mxu0 0.0
  %939 = vmatprep.subr.mxu0 0.0
  %940 = vmatpush1.msra.mxu0 0.0
  %941 = vmatprep.subr.mxu0 0.0
  %942 = vmatpush1.msra.mxu0 0.0
  %943 = vmatprep.subr.mxu0 0.0
  %944 = vmatpush1.msra.mxu0 0.0
  %945 = vmatprep.subr.mxu0 0.0
  %946 = vmatpush1.msra.mxu0 0.0
  %947 = vmatprep.subr.mxu0 0.0
  %948 = vmatpush1.msra.mxu0 0.0
  %949 = vmatprep.subr.mxu0 0.0
  %950 = vmatpush1.msra.mxu0 0.0
  %951 = vmatprep.subr.mxu0 0.0
  %952 = vmatpush1.msra.mxu0 0.0
  %953 = vmatprep.subr.mxu0 0.0
  %954 = vmatpush1.msra.mxu0 0.0
  %955 = vmatprep.subr.mxu0 0.0
  %956 = vmatpush1.msra.mxu0 0.0
  %957 = vmatprep.subr.mxu0 0.0
  %958 = vmatpush1.msra.mxu0 0.0
  %959 = vmatprep.subr.mxu0 0.0
  %960 = vmatpush1.msra.mxu0 0.0
  %961 = vmatprep.subr.mxu0 0.0
  %962 = vmatpush1.msra.mxu0 0.0
  %963 = vmatprep.subr.mxu0 0.0
  %964 = vmatpush1.msra.mxu0 0.0
  %965 = vmatprep.subr.mxu0 0.0
  %966 = vmatpush1.msra.mxu0 0.0
  %967 = vmatprep.mubr.f32.mxu0 0.0
  %v968 = vand.u32 %v497, 4294901760
  %969 = vmatmul.mubr.f32.gmra.mrb[0].mxu0 %v968
  %v970 = vpop.f32.mrb[0].mxu0
  %v971 = vadd.f32 %v875, %v970
  %v972 = vpop.f32.mrb[0].mxu0
  %v973 = vadd.f32 %v877, %v972
  %974 = vdwg.mxu0
  %v975 = vand.u32 %v480, 4294901760
  %976 = vmatprep.subr.mxu0 %v975
  %v977 = vand.u32 %v479, 4294901760
  %978 = vmatpush1.msra.mxu0 %v977
  %v979 = vand.u32 %v484, 4294901760
  %980 = vmatprep.subr.mxu0 %v979
  %v981 = vand.u32 %v483, 4294901760
  %982 = vmatpush1.msra.mxu0 %v981
  %v983 = vand.u32 %v488, 4294901760
  %984 = vmatprep.subr.mxu0 %v983
  %v985 = vand.u32 %v487, 4294901760
  %986 = vmatpush1.msra.mxu0 %v985
  %v987 = vand.u32 %v504, 4294901760
  %988 = vmatprep.subr.mxu0 %v987
  %v989 = vand.u32 %v501, 4294901760
  %990 = vmatpush1.msra.mxu0 %v989
  %991 = vmatprep.subr.mxu0 0.0
  %992 = vmatpush1.msra.mxu0 0.0
  %993 = vmatprep.subr.mxu0 0.0
  %994 = vmatpush1.msra.mxu0 0.0
  %995 = vmatprep.subr.mxu0 0.0
  %996 = vmatpush1.msra.mxu0 0.0
  %997 = vmatprep.subr.mxu0 0.0
  %998 = vmatpush1.msra.mxu0 0.0
  %999 = vmatprep.subr.mxu0 0.0
  %1000 = vmatpush1.msra.mxu0 0.0
  %1001 = vmatprep.subr.mxu0 0.0
  %1002 = vmatpush1.msra.mxu0 0.0
  %1003 = vmatprep.subr.mxu0 0.0
  %1004 = vmatpush1.msra.mxu0 0.0
  %1005 = vmatprep.subr.mxu0 0.0
  %1006 = vmatpush1.msra.mxu0 0.0
  %1007 = vmatprep.subr.mxu0 0.0
  %1008 = vmatpush1.msra.mxu0 0.0
  %1009 = vmatprep.subr.mxu0 0.0
  %1010 = vmatpush1.msra.mxu0 0.0
  %1011 = vmatprep.subr.mxu0 0.0
  %1012 = vmatpush1.msra.mxu0 0.0
  %1013 = vmatprep.subr.mxu0 0.0
  %1014 = vmatpush1.msra.mxu0 0.0
  %1015 = vmatprep.subr.mxu0 0.0
  %1016 = vmatpush1.msra.mxu0 0.0
  %1017 = vmatprep.subr.mxu0 0.0
  %1018 = vmatpush1.msra.mxu0 0.0
  %1019 = vmatprep.subr.mxu0 0.0
  %1020 = vmatpush1.msra.mxu0 0.0
  %1021 = vmatprep.subr.mxu0 0.0
  %1022 = vmatpush1.msra.mxu0 0.0
  %1023 = vmatprep.subr.mxu0 0.0
  %1024 = vmatpush1.msra.mxu0 0.0
  %1025 = vmatprep.subr.mxu0 0.0
  %1026 = vmatpush1.msra.mxu0 0.0
  %1027 = vmatprep.subr.mxu0 0.0
  %1028 = vmatpush1.msra.mxu0 0.0
  %1029 = vmatprep.subr.mxu0 0.0
  %1030 = vmatpush1.msra.mxu0 0.0
  %1031 = vmatprep.subr.mxu0 0.0
  %1032 = vmatpush1.msra.mxu0 0.0
  %1033 = vmatprep.subr.mxu0 0.0
  %1034 = vmatpush1.msra.mxu0 0.0
  %1035 = vmatprep.subr.mxu0 0.0
  %1036 = vmatpush1.msra.mxu0 0.0
  %1037 = vmatprep.subr.mxu0 0.0
  %1038 = vmatpush1.msra.mxu0 0.0
  %1039 = vmatprep.subr.mxu0 0.0
  %1040 = vmatpush1.msra.mxu0 0.0
  %1041 = vmatprep.subr.mxu0 0.0
  %1042 = vmatpush1.msra.mxu0 0.0
  %1043 = vmatprep.subr.mxu0 0.0
  %1044 = vmatpush1.msra.mxu0 0.0
  %1045 = vmatprep.subr.mxu0 0.0
  %1046 = vmatpush1.msra.mxu0 0.0
  %1047 = vmatprep.mubr.f32.mxu0 0.0
  %v1048 = vand.u32 %v497, 4294901760
  %1049 = vmatmul.mubr.f32.gmra.mrb[0].mxu0 %v1048
  %v1050 = vpop.f32.mrb[0].mxu0
  %v1051 = vadd.f32 %v971, %v1050
  %v1052 = vpop.f32.mrb[0].mxu0
  %v1053 = vadd.f32 %v973, %v1052
  %1054 = vdwg.mxu0
  %v1055 = vand.u32 %v482, 4294901760
  %1056 = vmatprep.subr.mxu0 %v1055
  %v1057 = vand.u32 %v481, 4294901760
  %1058 = vmatpush1.msra.mxu0 %v1057
  %v1059 = vand.u32 %v486, 4294901760
  %1060 = vmatprep.subr.mxu0 %v1059
  %v1061 = vand.u32 %v485, 4294901760
  %1062 = vmatpush1.msra.mxu0 %v1061
  %v1063 = vand.u32 %v490, 4294901760
  %1064 = vmatprep.subr.mxu0 %v1063
  %v1065 = vand.u32 %v489, 4294901760
  %1066 = vmatpush1.msra.mxu0 %v1065
  %v1067 = vand.u32 %v510, 4294901760
  %1068 = vmatprep.subr.mxu0 %v1067
  %v1069 = vand.u32 %v507, 4294901760
  %1070 = vmatpush1.msra.mxu0 %v1069
  %1071 = vmatprep.subr.mxu0 0.0
  %1072 = vmatpush1.msra.mxu0 0.0
  %1073 = vmatprep.subr.mxu0 0.0
  %1074 = vmatpush1.msra.mxu0 0.0
  %1075 = vmatprep.subr.mxu0 0.0
  %1076 = vmatpush1.msra.mxu0 0.0
  %1077 = vmatprep.subr.mxu0 0.0
  %1078 = vmatpush1.msra.mxu0 0.0
  %1079 = vmatprep.subr.mxu0 0.0
  %1080 = vmatpush1.msra.mxu0 0.0
  %1081 = vmatprep.subr.mxu0 0.0
  %1082 = vmatpush1.msra.mxu0 0.0
  %1083 = vmatprep.subr.mxu0 0.0
  %1084 = vmatpush1.msra.mxu0 0.0
  %1085 = vmatprep.subr.mxu0 0.0
  %1086 = vmatpush1.msra.mxu0 0.0
  %1087 = vmatprep.subr.mxu0 0.0
  %1088 = vmatpush1.msra.mxu0 0.0
  %1089 = vmatprep.subr.mxu0 0.0
  %1090 = vmatpush1.msra.mxu0 0.0
  %1091 = vmatprep.subr.mxu0 0.0
  %1092 = vmatpush1.msra.mxu0 0.0
  %1093 = vmatprep.subr.mxu0 0.0
  %1094 = vmatpush1.msra.mxu0 0.0
  %1095 = vmatprep.subr.mxu0 0.0
  %1096 = vmatpush1.msra.mxu0 0.0
  %1097 = vmatprep.subr.mxu0 0.0
  %1098 = vmatpush1.msra.mxu0 0.0
  %1099 = vmatprep.subr.mxu0 0.0
  %1100 = vmatpush1.msra.mxu0 0.0
  %1101 = vmatprep.subr.mxu0 0.0
  %1102 = vmatpush1.msra.mxu0 0.0
  %1103 = vmatprep.subr.mxu0 0.0
  %1104 = vmatpush1.msra.mxu0 0.0
  %1105 = vmatprep.subr.mxu0 0.0
  %1106 = vmatpush1.msra.mxu0 0.0
  %1107 = vmatprep.subr.mxu0 0.0
  %1108 = vmatpush1.msra.mxu0 0.0
  %1109 = vmatprep.subr.mxu0 0.0
  %1110 = vmatpush1.msra.mxu0 0.0
  %1111 = vmatprep.subr.mxu0 0.0
  %1112 = vmatpush1.msra.mxu0 0.0
  %1113 = vmatprep.subr.mxu0 0.0
  %1114 = vmatpush1.msra.mxu0 0.0
  %1115 = vmatprep.subr.mxu0 0.0
  %1116 = vmatpush1.msra.mxu0 0.0
  %1117 = vmatprep.subr.mxu0 0.0
  %1118 = vmatpush1.msra.mxu0 0.0
  %1119 = vmatprep.subr.mxu0 0.0
  %1120 = vmatpush1.msra.mxu0 0.0
  %1121 = vmatprep.subr.mxu0 0.0
  %1122 = vmatpush1.msra.mxu0 0.0
  %1123 = vmatprep.subr.mxu0 0.0
  %1124 = vmatpush1.msra.mxu0 0.0
  %1125 = vmatprep.subr.mxu0 0.0
  %1126 = vmatpush1.msra.mxu0 0.0
  %1127 = vmatprep.mubr.f32.mxu0 0.0
  %v1128 = vand.u32 %v497, 4294901760
  %v1129 = vsub.f32 %v497, %v1128
  %v1130 = vand.u32 %v1129, 4294901760
  %v1131 = vsub.f32 %v1129, %v1130
  %v1132 = vand.u32 %v1131, 4294901760
  %1133 = vmatmul.mubr.f32.gmra.mrb[0].mxu0 %v1132
  %v1134 = vpop.f32.mrb[0].mxu0
  %v1135 = vadd.f32 0.0, %v1134
  %v1136 = vpop.f32.mrb[0].mxu0
  %v1137 = vadd.f32 0.0, %v1136
  %1138 = vdwg.mxu0
  %v1139 = vand.u32 %v482, 4294901760
  %v1140 = vsub.f32 %v482, %v1139
  %v1141 = vand.u32 %v1140, 4294901760
  %v1142 = vsub.f32 %v1140, %v1141
  %v1143 = vand.u32 %v1142, 4294901760
  %1144 = vmatprep.subr.mxu0 %v1143
  %v1145 = vand.u32 %v481, 4294901760
  %v1146 = vsub.f32 %v481, %v1145
  %v1147 = vand.u32 %v1146, 4294901760
  %v1148 = vsub.f32 %v1146, %v1147
  %v1149 = vand.u32 %v1148, 4294901760
  %1150 = vmatpush1.msra.mxu0 %v1149
  %v1151 = vand.u32 %v486, 4294901760
  %v1152 = vsub.f32 %v486, %v1151
  %v1153 = vand.u32 %v1152, 4294901760
  %v1154 = vsub.f32 %v1152, %v1153
  %v1155 = vand.u32 %v1154, 4294901760
  %1156 = vmatprep.subr.mxu0 %v1155
  %v1157 = vand.u32 %v485, 4294901760
  %v1158 = vsub.f32 %v485, %v1157
  %v1159 = vand.u32 %v1158, 4294901760
  %v1160 = vsub.f32 %v1158, %v1159
  %v1161 = vand.u32 %v1160, 4294901760
  %1162 = vmatpush1.msra.mxu0 %v1161
  %v1163 = vand.u32 %v490, 4294901760
  %v1164 = vsub.f32 %v490, %v1163
  %v1165 = vand.u32 %v1164, 4294901760
  %v1166 = vsub.f32 %v1164, %v1165
  %v1167 = vand.u32 %v1166, 4294901760
  %1168 = vmatprep.subr.mxu0 %v1167
  %v1169 = vand.u32 %v489, 4294901760
  %v1170 = vsub.f32 %v489, %v1169
  %v1171 = vand.u32 %v1170, 4294901760
  %v1172 = vsub.f32 %v1170, %v1171
  %v1173 = vand.u32 %v1172, 4294901760
  %1174 = vmatpush1.msra.mxu0 %v1173
  %v1175 = vand.u32 %v510, 4294901760
  %v1176 = vsub.f32 %v510, %v1175
  %v1177 = vand.u32 %v1176, 4294901760
  %v1178 = vsub.f32 %v1176, %v1177
  %v1179 = vand.u32 %v1178, 4294901760
  %1180 = vmatprep.subr.mxu0 %v1179
  %v1181 = vand.u32 %v507, 4294901760
  %v1182 = vsub.f32 %v507, %v1181
  %v1183 = vand.u32 %v1182, 4294901760
  %v1184 = vsub.f32 %v1182, %v1183
  %v1185 = vand.u32 %v1184, 4294901760
  %1186 = vmatpush1.msra.mxu0 %v1185
  %1187 = vmatprep.subr.mxu0 0.0
  %1188 = vmatpush1.msra.mxu0 0.0
  %1189 = vmatprep.subr.mxu0 0.0
  %1190 = vmatpush1.msra.mxu0 0.0
  %1191 = vmatprep.subr.mxu0 0.0
  %1192 = vmatpush1.msra.mxu0 0.0
  %1193 = vmatprep.subr.mxu0 0.0
  %1194 = vmatpush1.msra.mxu0 0.0
  %1195 = vmatprep.subr.mxu0 0.0
  %1196 = vmatpush1.msra.mxu0 0.0
  %1197 = vmatprep.subr.mxu0 0.0
  %1198 = vmatpush1.msra.mxu0 0.0
  %1199 = vmatprep.subr.mxu0 0.0
  %1200 = vmatpush1.msra.mxu0 0.0
  %1201 = vmatprep.subr.mxu0 0.0
  %1202 = vmatpush1.msra.mxu0 0.0
  %1203 = vmatprep.subr.mxu0 0.0
  %1204 = vmatpush1.msra.mxu0 0.0
  %1205 = vmatprep.subr.mxu0 0.0
  %1206 = vmatpush1.msra.mxu0 0.0
  %1207 = vmatprep.subr.mxu0 0.0
  %1208 = vmatpush1.msra.mxu0 0.0
  %1209 = vmatprep.subr.mxu0 0.0
  %1210 = vmatpush1.msra.mxu0 0.0
  %1211 = vmatprep.subr.mxu0 0.0
  %1212 = vmatpush1.msra.mxu0 0.0
  %1213 = vmatprep.subr.mxu0 0.0
  %1214 = vmatpush1.msra.mxu0 0.0
  %1215 = vmatprep.subr.mxu0 0.0
  %1216 = vmatpush1.msra.mxu0 0.0
  %1217 = vmatprep.subr.mxu0 0.0
  %1218 = vmatpush1.msra.mxu0 0.0
  %1219 = vmatprep.subr.mxu0 0.0
  %1220 = vmatpush1.msra.mxu0 0.0
  %1221 = vmatprep.subr.mxu0 0.0
  %1222 = vmatpush1.msra.mxu0 0.0
  %1223 = vmatprep.subr.mxu0 0.0
  %1224 = vmatpush1.msra.mxu0 0.0
  %1225 = vmatprep.subr.mxu0 0.0
  %1226 = vmatpush1.msra.mxu0 0.0
  %1227 = vmatprep.subr.mxu0 0.0
  %1228 = vmatpush1.msra.mxu0 0.0
  %1229 = vmatprep.subr.mxu0 0.0
  %1230 = vmatpush1.msra.mxu0 0.0
  %1231 = vmatprep.subr.mxu0 0.0
  %1232 = vmatpush1.msra.mxu0 0.0
  %1233 = vmatprep.subr.mxu0 0.0
  %1234 = vmatpush1.msra.mxu0 0.0
  %1235 = vmatprep.subr.mxu0 0.0
  %1236 = vmatpush1.msra.mxu0 0.0
  %1237 = vmatprep.subr.mxu0 0.0
  %1238 = vmatpush1.msra.mxu0 0.0
  %1239 = vmatprep.subr.mxu0 0.0
  %1240 = vmatpush1.msra.mxu0 0.0
  %1241 = vmatprep.subr.mxu0 0.0
  %1242 = vmatpush1.msra.mxu0 0.0
  %1243 = vmatprep.mubr.f32.mxu0 0.0
  %v1244 = vand.u32 %v497, 4294901760
  %1245 = vmatmul.mubr.f32.gmra.mrb[0].mxu0 %v1244
  %v1246 = vpop.f32.mrb[0].mxu0
  %v1247 = vadd.f32 %v1135, %v1246
  %v1248 = vpop.f32.mrb[0].mxu0
  %v1249 = vadd.f32 %v1137, %v1248
  %1250 = vdwg.mxu0
  %v1251 = vand.u32 %v482, 4294901760
  %v1252 = vsub.f32 %v482, %v1251
  %1253 = vmatprep.subr.mxu0 %v1252
  %v1254 = vand.u32 %v481, 4294901760
  %v1255 = vsub.f32 %v481, %v1254
  %1256 = vmatpush1.msra.mxu0 %v1255
  %v1257 = vand.u32 %v486, 4294901760
  %v1258 = vsub.f32 %v486, %v1257
  %1259 = vmatprep.subr.mxu0 %v1258
  %v1260 = vand.u32 %v485, 4294901760
  %v1261 = vsub.f32 %v485, %v1260
  %1262 = vmatpush1.msra.mxu0 %v1261
  %v1263 = vand.u32 %v490, 4294901760
  %v1264 = vsub.f32 %v490, %v1263
  %1265 = vmatprep.subr.mxu0 %v1264
  %v1266 = vand.u32 %v489, 4294901760
  %v1267 = vsub.f32 %v489, %v1266
  %1268 = vmatpush1.msra.mxu0 %v1267
  %v1269 = vand.u32 %v510, 4294901760
  %v1270 = vsub.f32 %v510, %v1269
  %1271 = vmatprep.subr.mxu0 %v1270
  %v1272 = vand.u32 %v507, 4294901760
  %v1273 = vsub.f32 %v507, %v1272
  %1274 = vmatpush1.msra.mxu0 %v1273
  %1275 = vmatprep.subr.mxu0 0.0
  %1276 = vmatpush1.msra.mxu0 0.0
  %1277 = vmatprep.subr.mxu0 0.0
  %1278 = vmatpush1.msra.mxu0 0.0
  %1279 = vmatprep.subr.mxu0 0.0
  %1280 = vmatpush1.msra.mxu0 0.0
  %1281 = vmatprep.subr.mxu0 0.0
  %1282 = vmatpush1.msra.mxu0 0.0
  %1283 = vmatprep.subr.mxu0 0.0
  %1284 = vmatpush1.msra.mxu0 0.0
  %1285 = vmatprep.subr.mxu0 0.0
  %1286 = vmatpush1.msra.mxu0 0.0
  %1287 = vmatprep.subr.mxu0 0.0
  %1288 = vmatpush1.msra.mxu0 0.0
  %1289 = vmatprep.subr.mxu0 0.0
  %1290 = vmatpush1.msra.mxu0 0.0
  %1291 = vmatprep.subr.mxu0 0.0
  %1292 = vmatpush1.msra.mxu0 0.0
  %1293 = vmatprep.subr.mxu0 0.0
  %1294 = vmatpush1.msra.mxu0 0.0
  %1295 = vmatprep.subr.mxu0 0.0
  %1296 = vmatpush1.msra.mxu0 0.0
  %1297 = vmatprep.subr.mxu0 0.0
  %1298 = vmatpush1.msra.mxu0 0.0
  %1299 = vmatprep.subr.mxu0 0.0
  %1300 = vmatpush1.msra.mxu0 0.0
  %1301 = vmatprep.subr.mxu0 0.0
  %1302 = vmatpush1.msra.mxu0 0.0
  %1303 = vmatprep.subr.mxu0 0.0
  %1304 = vmatpush1.msra.mxu0 0.0
  %1305 = vmatprep.subr.mxu0 0.0
  %1306 = vmatpush1.msra.mxu0 0.0
  %1307 = vmatprep.subr.mxu0 0.0
  %1308 = vmatpush1.msra.mxu0 0.0
  %1309 = vmatprep.subr.mxu0 0.0
  %1310 = vmatpush1.msra.mxu0 0.0
  %1311 = vmatprep.subr.mxu0 0.0
  %1312 = vmatpush1.msra.mxu0 0.0
  %1313 = vmatprep.subr.mxu0 0.0
  %1314 = vmatpush1.msra.mxu0 0.0
  %1315 = vmatprep.subr.mxu0 0.0
  %1316 = vmatpush1.msra.mxu0 0.0
  %1317 = vmatprep.subr.mxu0 0.0
  %1318 = vmatpush1.msra.mxu0 0.0
  %1319 = vmatprep.subr.mxu0 0.0
  %1320 = vmatpush1.msra.mxu0 0.0
  %1321 = vmatprep.subr.mxu0 0.0
  %1322 = vmatpush1.msra.mxu0 0.0
  %1323 = vmatprep.subr.mxu0 0.0
  %1324 = vmatpush1.msra.mxu0 0.0
  %1325 = vmatprep.subr.mxu0 0.0
  %1326 = vmatpush1.msra.mxu0 0.0
  %1327 = vmatprep.subr.mxu0 0.0
  %1328 = vmatpush1.msra.mxu0 0.0
  %1329 = vmatprep.subr.mxu0 0.0
  %1330 = vmatpush1.msra.mxu0 0.0
  %1331 = vmatprep.mubr.f32.mxu0 0.0
  %v1332 = vand.u32 %v497, 4294901760
  %v1333 = vsub.f32 %v497, %v1332
  %1334 = vmatmul.mubr.f32.gmra.mrb[0].mxu0 %v1333
  %v1335 = vpop.f32.mrb[0].mxu0
  %v1336 = vadd.f32 %v1247, %v1335
  %v1337 = vpop.f32.mrb[0].mxu0
  %v1338 = vadd.f32 %v1249, %v1337
  %1339 = vdwg.mxu0
  %v1340 = vand.u32 %v482, 4294901760
  %1341 = vmatprep.subr.mxu0 %v1340
  %v1342 = vand.u32 %v481, 4294901760
  %1343 = vmatpush1.msra.mxu0 %v1342
  %v1344 = vand.u32 %v486, 4294901760
  %1345 = vmatprep.subr.mxu0 %v1344
  %v1346 = vand.u32 %v485, 4294901760
  %1347 = vmatpush1.msra.mxu0 %v1346
  %v1348 = vand.u32 %v490, 4294901760
  %1349 = vmatprep.subr.mxu0 %v1348
  %v1350 = vand.u32 %v489, 4294901760
  %1351 = vmatpush1.msra.mxu0 %v1350
  %v1352 = vand.u32 %v510, 4294901760
  %1353 = vmatprep.subr.mxu0 %v1352
  %v1354 = vand.u32 %v507, 4294901760
  %1355 = vmatpush1.msra.mxu0 %v1354
  %1356 = vmatprep.subr.mxu0 0.0
  %1357 = vmatpush1.msra.mxu0 0.0
  %1358 = vmatprep.subr.mxu0 0.0
  %1359 = vmatpush1.msra.mxu0 0.0
  %1360 = vmatprep.subr.mxu0 0.0
  %1361 = vmatpush1.msra.mxu0 0.0
  %1362 = vmatprep.subr.mxu0 0.0
  %1363 = vmatpush1.msra.mxu0 0.0
  %1364 = vmatprep.subr.mxu0 0.0
  %1365 = vmatpush1.msra.mxu0 0.0
  %1366 = vmatprep.subr.mxu0 0.0
  %1367 = vmatpush1.msra.mxu0 0.0
  %1368 = vmatprep.subr.mxu0 0.0
  %1369 = vmatpush1.msra.mxu0 0.0
  %1370 = vmatprep.subr.mxu0 0.0
  %1371 = vmatpush1.msra.mxu0 0.0
  %1372 = vmatprep.subr.mxu0 0.0
  %1373 = vmatpush1.msra.mxu0 0.0
  %1374 = vmatprep.subr.mxu0 0.0
  %1375 = vmatpush1.msra.mxu0 0.0
  %1376 = vmatprep.subr.mxu0 0.0
  %1377 = vmatpush1.msra.mxu0 0.0
  %1378 = vmatprep.subr.mxu0 0.0
  %1379 = vmatpush1.msra.mxu0 0.0
  %1380 = vmatprep.subr.mxu0 0.0
  %1381 = vmatpush1.msra.mxu0 0.0
  %1382 = vmatprep.subr.mxu0 0.0
  %1383 = vmatpush1.msra.mxu0 0.0
  %1384 = vmatprep.subr.mxu0 0.0
  %1385 = vmatpush1.msra.mxu0 0.0
  %1386 = vmatprep.subr.mxu0 0.0
  %1387 = vmatpush1.msra.mxu0 0.0
  %1388 = vmatprep.subr.mxu0 0.0
  %1389 = vmatpush1.msra.mxu0 0.0
  %1390 = vmatprep.subr.mxu0 0.0
  %1391 = vmatpush1.msra.mxu0 0.0
  %1392 = vmatprep.subr.mxu0 0.0
  %1393 = vmatpush1.msra.mxu0 0.0
  %1394 = vmatprep.subr.mxu0 0.0
  %1395 = vmatpush1.msra.mxu0 0.0
  %1396 = vmatprep.subr.mxu0 0.0
  %1397 = vmatpush1.msra.mxu0 0.0
  %1398 = vmatprep.subr.mxu0 0.0
  %1399 = vmatpush1.msra.mxu0 0.0
  %1400 = vmatprep.subr.mxu0 0.0
  %1401 = vmatpush1.msra.mxu0 0.0
  %1402 = vmatprep.subr.mxu0 0.0
  %1403 = vmatpush1.msra.mxu0 0.0
  %1404 = vmatprep.subr.mxu0 0.0
  %1405 = vmatpush1.msra.mxu0 0.0
  %1406 = vmatprep.subr.mxu0 0.0
  %1407 = vmatpush1.msra.mxu0 0.0
  %1408 = vmatprep.subr.mxu0 0.0
  %1409 = vmatpush1.msra.mxu0 0.0
  %1410 = vmatprep.subr.mxu0 0.0
  %1411 = vmatpush1.msra.mxu0 0.0
  %1412 = vmatprep.mubr.f32.mxu0 0.0
  %v1413 = vand.u32 %v497, 4294901760
  %v1414 = vsub.f32 %v497, %v1413
  %v1415 = vand.u32 %v1414, 4294901760
  %1416 = vmatmul.mubr.f32.gmra.mrb[0].mxu0 %v1415
  %v1417 = vpop.f32.mrb[0].mxu0
  %v1418 = vadd.f32 %v1336, %v1417
  %v1419 = vpop.f32.mrb[0].mxu0
  %v1420 = vadd.f32 %v1338, %v1419
  %1421 = vdwg.mxu0
  %v1422 = vand.u32 %v482, 4294901760
  %v1423 = vsub.f32 %v482, %v1422
  %v1424 = vand.u32 %v1423, 4294901760
  %1425 = vmatprep.subr.mxu0 %v1424
  %v1426 = vand.u32 %v481, 4294901760
  %v1427 = vsub.f32 %v481, %v1426
  %v1428 = vand.u32 %v1427, 4294901760
  %1429 = vmatpush1.msra.mxu0 %v1428
  %v1430 = vand.u32 %v486, 4294901760
  %v1431 = vsub.f32 %v486, %v1430
  %v1432 = vand.u32 %v1431, 4294901760
  %1433 = vmatprep.subr.mxu0 %v1432
  %v1434 = vand.u32 %v485, 4294901760
  %v1435 = vsub.f32 %v485, %v1434
  %v1436 = vand.u32 %v1435, 4294901760
  %1437 = vmatpush1.msra.mxu0 %v1436
  %v1438 = vand.u32 %v490, 4294901760
  %v1439 = vsub.f32 %v490, %v1438
  %v1440 = vand.u32 %v1439, 4294901760
  %1441 = vmatprep.subr.mxu0 %v1440
  %v1442 = vand.u32 %v489, 4294901760
  %v1443 = vsub.f32 %v489, %v1442
  %v1444 = vand.u32 %v1443, 4294901760
  %1445 = vmatpush1.msra.mxu0 %v1444
  %v1446 = vand.u32 %v510, 4294901760
  %v1447 = vsub.f32 %v510, %v1446
  %v1448 = vand.u32 %v1447, 4294901760
  %1449 = vmatprep.subr.mxu0 %v1448
  %v1450 = vand.u32 %v507, 4294901760
  %v1451 = vsub.f32 %v507, %v1450
  %v1452 = vand.u32 %v1451, 4294901760
  %1453 = vmatpush1.msra.mxu0 %v1452
  %1454 = vmatprep.subr.mxu0 0.0
  %1455 = vmatpush1.msra.mxu0 0.0
  %1456 = vmatprep.subr.mxu0 0.0
  %1457 = vmatpush1.msra.mxu0 0.0
  %1458 = vmatprep.subr.mxu0 0.0
  %1459 = vmatpush1.msra.mxu0 0.0
  %1460 = vmatprep.subr.mxu0 0.0
  %1461 = vmatpush1.msra.mxu0 0.0
  %1462 = vmatprep.subr.mxu0 0.0
  %1463 = vmatpush1.msra.mxu0 0.0
  %1464 = vmatprep.subr.mxu0 0.0
  %1465 = vmatpush1.msra.mxu0 0.0
  %1466 = vmatprep.subr.mxu0 0.0
  %1467 = vmatpush1.msra.mxu0 0.0
  %1468 = vmatprep.subr.mxu0 0.0
  %1469 = vmatpush1.msra.mxu0 0.0
  %1470 = vmatprep.subr.mxu0 0.0
  %1471 = vmatpush1.msra.mxu0 0.0
  %1472 = vmatprep.subr.mxu0 0.0
  %1473 = vmatpush1.msra.mxu0 0.0
  %1474 = vmatprep.subr.mxu0 0.0
  %1475 = vmatpush1.msra.mxu0 0.0
  %1476 = vmatprep.subr.mxu0 0.0
  %1477 = vmatpush1.msra.mxu0 0.0
  %1478 = vmatprep.subr.mxu0 0.0
  %1479 = vmatpush1.msra.mxu0 0.0
  %1480 = vmatprep.subr.mxu0 0.0
  %1481 = vmatpush1.msra.mxu0 0.0
  %1482 = vmatprep.subr.mxu0 0.0
  %1483 = vmatpush1.msra.mxu0 0.0
  %1484 = vmatprep.subr.mxu0 0.0
  %1485 = vmatpush1.msra.mxu0 0.0
  %1486 = vmatprep.subr.mxu0 0.0
  %1487 = vmatpush1.msra.mxu0 0.0
  %1488 = vmatprep.subr.mxu0 0.0
  %1489 = vmatpush1.msra.mxu0 0.0
  %1490 = vmatprep.subr.mxu0 0.0
  %1491 = vmatpush1.msra.mxu0 0.0
  %1492 = vmatprep.subr.mxu0 0.0
  %1493 = vmatpush1.msra.mxu0 0.0
  %1494 = vmatprep.subr.mxu0 0.0
  %1495 = vmatpush1.msra.mxu0 0.0
  %1496 = vmatprep.subr.mxu0 0.0
  %1497 = vmatpush1.msra.mxu0 0.0
  %1498 = vmatprep.subr.mxu0 0.0
  %1499 = vmatpush1.msra.mxu0 0.0
  %1500 = vmatprep.subr.mxu0 0.0
  %1501 = vmatpush1.msra.mxu0 0.0
  %1502 = vmatprep.subr.mxu0 0.0
  %1503 = vmatpush1.msra.mxu0 0.0
  %1504 = vmatprep.subr.mxu0 0.0
  %1505 = vmatpush1.msra.mxu0 0.0
  %1506 = vmatprep.subr.mxu0 0.0
  %1507 = vmatpush1.msra.mxu0 0.0
  %1508 = vmatprep.subr.mxu0 0.0
  %1509 = vmatpush1.msra.mxu0 0.0
  %1510 = vmatprep.mubr.f32.mxu0 0.0
  %v1511 = vand.u32 %v497, 4294901760
  %1512 = vmatmul.mubr.f32.gmra.mrb[0].mxu0 %v1511
  %v1513 = vpop.f32.mrb[0].mxu0
  %v1514 = vadd.f32 %v1418, %v1513
  %v1515 = vpop.f32.mrb[0].mxu0
  %v1516 = vadd.f32 %v1420, %v1515
  %1517 = vdwg.mxu0
  %v1518 = vand.u32 %v482, 4294901760
  %1519 = vmatprep.subr.mxu0 %v1518
  %v1520 = vand.u32 %v481, 4294901760
  %1521 = vmatpush1.msra.mxu0 %v1520
  %v1522 = vand.u32 %v486, 4294901760
  %1523 = vmatprep.subr.mxu0 %v1522
  %v1524 = vand.u32 %v485, 4294901760
  %1525 = vmatpush1.msra.mxu0 %v1524
  %v1526 = vand.u32 %v490, 4294901760
  %1527 = vmatprep.subr.mxu0 %v1526
  %v1528 = vand.u32 %v489, 4294901760
  %1529 = vmatpush1.msra.mxu0 %v1528
  %v1530 = vand.u32 %v510, 4294901760
  %1531 = vmatprep.subr.mxu0 %v1530
  %v1532 = vand.u32 %v507, 4294901760
  %1533 = vmatpush1.msra.mxu0 %v1532
  %1534 = vmatprep.subr.mxu0 0.0
  %1535 = vmatpush1.msra.mxu0 0.0
  %1536 = vmatprep.subr.mxu0 0.0
  %1537 = vmatpush1.msra.mxu0 0.0
  %1538 = vmatprep.subr.mxu0 0.0
  %1539 = vmatpush1.msra.mxu0 0.0
  %1540 = vmatprep.subr.mxu0 0.0
  %1541 = vmatpush1.msra.mxu0 0.0
  %1542 = vmatprep.subr.mxu0 0.0
  %1543 = vmatpush1.msra.mxu0 0.0
  %1544 = vmatprep.subr.mxu0 0.0
  %1545 = vmatpush1.msra.mxu0 0.0
  %1546 = vmatprep.subr.mxu0 0.0
  %1547 = vmatpush1.msra.mxu0 0.0
  %1548 = vmatprep.subr.mxu0 0.0
  %1549 = vmatpush1.msra.mxu0 0.0
  %1550 = vmatprep.subr.mxu0 0.0
  %1551 = vmatpush1.msra.mxu0 0.0
  %1552 = vmatprep.subr.mxu0 0.0
  %1553 = vmatpush1.msra.mxu0 0.0
  %1554 = vmatprep.subr.mxu0 0.0
  %1555 = vmatpush1.msra.mxu0 0.0
  %1556 = vmatprep.subr.mxu0 0.0
  %1557 = vmatpush1.msra.mxu0 0.0
  %1558 = vmatprep.subr.mxu0 0.0
  %1559 = vmatpush1.msra.mxu0 0.0
  %1560 = vmatprep.subr.mxu0 0.0
  %1561 = vmatpush1.msra.mxu0 0.0
  %1562 = vmatprep.subr.mxu0 0.0
  %1563 = vmatpush1.msra.mxu0 0.0
  %1564 = vmatprep.subr.mxu0 0.0
  %1565 = vmatpush1.msra.mxu0 0.0
  %1566 = vmatprep.subr.mxu0 0.0
  %1567 = vmatpush1.msra.mxu0 0.0
  %1568 = vmatprep.subr.mxu0 0.0
  %1569 = vmatpush1.msra.mxu0 0.0
  %1570 = vmatprep.subr.mxu0 0.0
  %1571 = vmatpush1.msra.mxu0 0.0
  %1572 = vmatprep.subr.mxu0 0.0
  %1573 = vmatpush1.msra.mxu0 0.0
  %1574 = vmatprep.subr.mxu0 0.0
  %1575 = vmatpush1.msra.mxu0 0.0
  %1576 = vmatprep.subr.mxu0 0.0
  %1577 = vmatpush1.msra.mxu0 0.0
  %1578 = vmatprep.subr.mxu0 0.0
  %1579 = vmatpush1.msra.mxu0 0.0
  %1580 = vmatprep.subr.mxu0 0.0
  %1581 = vmatpush1.msra.mxu0 0.0
  %1582 = vmatprep.subr.mxu0 0.0
  %1583 = vmatpush1.msra.mxu0 0.0
  %1584 = vmatprep.subr.mxu0 0.0
  %1585 = vmatpush1.msra.mxu0 0.0
  %1586 = vmatprep.subr.mxu0 0.0
  %1587 = vmatpush1.msra.mxu0 0.0
  %1588 = vmatprep.subr.mxu0 0.0
  %1589 = vmatpush1.msra.mxu0 0.0
  %1590 = vmatprep.mubr.f32.mxu0 0.0
  %v1591 = vand.u32 %v497, 4294901760
  %1592 = vmatmul.mubr.f32.gmra.mrb[0].mxu0 %v1591
  %v1593 = vpop.f32.mrb[0].mxu0
  %v1594 = vadd.f32 %v1514, %v1593
  %v1595 = vpop.f32.mrb[0].mxu0
  %v1596 = vadd.f32 %v1516, %v1595
  %1597 = vdwg.mxu0
  %v1598 = vsel %vm499, %v1051, 0.0
  %v1599 = vsel %vm499, %v1053, 0.0
  %v1600 = vadd.f32 %v1598, %v1599
  %v1601 = vsel %vm499, %v1594, 0.0
  %v1602 = vadd.f32 %v1600, %v1601
  %v1603 = vsel %vm499, %v1596, 0.0
  %v1604 = vadd.f32 %v1602, %v1603
  %1605 = vadd.xlane.f32.xlu0 %v1604
  %v1606 = vpop.xlane.xlu0 %1605
  %v1607 = vmul.f32 %v1051, %v1051
  %v1608 = vmul.f32 %v1053, %v1053
  %v1609 = vmul.f32 %v1594, %v1594
  %v1610 = vmul.f32 %v1596, %v1596
  %v1611 = vsel %vm499, %v1607, 0.0
  %v1612 = vsel %vm499, %v1608, 0.0
  %v1613 = vadd.f32 %v1611, %v1612
  %v1614 = vsel %vm499, %v1609, 0.0
  %v1615 = vadd.f32 %v1613, %v1614
  %v1616 = vsel %vm499, %v1610, 0.0
  %v1617 = vadd.f32 %v1615, %v1616
  %1618 = vadd.xlane.f32.xlu0 %v1617
  %v1619 = vpop.xlane.xlu0 %1618
  %v1620 = vmul.f32 %v1606, 0.001953125
  %v1621 = vmul.f32 %v1619, 0.001953125
  %v1622 = vmul.f32 %v1620, %v1620
  %v1623 = vsub.f32 %v1621, %v1622
  %v1624 = vld [vmem:[%s3] sm:$0x7]
  %v1625 = vadd.f32 %v1623, 1e-05
  %v1626 = vrsqrt.pop %v1625
  %v1627 = vmul.f32 %v1624, %v1626
  %v1628 = vsub.f32 %v1051, %v1620
  %v1629 = vsub.f32 %v1053, %v1620
  %v1630 = vsub.f32 %v1594, %v1620
  %v1631 = vsub.f32 %v1596, %v1620
  %1633 = vset.pattern.permute.xlu0 0
  %1634 = vperm.xlu0 %1633, %v1627
  %v1635 = vpop.permute.xlu0 %1634
  %v1637 = vmul.f32 %v1628, %v1635
  %v1638 = vmul.f32 %v1629, %v1635
  %v1639 = vmul.f32 %v1630, %v1635
  %v1640 = vmul.f32 %v1631, %v1635
  %v1641 = vld [vmem:[%s4] sm:$0x7]
  %1643 = vset.pattern.permute.xlu0 0
  %1644 = vperm.xlu0 %1643, %v1641
  %v1645 = vpop.permute.xlu0 %1644
  %v1647 = vadd.f32 %v1637, %v1645
  %v1648 = vadd.f32 %v1638, %v1645
  %v1649 = vadd.f32 %v1639, %v1645
  %v1650 = vadd.f32 %v1640, %v1645
  %v1651 = vmax.f32 %v1647, 0.0
  %v1652 = vmax.f32 %v1648, 0.0
  %v1653 = vmax.f32 %v1649, 0.0
  %v1654 = vmax.f32 %v1650, 0.0
  %1655 = vrot.lane.b32.xlu0 %v1651, 17
  %v1656 = vpop.permute.xlu0 %1655
  %1657 = vrot.lane.b32.xlu0 %v1652, 17
  %v1658 = vpop.permute.xlu0 %1657
  %1659 = vrot.lane.b32.xlu0 %v1653, 17
  %v1660 = vpop.permute.xlu0 %1659
  %1661 = vrot.lane.b32.xlu0 %v1654, 17
  %v1662 = vpop.permute.xlu0 %1661
  %v1663 = vsel %vm47, %v1660, %v1662
  %v1664 = vsel %vm47, %v1658, %v1660
  %v1665 = vsel %vm47, %v1656, %v1658
  %v1666 = vsel %vm47, %v1662, %v1656
  %v1667 = vld [vmem:[%s0] ss:$8 sm:$0xf]
  %v1669 = vlaneseq
  %v1670 = vshrl.u32 %v1669, 7
  %v1671 = vsub.s32 0, %v1670
  %v1672 = vrot.slane %v1667, %v1671
  %v1673 = vlaneseq
  %v1674 = vshrl.u32 %v1673, 7
  %v1675 = vsub.s32 1, %v1674
  %v1676 = vrot.slane %v1667, %v1675
  %v1677 = vlaneseq
  %v1678 = vshrl.u32 %v1677, 7
  %v1679 = vsub.s32 2, %v1678
  %v1680 = vrot.slane %v1667, %v1679
  %v1681 = vlaneseq
  %v1682 = vshrl.u32 %v1681, 7
  %v1683 = vsub.s32 3, %v1682
  %v1684 = vrot.slane %v1667, %v1683
  %v1689 = vmul.f32 %v1666, %v1672
  %v1690 = vmul.f32 %v1665, %v1676
  %v1691 = vmul.f32 %v1664, %v1680
  %v1692 = vmul.f32 %v1663, %v1684
  %1693 = vst [vmem:[#allocation2] sm:$0x7] %v1689
  %1694 = vst [vmem:[#allocation2 + $0x8] sm:$0x7] %v1690
  %1695 = vst [vmem:[#allocation2 + $0x10] sm:$0x7] %v1691
  %1696 = vst [vmem:[#allocation2 + $0x18] sm:$0x7] %v1692
  %1697 = vrot.lane.b32.xlu0 %v1651, 16
  %v1698 = vpop.permute.xlu0 %1697
  %1699 = vrot.lane.b32.xlu0 %v1652, 16
  %v1700 = vpop.permute.xlu0 %1699
  %1701 = vrot.lane.b32.xlu0 %v1653, 16
  %v1702 = vpop.permute.xlu0 %1701
  %1703 = vrot.lane.b32.xlu0 %v1654, 16
  %v1704 = vpop.permute.xlu0 %1703
  %v1705 = vsel %vm90, %v1702, %v1704
  %v1706 = vsel %vm90, %v1700, %v1702
  %v1707 = vsel %vm90, %v1698, %v1700
  %v1708 = vsel %vm90, %v1704, %v1698
  %v1709 = vld [vmem:[%s95] ss:$8 sm:$0xf]
  %v1711 = vlaneseq
  %v1712 = vshrl.u32 %v1711, 7
  %v1713 = vsub.s32 0, %v1712
  %v1714 = vrot.slane %v1709, %v1713
  %v1715 = vlaneseq
  %v1716 = vshrl.u32 %v1715, 7
  %v1717 = vsub.s32 1, %v1716
  %v1718 = vrot.slane %v1709, %v1717
  %v1719 = vlaneseq
  %v1720 = vshrl.u32 %v1719, 7
  %v1721 = vsub.s32 2, %v1720
  %v1722 = vrot.slane %v1709, %v1721
  %v1723 = vlaneseq
  %v1724 = vshrl.u32 %v1723, 7
  %v1725 = vsub.s32 3, %v1724
  %v1726 = vrot.slane %v1709, %v1725
  %v1731 = vmul.f32 %v1708, %v1714
  %v1732 = vmul.f32 %v1707, %v1718
  %v1733 = vmul.f32 %v1706, %v1722
  %v1734 = vmul.f32 %v1705, %v1726
  %v1739 = vrot.slane %v1731, 5
  %v1740 = vrot.slane %v1732, 5
  %v1741 = vrot.slane %v1733, 5
  %v1742 = vrot.slane %v1734, 5
  %1747 = vst [vmem:[#allocation2] sm:$0x38] %v1739
  %1748 = vst [vmem:[#allocation2 + $0x8] sm:$0x38] %v1740
  %1749 = vst [vmem:[#allocation2 + $0x10] sm:$0x38] %v1741
  %1750 = vst [vmem:[#allocation2 + $0x18] sm:$0x38] %v1742
  %1751 = vrot.lane.b32.xlu0 %v1651, 15
  %v1752 = vpop.permute.xlu0 %1751
  %1753 = vrot.lane.b32.xlu0 %v1652, 15
  %v1754 = vpop.permute.xlu0 %1753
  %1755 = vrot.lane.b32.xlu0 %v1653, 15
  %v1756 = vpop.permute.xlu0 %1755
  %1757 = vrot.lane.b32.xlu0 %v1654, 15
  %v1758 = vpop.permute.xlu0 %1757
  %v1759 = vsel %vm146, %v1756, %v1758
  %v1760 = vsel %vm146, %v1754, %v1756
  %v1761 = vsel %vm146, %v1752, %v1754
  %v1762 = vsel %vm146, %v1758, %v1752
  %v1763 = vld [vmem:[%s151] ss:$8 sm:$0xf]
  %v1765 = vlaneseq
  %v1766 = vshrl.u32 %v1765, 7
  %v1767 = vsub.s32 0, %v1766
  %v1768 = vrot.slane %v1763, %v1767
  %v1769 = vlaneseq
  %v1770 = vshrl.u32 %v1769, 7
  %v1771 = vsub.s32 1, %v1770
  %v1772 = vrot.slane %v1763, %v1771
  %v1773 = vlaneseq
  %v1774 = vshrl.u32 %v1773, 7
  %v1775 = vsub.s32 2, %v1774
  %v1776 = vrot.slane %v1763, %v1775
  %v1777 = vlaneseq
  %v1778 = vshrl.u32 %v1777, 7
  %v1779 = vsub.s32 3, %v1778
  %v1780 = vrot.slane %v1763, %v1779
  %v1785 = vmul.f32 %v1762, %v1768
  %v1786 = vmul.f32 %v1761, %v1772
  %v1787 = vmul.f32 %v1760, %v1776
  %v1788 = vmul.f32 %v1759, %v1780
  %v1793 = vrot.slane %v1785, 2
  %v1794 = vrot.slane %v1786, 2
  %v1795 = vrot.slane %v1787, 2
  %v1796 = vrot.slane %v1788, 2
  %1801 = vst [vmem:[#allocation2] sm:$0xc0] %v1793
  %1802 = vst [vmem:[#allocation2 + $0x8] sm:$0xc0] %v1794
  %1803 = vst [vmem:[#allocation2 + $0x10] sm:$0xc0] %v1795
  %1804 = vst [vmem:[#allocation2 + $0x18] sm:$0xc0] %v1796
  %1805 = vst [vmem:[#allocation2 + $0x20] sm:$0x1] %v1793
  %1806 = vst [vmem:[#allocation2 + $0x28] sm:$0x1] %v1794
  %1807 = vst [vmem:[#allocation2 + $0x30] sm:$0x1] %v1795
  %1808 = vst [vmem:[#allocation2 + $0x38] sm:$0x1] %v1796
  %1809 = vrot.lane.b32.xlu0 %v1651, 1
  %v1810 = vpop.permute.xlu0 %1809
  %1811 = vrot.lane.b32.xlu0 %v1652, 1
  %v1812 = vpop.permute.xlu0 %1811
  %1813 = vrot.lane.b32.xlu0 %v1653, 1
  %v1814 = vpop.permute.xlu0 %1813
  %1815 = vrot.lane.b32.xlu0 %v1654, 1
  %v1816 = vpop.permute.xlu0 %1815
  %v1817 = vsel %vm206, %v1814, %v1816
  %v1818 = vsel %vm206, %v1812, %v1814
  %v1819 = vsel %vm206, %v1810, %v1812
  %v1820 = vsel %vm206, %v1816, %v1810
  %v1821 = vld [vmem:[%s211] ss:$8 sm:$0xf]
  %v1823 = vlaneseq
  %v1824 = vshrl.u32 %v1823, 7
  %v1825 = vsub.s32 0, %v1824
  %v1826 = vrot.slane %v1821, %v1825
  %v1827 = vlaneseq
  %v1828 = vshrl.u32 %v1827, 7
  %v1829 = vsub.s32 1, %v1828
  %v1830 = vrot.slane %v1821, %v1829
  %v1831 = vlaneseq
  %v1832 = vshrl.u32 %v1831, 7
  %v1833 = vsub.s32 2, %v1832
  %v1834 = vrot.slane %v1821, %v1833
  %v1835 = vlaneseq
  %v1836 = vshrl.u32 %v1835, 7
  %v1837 = vsub.s32 3, %v1836
  %v1838 = vrot.slane %v1821, %v1837
  %v1843 = vmul.f32 %v1820, %v1826
  %v1844 = vmul.f32 %v1819, %v1830
  %v1845 = vmul.f32 %v1818, %v1834
  %v1846 = vmul.f32 %v1817, %v1838
  %v1851 = vrot.slane %v1843, 7
  %v1852 = vrot.slane %v1844, 7
  %v1853 = vrot.slane %v1845, 7
  %v1854 = vrot.slane %v1846, 7
  %1859 = vst [vmem:[#allocation2 + $0x20] sm:$0xe] %v1851
  %1860 = vst [vmem:[#allocation2 + $0x28] sm:$0xe] %v1852
  %1861 = vst [vmem:[#allocation2 + $0x30] sm:$0xe] %v1853
  %1862 = vst [vmem:[#allocation2 + $0x38] sm:$0xe] %v1854
  %v1867 = vrot.slane %v1651, 4
  %v1868 = vrot.slane %v1652, 4
  %v1869 = vrot.slane %v1653, 4
  %v1870 = vrot.slane %v1654, 4
  %1875 = vst [vmem:[#allocation2 + $0x20] sm:$0x70] %v1867
  %1876 = vst [vmem:[#allocation2 + $0x28] sm:$0x70] %v1868
  %1877 = vst [vmem:[#allocation2 + $0x30] sm:$0x70] %v1869
  %1878 = vst [vmem:[#allocation2 + $0x38] sm:$0x70] %v1870
  %1879 = vrot.lane.b32.xlu0 %v1651, 127
  %v1880 = vpop.permute.xlu0 %1879
  %1881 = vrot.lane.b32.xlu0 %v1652, 127
  %v1882 = vpop.permute.xlu0 %1881
  %1883 = vrot.lane.b32.xlu0 %v1653, 127
  %v1884 = vpop.permute.xlu0 %1883
  %1885 = vrot.lane.b32.xlu0 %v1654, 127
  %v1886 = vpop.permute.xlu0 %1885
  %v1887 = vsel %vm270, %v1884, %v1886
  %v1888 = vsel %vm270, %v1882, %v1884
  %v1889 = vsel %vm270, %v1880, %v1882
  %v1890 = vsel %vm270, %v1886, %v1880
  %v1891 = vld [vmem:[%s275] ss:$8 sm:$0xf]
  %v1893 = vlaneseq
  %v1894 = vshrl.u32 %v1893, 7
  %v1895 = vsub.s32 0, %v1894
  %v1896 = vrot.slane %v1891, %v1895
  %v1897 = vlaneseq
  %v1898 = vshrl.u32 %v1897, 7
  %v1899 = vsub.s32 1, %v1898
  %v1900 = vrot.slane %v1891, %v1899
  %v1901 = vlaneseq
  %v1902 = vshrl.u32 %v1901, 7
  %v1903 = vsub.s32 2, %v1902
  %v1904 = vrot.slane %v1891, %v1903
  %v1905 = vlaneseq
  %v1906 = vshrl.u32 %v1905, 7
  %v1907 = vsub.s32 3, %v1906
  %v1908 = vrot.slane %v1891, %v1907
  %v1913 = vmul.f32 %v1889, %v1896
  %v1914 = vmul.f32 %v1888, %v1900
  %v1915 = vmul.f32 %v1887, %v1904
  %v1916 = vmul.f32 %v1890, %v1908
  %v1921 = vrot.slane %v1913, 1
  %v1922 = vrot.slane %v1914, 1
  %v1923 = vrot.slane %v1915, 1
  %v1924 = vrot.slane %v1916, 1
  %1929 = vst [vmem:[#allocation2 + $0x20] sm:$0x80] %v1921
  %1930 = vst [vmem:[#allocation2 + $0x28] sm:$0x80] %v1922
  %1931 = vst [vmem:[#allocation2 + $0x30] sm:$0x80] %v1923
  %1932 = vst [vmem:[#allocation2 + $0x38] sm:$0x80] %v1924
  %1933 = vst [vmem:[#allocation2 + $0x40] sm:$0x3] %v1921
  %1934 = vst [vmem:[#allocation2 + $0x48] sm:$0x3] %v1922
  %1935 = vst [vmem:[#allocation2 + $0x50] sm:$0x3] %v1923
  %1936 = vst [vmem:[#allocation2 + $0x58] sm:$0x3] %v1924
  %1937 = vrot.lane.b32.xlu0 %v1651, 113
  %v1938 = vpop.permute.xlu0 %1937
  %1939 = vrot.lane.b32.xlu0 %v1652, 113
  %v1940 = vpop.permute.xlu0 %1939
  %1941 = vrot.lane.b32.xlu0 %v1653, 113
  %v1942 = vpop.permute.xlu0 %1941
  %1943 = vrot.lane.b32.xlu0 %v1654, 113
  %v1944 = vpop.permute.xlu0 %1943
  %v1945 = vsel %vm330, %v1942, %v1944
  %v1946 = vsel %vm330, %v1940, %v1942
  %v1947 = vsel %vm330, %v1938, %v1940
  %v1948 = vsel %vm330, %v1944, %v1938
  %v1949 = vld [vmem:[%s335] ss:$8 sm:$0xf]
  %v1951 = vlaneseq
  %v1952 = vshrl.u32 %v1951, 7
  %v1953 = vsub.s32 0, %v1952
  %v1954 = vrot.slane %v1949, %v1953
  %v1955 = vlaneseq
  %v1956 = vshrl.u32 %v1955, 7
  %v1957 = vsub.s32 1, %v1956
  %v1958 = vrot.slane %v1949, %v1957
  %v1959 = vlaneseq
  %v1960 = vshrl.u32 %v1959, 7
  %v1961 = vsub.s32 2, %v1960
  %v1962 = vrot.slane %v1949, %v1961
  %v1963 = vlaneseq
  %v1964 = vshrl.u32 %v1963, 7
  %v1965 = vsub.s32 3, %v1964
  %v1966 = vrot.slane %v1949, %v1965
  %v1971 = vmul.f32 %v1947, %v1954
  %v1972 = vmul.f32 %v1946, %v1958
  %v1973 = vmul.f32 %v1945, %v1962
  %v1974 = vmul.f32 %v1948, %v1966
  %v1979 = vrot.slane %v1971, 6
  %v1980 = vrot.slane %v1972, 6
  %v1981 = vrot.slane %v1973, 6
  %v1982 = vrot.slane %v1974, 6
  %1987 = vst [vmem:[#allocation2 + $0x40] sm:$0x1c] %v1979
  %1988 = vst [vmem:[#allocation2 + $0x48] sm:$0x1c] %v1980
  %1989 = vst [vmem:[#allocation2 + $0x50] sm:$0x1c] %v1981
  %1990 = vst [vmem:[#allocation2 + $0x58] sm:$0x1c] %v1982
  %1991 = vrot.lane.b32.xlu0 %v1651, 112
  %v1992 = vpop.permute.xlu0 %1991
  %1993 = vrot.lane.b32.xlu0 %v1652, 112
  %v1994 = vpop.permute.xlu0 %1993
  %1995 = vrot.lane.b32.xlu0 %v1653, 112
  %v1996 = vpop.permute.xlu0 %1995
  %1997 = vrot.lane.b32.xlu0 %v1654, 112
  %v1998 = vpop.permute.xlu0 %1997
  %v1999 = vsel %vm386, %v1996, %v1998
  %v2000 = vsel %vm386, %v1994, %v1996
  %v2001 = vsel %vm386, %v1992, %v1994
  %v2002 = vsel %vm386, %v1998, %v1992
  %v2003 = vld [vmem:[%s391] ss:$8 sm:$0xf]
  %v2005 = vlaneseq
  %v2006 = vshrl.u32 %v2005, 7
  %v2007 = vsub.s32 0, %v2006
  %v2008 = vrot.slane %v2003, %v2007
  %v2009 = vlaneseq
  %v2010 = vshrl.u32 %v2009, 7
  %v2011 = vsub.s32 1, %v2010
  %v2012 = vrot.slane %v2003, %v2011
  %v2013 = vlaneseq
  %v2014 = vshrl.u32 %v2013, 7
  %v2015 = vsub.s32 2, %v2014
  %v2016 = vrot.slane %v2003, %v2015
  %v2017 = vlaneseq
  %v2018 = vshrl.u32 %v2017, 7
  %v2019 = vsub.s32 3, %v2018
  %v2020 = vrot.slane %v2003, %v2019
  %v2025 = vmul.f32 %v2001, %v2008
  %v2026 = vmul.f32 %v2000, %v2012
  %v2027 = vmul.f32 %v1999, %v2016
  %v2028 = vmul.f32 %v2002, %v2020
  %v2033 = vrot.slane %v2025, 3
  %v2034 = vrot.slane %v2026, 3
  %v2035 = vrot.slane %v2027, 3
  %v2036 = vrot.slane %v2028, 3
  %2041 = vst [vmem:[#allocation2 + $0x40] sm:$0xe0] %v2033
  %2042 = vst [vmem:[#allocation2 + $0x48] sm:$0xe0] %v2034
  %2043 = vst [vmem:[#allocation2 + $0x50] sm:$0xe0] %v2035
  %2044 = vst [vmem:[#allocation2 + $0x58] sm:$0xe0] %v2036
  %2045 = vrot.lane.b32.xlu0 %v1651, 111
  %v2046 = vpop.permute.xlu0 %2045
  %2047 = vrot.lane.b32.xlu0 %v1652, 111
  %v2048 = vpop.permute.xlu0 %2047
  %2049 = vrot.lane.b32.xlu0 %v1653, 111
  %v2050 = vpop.permute.xlu0 %2049
  %2051 = vrot.lane.b32.xlu0 %v1654, 111
  %v2052 = vpop.permute.xlu0 %2051
  %v2053 = vsel %vm442, %v2050, %v2052
  %v2054 = vsel %vm442, %v2048, %v2050
  %v2055 = vsel %vm442, %v2046, %v2048
  %v2056 = vsel %vm442, %v2052, %v2046
  %v2057 = vld [vmem:[%s447] ss:$8 sm:$0xf]
  %v2059 = vlaneseq
  %v2060 = vshrl.u32 %v2059, 7
  %v2061 = vsub.s32 0, %v2060
  %v2062 = vrot.slane %v2057, %v2061
  %v2063 = vlaneseq
  %v2064 = vshrl.u32 %v2063, 7
  %v2065 = vsub.s32 1, %v2064
  %v2066 = vrot.slane %v2057, %v2065
  %v2067 = vlaneseq
  %v2068 = vshrl.u32 %v2067, 7
  %v2069 = vsub.s32 2, %v2068
  %v2070 = vrot.slane %v2057, %v2069
  %v2071 = vlaneseq
  %v2072 = vshrl.u32 %v2071, 7
  %v2073 = vsub.s32 3, %v2072
  %v2074 = vrot.slane %v2057, %v2073
  %v2079 = vmul.f32 %v2055, %v2062
  %v2080 = vmul.f32 %v2054, %v2066
  %v2081 = vmul.f32 %v2053, %v2070
  %v2082 = vmul.f32 %v2056, %v2074
  %2083 = vst [vmem:[#allocation2 + $0x60] sm:$0x7] %v2079
  %2084 = vst [vmem:[#allocation2 + $0x68] sm:$0x7] %v2080
  %2085 = vst [vmem:[#allocation2 + $0x70] sm:$0x7] %v2081
  %2086 = vst [vmem:[#allocation2 + $0x78] sm:$0x7] %v2082
  %v2087 = vld [vmem:[%s5] sm:$0x7]
  %v2088 = vld [vmem:[#allocation2] sm:$0xff]
  %v2089 = vld [vmem:[#allocation2 + $0x8] sm:$0xff]
  %v2090 = vld [vmem:[#allocation2 + $0x10] sm:$0xff]
  %v2091 = vld [vmem:[#allocation2 + $0x18] sm:$0xff]
  %v2092 = vld [vmem:[#allocation2 + $0x20] sm:$0xff]
  %v2093 = vld [vmem:[#allocation2 + $0x28] sm:$0xff]
  %v2094 = vld [vmem:[#allocation2 + $0x30] sm:$0xff]
  %v2095 = vld [vmem:[#allocation2 + $0x38] sm:$0xff]
  %v2096 = vld [vmem:[#allocation2 + $0x40] sm:$0xff]
  %v2097 = vld [vmem:[#allocation2 + $0x48] sm:$0xff]
  %v2098 = vld [vmem:[#allocation2 + $0x50] sm:$0xff]
  %v2099 = vld [vmem:[#allocation2 + $0x58] sm:$0xff]
  %v2100 = vld [vmem:[#allocation2 + $0x60] sm:$0x7]
  %v2101 = vld [vmem:[#allocation2 + $0x68] sm:$0x7]
  %v2102 = vld [vmem:[#allocation2 + $0x70] sm:$0x7]
  %v2103 = vld [vmem:[#allocation2 + $0x78] sm:$0x7]
  %v2105 = vsel %vm495, %v2087, 0
  %v2108 = vsel %vm499, %v2100, 0
  %v2111 = vsel %vm499, %v2101, 0
  %v2114 = vsel %vm499, %v2102, 0
  %v2117 = vsel %vm499, %v2103, 0
  %v2119 = vand.u32 %v2089, 4294901760
  %2120 = vmatprep.subr.mxu0 %v2119
  %v2121 = vand.u32 %v2088, 4294901760
  %2122 = vmatpush1.msra.mxu0 %v2121
  %v2123 = vand.u32 %v2093, 4294901760
  %2124 = vmatprep.subr.mxu0 %v2123
  %v2125 = vand.u32 %v2092, 4294901760
  %2126 = vmatpush1.msra.mxu0 %v2125
  %v2127 = vand.u32 %v2097, 4294901760
  %2128 = vmatprep.subr.mxu0 %v2127
  %v2129 = vand.u32 %v2096, 4294901760
  %2130 = vmatpush1.msra.mxu0 %v2129
  %v2131 = vand.u32 %v2111, 4294901760
  %2132 = vmatprep.subr.mxu0 %v2131
  %v2133 = vand.u32 %v2108, 4294901760
  %2134 = vmatpush1.msra.mxu0 %v2133
  %2135 = vmatprep.subr.mxu0 0.0
  %2136 = vmatpush1.msra.mxu0 0.0
  %2137 = vmatprep.subr.mxu0 0.0
  %2138 = vmatpush1.msra.mxu0 0.0
  %2139 = vmatprep.subr.mxu0 0.0
  %2140 = vmatpush1.msra.mxu0 0.0
  %2141 = vmatprep.subr.mxu0 0.0
  %2142 = vmatpush1.msra.mxu0 0.0
  %2143 = vmatprep.subr.mxu0 0.0
  %2144 = vmatpush1.msra.mxu0 0.0
  %2145 = vmatprep.subr.mxu0 0.0
  %2146 = vmatpush1.msra.mxu0 0.0
  %2147 = vmatprep.subr.mxu0 0.0
  %2148 = vmatpush1.msra.mxu0 0.0
  %2149 = vmatprep.subr.mxu0 0.0
  %2150 = vmatpush1.msra.mxu0 0.0
  %2151 = vmatprep.subr.mxu0 0.0
  %2152 = vmatpush1.msra.mxu0 0.0
  %2153 = vmatprep.subr.mxu0 0.0
  %2154 = vmatpush1.msra.mxu0 0.0
  %2155 = vmatprep.subr.mxu0 0.0
  %2156 = vmatpush1.msra.mxu0 0.0
  %2157 = vmatprep.subr.mxu0 0.0
  %2158 = vmatpush1.msra.mxu0 0.0
  %2159 = vmatprep.subr.mxu0 0.0
  %2160 = vmatpush1.msra.mxu0 0.0
  %2161 = vmatprep.subr.mxu0 0.0
  %2162 = vmatpush1.msra.mxu0 0.0
  %2163 = vmatprep.subr.mxu0 0.0
  %2164 = vmatpush1.msra.mxu0 0.0
  %2165 = vmatprep.subr.mxu0 0.0
  %2166 = vmatpush1.msra.mxu0 0.0
  %2167 = vmatprep.subr.mxu0 0.0
  %2168 = vmatpush1.msra.mxu0 0.0
  %2169 = vmatprep.subr.mxu0 0.0
  %2170 = vmatpush1.msra.mxu0 0.0
  %2171 = vmatprep.subr.mxu0 0.0
  %2172 = vmatpush1.msra.mxu0 0.0
  %2173 = vmatprep.subr.mxu0 0.0
  %2174 = vmatpush1.msra.mxu0 0.0
  %2175 = vmatprep.subr.mxu0 0.0
  %2176 = vmatpush1.msra.mxu0 0.0
  %2177 = vmatprep.subr.mxu0 0.0
  %2178 = vmatpush1.msra.mxu0 0.0
  %2179 = vmatprep.subr.mxu0 0.0
  %2180 = vmatpush1.msra.mxu0 0.0
  %2181 = vmatprep.subr.mxu0 0.0
  %2182 = vmatpush1.msra.mxu0 0.0
  %2183 = vmatprep.subr.mxu0 0.0
  %2184 = vmatpush1.msra.mxu0 0.0
  %2185 = vmatprep.subr.mxu0 0.0
  %2186 = vmatpush1.msra.mxu0 0.0
  %2187 = vmatprep.subr.mxu0 0.0
  %2188 = vmatpush1.msra.mxu0 0.0
  %2189 = vmatprep.subr.mxu0 0.0
  %2190 = vmatpush1.msra.mxu0 0.0
  %2191 = vmatprep.mubr.f32.mxu0 0.0
  %v2192 = vand.u32 %v2105, 4294901760
  %v2193 = vsub.f32 %v2105, %v2192
  %v2194 = vand.u32 %v2193, 4294901760
  %v2195 = vsub.f32 %v2193, %v2194
  %v2196 = vand.u32 %v2195, 4294901760
  %2197 = vmatmul.mubr.f32.gmra.mrb[0].mxu0 %v2196
  %v2198 = vpop.f32.mrb[0].mxu0
  %v2199 = vadd.f32 0.0, %v2198
  %v2200 = vpop.f32.mrb[0].mxu0
  %v2201 = vadd.f32 0.0, %v2200
  %2202 = vdwg.mxu0
  %v2203 = vand.u32 %v2089, 4294901760
  %v2204 = vsub.f32 %v2089, %v2203
  %v2205 = vand.u32 %v2204, 4294901760
  %v2206 = vsub.f32 %v2204, %v2205
  %v2207 = vand.u32 %v2206, 4294901760
  %2208 = vmatprep.subr.mxu0 %v2207
  %v2209 = vand.u32 %v2088, 4294901760
  %v2210 = vsub.f32 %v2088, %v2209
  %v2211 = vand.u32 %v2210, 4294901760
  %v2212 = vsub.f32 %v2210, %v2211
  %v2213 = vand.u32 %v2212, 4294901760
  %2214 = vmatpush1.msra.mxu0 %v2213
  %v2215 = vand.u32 %v2093, 4294901760
  %v2216 = vsub.f32 %v2093, %v2215
  %v2217 = vand.u32 %v2216, 4294901760
  %v2218 = vsub.f32 %v2216, %v2217
  %v2219 = vand.u32 %v2218, 4294901760
  %2220 = vmatprep.subr.mxu0 %v2219
  %v2221 = vand.u32 %v2092, 4294901760
  %v2222 = vsub.f32 %v2092, %v2221
  %v2223 = vand.u32 %v2222, 4294901760
  %v2224 = vsub.f32 %v2222, %v2223
  %v2225 = vand.u32 %v2224, 4294901760
  %2226 = vmatpush1.msra.mxu0 %v2225
  %v2227 = vand.u32 %v2097, 4294901760
  %v2228 = vsub.f32 %v2097, %v2227
  %v2229 = vand.u32 %v2228, 4294901760
  %v2230 = vsub.f32 %v2228, %v2229
  %v2231 = vand.u32 %v2230, 4294901760
  %2232 = vmatprep.subr.mxu0 %v2231
  %v2233 = vand.u32 %v2096, 4294901760
  %v2234 = vsub.f32 %v2096, %v2233
  %v2235 = vand.u32 %v2234, 4294901760
  %v2236 = vsub.f32 %v2234, %v2235
  %v2237 = vand.u32 %v2236, 4294901760
  %2238 = vmatpush1.msra.mxu0 %v2237
  %v2239 = vand.u32 %v2111, 4294901760
  %v2240 = vsub.f32 %v2111, %v2239
  %v2241 = vand.u32 %v2240, 4294901760
  %v2242 = vsub.f32 %v2240, %v2241
  %v2243 = vand.u32 %v2242, 4294901760
  %2244 = vmatprep.subr.mxu0 %v2243
  %v2245 = vand.u32 %v2108, 4294901760
  %v2246 = vsub.f32 %v2108, %v2245
  %v2247 = vand.u32 %v2246, 4294901760
  %v2248 = vsub.f32 %v2246, %v2247
  %v2249 = vand.u32 %v2248, 4294901760
  %2250 = vmatpush1.msra.mxu0 %v2249
  %2251 = vmatprep.subr.mxu0 0.0
  %2252 = vmatpush1.msra.mxu0 0.0
  %2253 = vmatprep.subr.mxu0 0.0
  %2254 = vmatpush1.msra.mxu0 0.0
  %2255 = vmatprep.subr.mxu0 0.0
  %2256 = vmatpush1.msra.mxu0 0.0
  %2257 = vmatprep.subr.mxu0 0.0
  %2258 = vmatpush1.msra.mxu0 0.0
  %2259 = vmatprep.subr.mxu0 0.0
  %2260 = vmatpush1.msra.mxu0 0.0
  %2261 = vmatprep.subr.mxu0 0.0
  %2262 = vmatpush1.msra.mxu0 0.0
  %2263 = vmatprep.subr.mxu0 0.0
  %2264 = vmatpush1.msra.mxu0 0.0
  %2265 = vmatprep.subr.mxu0 0.0
  %2266 = vmatpush1.msra.mxu0 0.0
  %2267 = vmatprep.subr.mxu0 0.0
  %2268 = vmatpush1.msra.mxu0 0.0
  %2269 = vmatprep.subr.mxu0 0.0
  %2270 = vmatpush1.msra.mxu0 0.0
  %2271 = vmatprep.subr.mxu0 0.0
  %2272 = vmatpush1.msra.mxu0 0.0
  %2273 = vmatprep.subr.mxu0 0.0
  %2274 = vmatpush1.msra.mxu0 0.0
  %2275 = vmatprep.subr.mxu0 0.0
  %2276 = vmatpush1.msra.mxu0 0.0
  %2277 = vmatprep.subr.mxu0 0.0
  %2278 = vmatpush1.msra.mxu0 0.0
  %2279 = vmatprep.subr.mxu0 0.0
  %2280 = vmatpush1.msra.mxu0 0.0
  %2281 = vmatprep.subr.mxu0 0.0
  %2282 = vmatpush1.msra.mxu0 0.0
  %2283 = vmatprep.subr.mxu0 0.0
  %2284 = vmatpush1.msra.mxu0 0.0
  %2285 = vmatprep.subr.mxu0 0.0
  %2286 = vmatpush1.msra.mxu0 0.0
  %2287 = vmatprep.subr.mxu0 0.0
  %2288 = vmatpush1.msra.mxu0 0.0
  %2289 = vmatprep.subr.mxu0 0.0
  %2290 = vmatpush1.msra.mxu0 0.0
  %2291 = vmatprep.subr.mxu0 0.0
  %2292 = vmatpush1.msra.mxu0 0.0
  %2293 = vmatprep.subr.mxu0 0.0
  %2294 = vmatpush1.msra.mxu0 0.0
  %2295 = vmatprep.subr.mxu0 0.0
  %2296 = vmatpush1.msra.mxu0 0.0
  %2297 = vmatprep.subr.mxu0 0.0
  %2298 = vmatpush1.msra.mxu0 0.0
  %2299 = vmatprep.subr.mxu0 0.0
  %2300 = vmatpush1.msra.mxu0 0.0
  %2301 = vmatprep.subr.mxu0 0.0
  %2302 = vmatpush1.msra.mxu0 0.0
  %2303 = vmatprep.subr.mxu0 0.0
  %2304 = vmatpush1.msra.mxu0 0.0
  %2305 = vmatprep.subr.mxu0 0.0
  %2306 = vmatpush1.msra.mxu0 0.0
  %2307 = vmatprep.mubr.f32.mxu0 0.0
  %v2308 = vand.u32 %v2105, 4294901760
  %2309 = vmatmul.mubr.f32.gmra.mrb[0].mxu0 %v2308
  %v2310 = vpop.f32.mrb[0].mxu0
  %v2311 = vadd.f32 %v2199, %v2310
  %v2312 = vpop.f32.mrb[0].mxu0
  %v2313 = vadd.f32 %v2201, %v2312
  %2314 = vdwg.mxu0
  %v2315 = vand.u32 %v2089, 4294901760
  %v2316 = vsub.f32 %v2089, %v2315
  %2317 = vmatprep.subr.mxu0 %v2316
  %v2318 = vand.u32 %v2088, 4294901760
  %v2319 = vsub.f32 %v2088, %v2318
  %2320 = vmatpush1.msra.mxu0 %v2319
  %v2321 = vand.u32 %v2093, 4294901760
  %v2322 = vsub.f32 %v2093, %v2321
  %2323 = vmatprep.subr.mxu0 %v2322
  %v2324 = vand.u32 %v2092, 4294901760
  %v2325 = vsub.f32 %v2092, %v2324
  %2326 = vmatpush1.msra.mxu0 %v2325
  %v2327 = vand.u32 %v2097, 4294901760
  %v2328 = vsub.f32 %v2097, %v2327
  %2329 = vmatprep.subr.mxu0 %v2328
  %v2330 = vand.u32 %v2096, 4294901760
  %v2331 = vsub.f32 %v2096, %v2330
  %2332 = vmatpush1.msra.mxu0 %v2331
  %v2333 = vand.u32 %v2111, 4294901760
  %v2334 = vsub.f32 %v2111, %v2333
  %2335 = vmatprep.subr.mxu0 %v2334
  %v2336 = vand.u32 %v2108, 4294901760
  %v2337 = vsub.f32 %v2108, %v2336
  %2338 = vmatpush1.msra.mxu0 %v2337
  %2339 = vmatprep.subr.mxu0 0.0
  %2340 = vmatpush1.msra.mxu0 0.0
  %2341 = vmatprep.subr.mxu0 0.0
  %2342 = vmatpush1.msra.mxu0 0.0
  %2343 = vmatprep.subr.mxu0 0.0
  %2344 = vmatpush1.msra.mxu0 0.0
  %2345 = vmatprep.subr.mxu0 0.0
  %2346 = vmatpush1.msra.mxu0 0.0
  %2347 = vmatprep.subr.mxu0 0.0
  %2348 = vmatpush1.msra.mxu0 0.0
  %2349 = vmatprep.subr.mxu0 0.0
  %2350 = vmatpush1.msra.mxu0 0.0
  %2351 = vmatprep.subr.mxu0 0.0
  %2352 = vmatpush1.msra.mxu0 0.0
  %2353 = vmatprep.subr.mxu0 0.0
  %2354 = vmatpush1.msra.mxu0 0.0
  %2355 = vmatprep.subr.mxu0 0.0
  %2356 = vmatpush1.msra.mxu0 0.0
  %2357 = vmatprep.subr.mxu0 0.0
  %2358 = vmatpush1.msra.mxu0 0.0
  %2359 = vmatprep.subr.mxu0 0.0
  %2360 = vmatpush1.msra.mxu0 0.0
  %2361 = vmatprep.subr.mxu0 0.0
  %2362 = vmatpush1.msra.mxu0 0.0
  %2363 = vmatprep.subr.mxu0 0.0
  %2364 = vmatpush1.msra.mxu0 0.0
  %2365 = vmatprep.subr.mxu0 0.0
  %2366 = vmatpush1.msra.mxu0 0.0
  %2367 = vmatprep.subr.mxu0 0.0
  %2368 = vmatpush1.msra.mxu0 0.0
  %2369 = vmatprep.subr.mxu0 0.0
  %2370 = vmatpush1.msra.mxu0 0.0
  %2371 = vmatprep.subr.mxu0 0.0
  %2372 = vmatpush1.msra.mxu0 0.0
  %2373 = vmatprep.subr.mxu0 0.0
  %2374 = vmatpush1.msra.mxu0 0.0
  %2375 = vmatprep.subr.mxu0 0.0
  %2376 = vmatpush1.msra.mxu0 0.0
  %2377 = vmatprep.subr.mxu0 0.0
  %2378 = vmatpush1.msra.mxu0 0.0
  %2379 = vmatprep.subr.mxu0 0.0
  %2380 = vmatpush1.msra.mxu0 0.0
  %2381 = vmatprep.subr.mxu0 0.0
  %2382 = vmatpush1.msra.mxu0 0.0
  %2383 = vmatprep.subr.mxu0 0.0
  %2384 = vmatpush1.msra.mxu0 0.0
  %2385 = vmatprep.subr.mxu0 0.0
  %2386 = vmatpush1.msra.mxu0 0.0
  %2387 = vmatprep.subr.mxu0 0.0
  %2388 = vmatpush1.msra.mxu0 0.0
  %2389 = vmatprep.subr.mxu0 0.0
  %2390 = vmatpush1.msra.mxu0 0.0
  %2391 = vmatprep.subr.mxu0 0.0
  %2392 = vmatpush1.msra.mxu0 0.0
  %2393 = vmatprep.subr.mxu0 0.0
  %2394 = vmatpush1.msra.mxu0 0.0
  %2395 = vmatprep.mubr.f32.mxu0 0.0
  %v2396 = vand.u32 %v2105, 4294901760
  %v2397 = vsub.f32 %v2105, %v2396
  %2398 = vmatmul.mubr.f32.gmra.mrb[0].mxu0 %v2397
  %v2399 = vpop.f32.mrb[0].mxu0
  %v2400 = vadd.f32 %v2311, %v2399
  %v2401 = vpop.f32.mrb[0].mxu0
  %v2402 = vadd.f32 %v2313, %v2401
  %2403 = vdwg.mxu0
  %v2404 = vand.u32 %v2089, 4294901760
  %2405 = vmatprep.subr.mxu0 %v2404
  %v2406 = vand.u32 %v2088, 4294901760
  %2407 = vmatpush1.msra.mxu0 %v2406
  %v2408 = vand.u32 %v2093, 4294901760
  %2409 = vmatprep.subr.mxu0 %v2408
  %v2410 = vand.u32 %v2092, 4294901760
  %2411 = vmatpush1.msra.mxu0 %v2410
  %v2412 = vand.u32 %v2097, 4294901760
  %2413 = vmatprep.subr.mxu0 %v2412
  %v2414 = vand.u32 %v2096, 4294901760
  %2415 = vmatpush1.msra.mxu0 %v2414
  %v2416 = vand.u32 %v2111, 4294901760
  %2417 = vmatprep.subr.mxu0 %v2416
  %v2418 = vand.u32 %v2108, 4294901760
  %2419 = vmatpush1.msra.mxu0 %v2418
  %2420 = vmatprep.subr.mxu0 0.0
  %2421 = vmatpush1.msra.mxu0 0.0
  %2422 = vmatprep.subr.mxu0 0.0
  %2423 = vmatpush1.msra.mxu0 0.0
  %2424 = vmatprep.subr.mxu0 0.0
  %2425 = vmatpush1.msra.mxu0 0.0
  %2426 = vmatprep.subr.mxu0 0.0
  %2427 = vmatpush1.msra.mxu0 0.0
  %2428 = vmatprep.subr.mxu0 0.0
  %2429 = vmatpush1.msra.mxu0 0.0
  %2430 = vmatprep.subr.mxu0 0.0
  %2431 = vmatpush1.msra.mxu0 0.0
  %2432 = vmatprep.subr.mxu0 0.0
  %2433 = vmatpush1.msra.mxu0 0.0
  %2434 = vmatprep.subr.mxu0 0.0
  %2435 = vmatpush1.msra.mxu0 0.0
  %2436 = vmatprep.subr.mxu0 0.0
  %2437 = vmatpush1.msra.mxu0 0.0
  %2438 = vmatprep.subr.mxu0 0.0
  %2439 = vmatpush1.msra.mxu0 0.0
  %2440 = vmatprep.subr.mxu0 0.0
  %2441 = vmatpush1.msra.mxu0 0.0
  %2442 = vmatprep.subr.mxu0 0.0
  %2443 = vmatpush1.msra.mxu0 0.0
  %2444 = vmatprep.subr.mxu0 0.0
  %2445 = vmatpush1.msra.mxu0 0.0
  %2446 = vmatprep.subr.mxu0 0.0
  %2447 = vmatpush1.msra.mxu0 0.0
  %2448 = vmatprep.subr.mxu0 0.0
  %2449 = vmatpush1.msra.mxu0 0.0
  %2450 = vmatprep.subr.mxu0 0.0
  %2451 = vmatpush1.msra.mxu0 0.0
  %2452 = vmatprep.subr.mxu0 0.0
  %2453 = vmatpush1.msra.mxu0 0.0
  %2454 = vmatprep.subr.mxu0 0.0
  %2455 = vmatpush1.msra.mxu0 0.0
  %2456 = vmatprep.subr.mxu0 0.0
  %2457 = vmatpush1.msra.mxu0 0.0
  %2458 = vmatprep.subr.mxu0 0.0
  %2459 = vmatpush1.msra.mxu0 0.0
  %2460 = vmatprep.subr.mxu0 0.0
  %2461 = vmatpush1.msra.mxu0 0.0
  %2462 = vmatprep.subr.mxu0 0.0
  %2463 = vmatpush1.msra.mxu0 0.0
  %2464 = vmatprep.subr.mxu0 0.0
  %2465 = vmatpush1.msra.mxu0 0.0
  %2466 = vmatprep.subr.mxu0 0.0
  %2467 = vmatpush1.msra.mxu0 0.0
  %2468 = vmatprep.subr.mxu0 0.0
  %2469 = vmatpush1.msra.mxu0 0.0
  %2470 = vmatprep.subr.mxu0 0.0
  %2471 = vmatpush1.msra.mxu0 0.0
  %2472 = vmatprep.subr.mxu0 0.0
  %2473 = vmatpush1.msra.mxu0 0.0
  %2474 = vmatprep.subr.mxu0 0.0
  %2475 = vmatpush1.msra.mxu0 0.0
  %2476 = vmatprep.mubr.f32.mxu0 0.0
  %v2477 = vand.u32 %v2105, 4294901760
  %v2478 = vsub.f32 %v2105, %v2477
  %v2479 = vand.u32 %v2478, 4294901760
  %2480 = vmatmul.mubr.f32.gmra.mrb[0].mxu0 %v2479
  %v2481 = vpop.f32.mrb[0].mxu0
  %v2482 = vadd.f32 %v2400, %v2481
  %v2483 = vpop.f32.mrb[0].mxu0
  %v2484 = vadd.f32 %v2402, %v2483
  %2485 = vdwg.mxu0
  %v2486 = vand.u32 %v2089, 4294901760
  %v2487 = vsub.f32 %v2089, %v2486
  %v2488 = vand.u32 %v2487, 4294901760
  %2489 = vmatprep.subr.mxu0 %v2488
  %v2490 = vand.u32 %v2088, 4294901760
  %v2491 = vsub.f32 %v2088, %v2490
  %v2492 = vand.u32 %v2491, 4294901760
  %2493 = vmatpush1.msra.mxu0 %v2492
  %v2494 = vand.u32 %v2093, 4294901760
  %v2495 = vsub.f32 %v2093, %v2494
  %v2496 = vand.u32 %v2495, 4294901760
  %2497 = vmatprep.subr.mxu0 %v2496
  %v2498 = vand.u32 %v2092, 4294901760
  %v2499 = vsub.f32 %v2092, %v2498
  %v2500 = vand.u32 %v2499, 4294901760
  %2501 = vmatpush1.msra.mxu0 %v2500
  %v2502 = vand.u32 %v2097, 4294901760
  %v2503 = vsub.f32 %v2097, %v2502
  %v2504 = vand.u32 %v2503, 4294901760
  %2505 = vmatprep.subr.mxu0 %v2504
  %v2506 = vand.u32 %v2096, 4294901760
  %v2507 = vsub.f32 %v2096, %v2506
  %v2508 = vand.u32 %v2507, 4294901760
  %2509 = vmatpush1.msra.mxu0 %v2508
  %v2510 = vand.u32 %v2111, 4294901760
  %v2511 = vsub.f32 %v2111, %v2510
  %v2512 = vand.u32 %v2511, 4294901760
  %2513 = vmatprep.subr.mxu0 %v2512
  %v2514 = vand.u32 %v2108, 4294901760
  %v2515 = vsub.f32 %v2108, %v2514
  %v2516 = vand.u32 %v2515, 4294901760
  %2517 = vmatpush1.msra.mxu0 %v2516
  %2518 = vmatprep.subr.mxu0 0.0
  %2519 = vmatpush1.msra.mxu0 0.0
  %2520 = vmatprep.subr.mxu0 0.0
  %2521 = vmatpush1.msra.mxu0 0.0
  %2522 = vmatprep.subr.mxu0 0.0
  %2523 = vmatpush1.msra.mxu0 0.0
  %2524 = vmatprep.subr.mxu0 0.0
  %2525 = vmatpush1.msra.mxu0 0.0
  %2526 = vmatprep.subr.mxu0 0.0
  %2527 = vmatpush1.msra.mxu0 0.0
  %2528 = vmatprep.subr.mxu0 0.0
  %2529 = vmatpush1.msra.mxu0 0.0
  %2530 = vmatprep.subr.mxu0 0.0
  %2531 = vmatpush1.msra.mxu0 0.0
  %2532 = vmatprep.subr.mxu0 0.0
  %2533 = vmatpush1.msra.mxu0 0.0
  %2534 = vmatprep.subr.mxu0 0.0
  %2535 = vmatpush1.msra.mxu0 0.0
  %2536 = vmatprep.subr.mxu0 0.0
  %2537 = vmatpush1.msra.mxu0 0.0
  %2538 = vmatprep.subr.mxu0 0.0
  %2539 = vmatpush1.msra.mxu0 0.0
  %2540 = vmatprep.subr.mxu0 0.0
  %2541 = vmatpush1.msra.mxu0 0.0
  %2542 = vmatprep.subr.mxu0 0.0
  %2543 = vmatpush1.msra.mxu0 0.0
  %2544 = vmatprep.subr.mxu0 0.0
  %2545 = vmatpush1.msra.mxu0 0.0
  %2546 = vmatprep.subr.mxu0 0.0
  %2547 = vmatpush1.msra.mxu0 0.0
  %2548 = vmatprep.subr.mxu0 0.0
  %2549 = vmatpush1.msra.mxu0 0.0
  %2550 = vmatprep.subr.mxu0 0.0
  %2551 = vmatpush1.msra.mxu0 0.0
  %2552 = vmatprep.subr.mxu0 0.0
  %2553 = vmatpush1.msra.mxu0 0.0
  %2554 = vmatprep.subr.mxu0 0.0
  %2555 = vmatpush1.msra.mxu0 0.0
  %2556 = vmatprep.subr.mxu0 0.0
  %2557 = vmatpush1.msra.mxu0 0.0
  %2558 = vmatprep.subr.mxu0 0.0
  %2559 = vmatpush1.msra.mxu0 0.0
  %2560 = vmatprep.subr.mxu0 0.0
  %2561 = vmatpush1.msra.mxu0 0.0
  %2562 = vmatprep.subr.mxu0 0.0
  %2563 = vmatpush1.msra.mxu0 0.0
  %2564 = vmatprep.subr.mxu0 0.0
  %2565 = vmatpush1.msra.mxu0 0.0
  %2566 = vmatprep.subr.mxu0 0.0
  %2567 = vmatpush1.msra.mxu0 0.0
  %2568 = vmatprep.subr.mxu0 0.0
  %2569 = vmatpush1.msra.mxu0 0.0
  %2570 = vmatprep.subr.mxu0 0.0
  %2571 = vmatpush1.msra.mxu0 0.0
  %2572 = vmatprep.subr.mxu0 0.0
  %2573 = vmatpush1.msra.mxu0 0.0
  %2574 = vmatprep.mubr.f32.mxu0 0.0
  %v2575 = vand.u32 %v2105, 4294901760
  %2576 = vmatmul.mubr.f32.gmra.mrb[0].mxu0 %v2575
  %v2577 = vpop.f32.mrb[0].mxu0
  %v2578 = vadd.f32 %v2482, %v2577
  %v2579 = vpop.f32.mrb[0].mxu0
  %v2580 = vadd.f32 %v2484, %v2579
  %2581 = vdwg.mxu0
  %v2582 = vand.u32 %v2089, 4294901760
  %2583 = vmatprep.subr.mxu0 %v2582
  %v2584 = vand.u32 %v2088, 4294901760
  %2585 = vmatpush1.msra.mxu0 %v2584
  %v2586 = vand.u32 %v2093, 4294901760
  %2587 = vmatprep.subr.mxu0 %v2586
  %v2588 = vand.u32 %v2092, 4294901760
  %2589 = vmatpush1.msra.mxu0 %v2588
  %v2590 = vand.u32 %v2097, 4294901760
  %2591 = vmatprep.subr.mxu0 %v2590
  %v2592 = vand.u32 %v2096, 4294901760
  %2593 = vmatpush1.msra.mxu0 %v2592
  %v2594 = vand.u32 %v2111, 4294901760
  %2595 = vmatprep.subr.mxu0 %v2594
  %v2596 = vand.u32 %v2108, 4294901760
  %2597 = vmatpush1.msra.mxu0 %v2596
  %2598 = vmatprep.subr.mxu0 0.0
  %2599 = vmatpush1.msra.mxu0 0.0
  %2600 = vmatprep.subr.mxu0 0.0
  %2601 = vmatpush1.msra.mxu0 0.0
  %2602 = vmatprep.subr.mxu0 0.0
  %2603 = vmatpush1.msra.mxu0 0.0
  %2604 = vmatprep.subr.mxu0 0.0
  %2605 = vmatpush1.msra.mxu0 0.0
  %2606 = vmatprep.subr.mxu0 0.0
  %2607 = vmatpush1.msra.mxu0 0.0
  %2608 = vmatprep.subr.mxu0 0.0
  %2609 = vmatpush1.msra.mxu0 0.0
  %2610 = vmatprep.subr.mxu0 0.0
  %2611 = vmatpush1.msra.mxu0 0.0
  %2612 = vmatprep.subr.mxu0 0.0
  %2613 = vmatpush1.msra.mxu0 0.0
  %2614 = vmatprep.subr.mxu0 0.0
  %2615 = vmatpush1.msra.mxu0 0.0
  %2616 = vmatprep.subr.mxu0 0.0
  %2617 = vmatpush1.msra.mxu0 0.0
  %2618 = vmatprep.subr.mxu0 0.0
  %2619 = vmatpush1.msra.mxu0 0.0
  %2620 = vmatprep.subr.mxu0 0.0
  %2621 = vmatpush1.msra.mxu0 0.0
  %2622 = vmatprep.subr.mxu0 0.0
  %2623 = vmatpush1.msra.mxu0 0.0
  %2624 = vmatprep.subr.mxu0 0.0
  %2625 = vmatpush1.msra.mxu0 0.0
  %2626 = vmatprep.subr.mxu0 0.0
  %2627 = vmatpush1.msra.mxu0 0.0
  %2628 = vmatprep.subr.mxu0 0.0
  %2629 = vmatpush1.msra.mxu0 0.0
  %2630 = vmatprep.subr.mxu0 0.0
  %2631 = vmatpush1.msra.mxu0 0.0
  %2632 = vmatprep.subr.mxu0 0.0
  %2633 = vmatpush1.msra.mxu0 0.0
  %2634 = vmatprep.subr.mxu0 0.0
  %2635 = vmatpush1.msra.mxu0 0.0
  %2636 = vmatprep.subr.mxu0 0.0
  %2637 = vmatpush1.msra.mxu0 0.0
  %2638 = vmatprep.subr.mxu0 0.0
  %2639 = vmatpush1.msra.mxu0 0.0
  %2640 = vmatprep.subr.mxu0 0.0
  %2641 = vmatpush1.msra.mxu0 0.0
  %2642 = vmatprep.subr.mxu0 0.0
  %2643 = vmatpush1.msra.mxu0 0.0
  %2644 = vmatprep.subr.mxu0 0.0
  %2645 = vmatpush1.msra.mxu0 0.0
  %2646 = vmatprep.subr.mxu0 0.0
  %2647 = vmatpush1.msra.mxu0 0.0
  %2648 = vmatprep.subr.mxu0 0.0
  %2649 = vmatpush1.msra.mxu0 0.0
  %2650 = vmatprep.subr.mxu0 0.0
  %2651 = vmatpush1.msra.mxu0 0.0
  %2652 = vmatprep.subr.mxu0 0.0
  %2653 = vmatpush1.msra.mxu0 0.0
  %2654 = vmatprep.mubr.f32.mxu0 0.0
  %v2655 = vand.u32 %v2105, 4294901760
  %2656 = vmatmul.mubr.f32.gmra.mrb[0].mxu0 %v2655
  %v2657 = vpop.f32.mrb[0].mxu0
  %v2658 = vadd.f32 %v2578, %v2657
  %v2659 = vpop.f32.mrb[0].mxu0
  %v2660 = vadd.f32 %v2580, %v2659
  %2661 = vdwg.mxu0
  %v2662 = vand.u32 %v2091, 4294901760
  %2663 = vmatprep.subr.mxu0 %v2662
  %v2664 = vand.u32 %v2090, 4294901760
  %2665 = vmatpush1.msra.mxu0 %v2664
  %v2666 = vand.u32 %v2095, 4294901760
  %2667 = vmatprep.subr.mxu0 %v2666
  %v2668 = vand.u32 %v2094, 4294901760
  %2669 = vmatpush1.msra.mxu0 %v2668
  %v2670 = vand.u32 %v2099, 4294901760
  %2671 = vmatprep.subr.mxu0 %v2670
  %v2672 = vand.u32 %v2098, 4294901760
  %2673 = vmatpush1.msra.mxu0 %v2672
  %v2674 = vand.u32 %v2117, 4294901760
  %2675 = vmatprep.subr.mxu0 %v2674
  %v2676 = vand.u32 %v2114, 4294901760
  %2677 = vmatpush1.msra.mxu0 %v2676
  %2678 = vmatprep.subr.mxu0 0.0
  %2679 = vmatpush1.msra.mxu0 0.0
  %2680 = vmatprep.subr.mxu0 0.0
  %2681 = vmatpush1.msra.mxu0 0.0
  %2682 = vmatprep.subr.mxu0 0.0
  %2683 = vmatpush1.msra.mxu0 0.0
  %2684 = vmatprep.subr.mxu0 0.0
  %2685 = vmatpush1.msra.mxu0 0.0
  %2686 = vmatprep.subr.mxu0 0.0
  %2687 = vmatpush1.msra.mxu0 0.0
  %2688 = vmatprep.subr.mxu0 0.0
  %2689 = vmatpush1.msra.mxu0 0.0
  %2690 = vmatprep.subr.mxu0 0.0
  %2691 = vmatpush1.msra.mxu0 0.0
  %2692 = vmatprep.subr.mxu0 0.0
  %2693 = vmatpush1.msra.mxu0 0.0
  %2694 = vmatprep.subr.mxu0 0.0
  %2695 = vmatpush1.msra.mxu0 0.0
  %2696 = vmatprep.subr.mxu0 0.0
  %2697 = vmatpush1.msra.mxu0 0.0
  %2698 = vmatprep.subr.mxu0 0.0
  %2699 = vmatpush1.msra.mxu0 0.0
  %2700 = vmatprep.subr.mxu0 0.0
  %2701 = vmatpush1.msra.mxu0 0.0
  %2702 = vmatprep.subr.mxu0 0.0
  %2703 = vmatpush1.msra.mxu0 0.0
  %2704 = vmatprep.subr.mxu0 0.0
  %2705 = vmatpush1.msra.mxu0 0.0
  %2706 = vmatprep.subr.mxu0 0.0
  %2707 = vmatpush1.msra.mxu0 0.0
  %2708 = vmatprep.subr.mxu0 0.0
  %2709 = vmatpush1.msra.mxu0 0.0
  %2710 = vmatprep.subr.mxu0 0.0
  %2711 = vmatpush1.msra.mxu0 0.0
  %2712 = vmatprep.subr.mxu0 0.0
  %2713 = vmatpush1.msra.mxu0 0.0
  %2714 = vmatprep.subr.mxu0 0.0
  %2715 = vmatpush1.msra.mxu0 0.0
  %2716 = vmatprep.subr.mxu0 0.0
  %2717 = vmatpush1.msra.mxu0 0.0
  %2718 = vmatprep.subr.mxu0 0.0
  %2719 = vmatpush1.msra.mxu0 0.0
  %2720 = vmatprep.subr.mxu0 0.0
  %2721 = vmatpush1.msra.mxu0 0.0
  %2722 = vmatprep.subr.mxu0 0.0
  %2723 = vmatpush1.msra.mxu0 0.0
  %2724 = vmatprep.subr.mxu0 0.0
  %2725 = vmatpush1.msra.mxu0 0.0
  %2726 = vmatprep.subr.mxu0 0.0
  %2727 = vmatpush1.msra.mxu0 0.0
  %2728 = vmatprep.subr.mxu0 0.0
  %2729 = vmatpush1.msra.mxu0 0.0
  %2730 = vmatprep.subr.mxu0 0.0
  %2731 = vmatpush1.msra.mxu0 0.0
  %2732 = vmatprep.subr.mxu0 0.0
  %2733 = vmatpush1.msra.mxu0 0.0
  %2734 = vmatprep.mubr.f32.mxu0 0.0
  %v2735 = vand.u32 %v2105, 4294901760
  %v2736 = vsub.f32 %v2105, %v2735
  %v2737 = vand.u32 %v2736, 4294901760
  %v2738 = vsub.f32 %v2736, %v2737
  %v2739 = vand.u32 %v2738, 4294901760
  %2740 = vmatmul.mubr.f32.gmra.mrb[0].mxu0 %v2739
  %v2741 = vpop.f32.mrb[0].mxu0
  %v2742 = vadd.f32 0.0, %v2741
  %v2743 = vpop.f32.mrb[0].mxu0
  %v2744 = vadd.f32 0.0, %v2743
  %2745 = vdwg.mxu0
  %v2746 = vand.u32 %v2091, 4294901760
  %v2747 = vsub.f32 %v2091, %v2746
  %v2748 = vand.u32 %v2747, 4294901760
  %v2749 = vsub.f32 %v2747, %v2748
  %v2750 = vand.u32 %v2749, 4294901760
  %2751 = vmatprep.subr.mxu0 %v2750
  %v2752 = vand.u32 %v2090, 4294901760
  %v2753 = vsub.f32 %v2090, %v2752
  %v2754 = vand.u32 %v2753, 4294901760
  %v2755 = vsub.f32 %v2753, %v2754
  %v2756 = vand.u32 %v2755, 4294901760
  %2757 = vmatpush1.msra.mxu0 %v2756
  %v2758 = vand.u32 %v2095, 4294901760
  %v2759 = vsub.f32 %v2095, %v2758
  %v2760 = vand.u32 %v2759, 4294901760
  %v2761 = vsub.f32 %v2759, %v2760
  %v2762 = vand.u32 %v2761, 4294901760
  %2763 = vmatprep.subr.mxu0 %v2762
  %v2764 = vand.u32 %v2094, 4294901760
  %v2765 = vsub.f32 %v2094, %v2764
  %v2766 = vand.u32 %v2765, 4294901760
  %v2767 = vsub.f32 %v2765, %v2766
  %v2768 = vand.u32 %v2767, 4294901760
  %2769 = vmatpush1.msra.mxu0 %v2768
  %v2770 = vand.u32 %v2099, 4294901760
  %v2771 = vsub.f32 %v2099, %v2770
  %v2772 = vand.u32 %v2771, 4294901760
  %v2773 = vsub.f32 %v2771, %v2772
  %v2774 = vand.u32 %v2773, 4294901760
  %2775 = vmatprep.subr.mxu0 %v2774
  %v2776 = vand.u32 %v2098, 4294901760
  %v2777 = vsub.f32 %v2098, %v2776
  %v2778 = vand.u32 %v2777, 4294901760
  %v2779 = vsub.f32 %v2777, %v2778
  %v2780 = vand.u32 %v2779, 4294901760
  %2781 = vmatpush1.msra.mxu0 %v2780
  %v2782 = vand.u32 %v2117, 4294901760
  %v2783 = vsub.f32 %v2117, %v2782
  %v2784 = vand.u32 %v2783, 4294901760
  %v2785 = vsub.f32 %v2783, %v2784
  %v2786 = vand.u32 %v2785, 4294901760
  %2787 = vmatprep.subr.mxu0 %v2786
  %v2788 = vand.u32 %v2114, 4294901760
  %v2789 = vsub.f32 %v2114, %v2788
  %v2790 = vand.u32 %v2789, 4294901760
  %v2791 = vsub.f32 %v2789, %v2790
  %v2792 = vand.u32 %v2791, 4294901760
  %2793 = vmatpush1.msra.mxu0 %v2792
  %2794 = vmatprep.subr.mxu0 0.0
  %2795 = vmatpush1.msra.mxu0 0.0
  %2796 = vmatprep.subr.mxu0 0.0
  %2797 = vmatpush1.msra.mxu0 0.0
  %2798 = vmatprep.subr.mxu0 0.0
  %2799 = vmatpush1.msra.mxu0 0.0
  %2800 = vmatprep.subr.mxu0 0.0
  %2801 = vmatpush1.msra.mxu0 0.0
  %2802 = vmatprep.subr.mxu0 0.0
  %2803 = vmatpush1.msra.mxu0 0.0
  %2804 = vmatprep.subr.mxu0 0.0
  %2805 = vmatpush1.msra.mxu0 0.0
  %2806 = vmatprep.subr.mxu0 0.0
  %2807 = vmatpush1.msra.mxu0 0.0
  %2808 = vmatprep.subr.mxu0 0.0
  %2809 = vmatpush1.msra.mxu0 0.0
  %2810 = vmatprep.subr.mxu0 0.0
  %2811 = vmatpush1.msra.mxu0 0.0
  %2812 = vmatprep.subr.mxu0 0.0
  %2813 = vmatpush1.msra.mxu0 0.0
  %2814 = vmatprep.subr.mxu0 0.0
  %2815 = vmatpush1.msra.mxu0 0.0
  %2816 = vmatprep.subr.mxu0 0.0
  %2817 = vmatpush1.msra.mxu0 0.0
  %2818 = vmatprep.subr.mxu0 0.0
  %2819 = vmatpush1.msra.mxu0 0.0
  %2820 = vmatprep.subr.mxu0 0.0
  %2821 = vmatpush1.msra.mxu0 0.0
  %2822 = vmatprep.subr.mxu0 0.0
  %2823 = vmatpush1.msra.mxu0 0.0
  %2824 = vmatprep.subr.mxu0 0.0
  %2825 = vmatpush1.msra.mxu0 0.0
  %2826 = vmatprep.subr.mxu0 0.0
  %2827 = vmatpush1.msra.mxu0 0.0
  %2828 = vmatprep.subr.mxu0 0.0
  %2829 = vmatpush1.msra.mxu0 0.0
  %2830 = vmatprep.subr.mxu0 0.0
  %2831 = vmatpush1.msra.mxu0 0.0
  %2832 = vmatprep.subr.mxu0 0.0
  %2833 = vmatpush1.msra.mxu0 0.0
  %2834 = vmatprep.subr.mxu0 0.0
  %2835 = vmatpush1.msra.mxu0 0.0
  %2836 = vmatprep.subr.mxu0 0.0
  %2837 = vmatpush1.msra.mxu0 0.0
  %2838 = vmatprep.subr.mxu0 0.0
  %2839 = vmatpush1.msra.mxu0 0.0
  %2840 = vmatprep.subr.mxu0 0.0
  %2841 = vmatpush1.msra.mxu0 0.0
  %2842 = vmatprep.subr.mxu0 0.0
  %2843 = vmatpush1.msra.mxu0 0.0
  %2844 = vmatprep.subr.mxu0 0.0
  %2845 = vmatpush1.msra.mxu0 0.0
  %2846 = vmatprep.subr.mxu0 0.0
  %2847 = vmatpush1.msra.mxu0 0.0
  %2848 = vmatprep.subr.mxu0 0.0
  %2849 = vmatpush1.msra.mxu0 0.0
  %2850 = vmatprep.mubr.f32.mxu0 0.0
  %v2851 = vand.u32 %v2105, 4294901760
  %2852 = vmatmul.mubr.f32.gmra.mrb[0].mxu0 %v2851
  %v2853 = vpop.f32.mrb[0].mxu0
  %v2854 = vadd.f32 %v2742, %v2853
  %v2855 = vpop.f32.mrb[0].mxu0
  %v2856 = vadd.f32 %v2744, %v2855
  %2857 = vdwg.mxu0
  %v2858 = vand.u32 %v2091, 4294901760
  %v2859 = vsub.f32 %v2091, %v2858
  %2860 = vmatprep.subr.mxu0 %v2859
  %v2861 = vand.u32 %v2090, 4294901760
  %v2862 = vsub.f32 %v2090, %v2861
  %2863 = vmatpush1.msra.mxu0 %v2862
  %v2864 = vand.u32 %v2095, 4294901760
  %v2865 = vsub.f32 %v2095, %v2864
  %2866 = vmatprep.subr.mxu0 %v2865
  %v2867 = vand.u32 %v2094, 4294901760
  %v2868 = vsub.f32 %v2094, %v2867
  %2869 = vmatpush1.msra.mxu0 %v2868
  %v2870 = vand.u32 %v2099, 4294901760
  %v2871 = vsub.f32 %v2099, %v2870
  %2872 = vmatprep.subr.mxu0 %v2871
  %v2873 = vand.u32 %v2098, 4294901760
  %v2874 = vsub.f32 %v2098, %v2873
  %2875 = vmatpush1.msra.mxu0 %v2874
  %v2876 = vand.u32 %v2117, 4294901760
  %v2877 = vsub.f32 %v2117, %v2876
  %2878 = vmatprep.subr.mxu0 %v2877
  %v2879 = vand.u32 %v2114, 4294901760
  %v2880 = vsub.f32 %v2114, %v2879
  %2881 = vmatpush1.msra.mxu0 %v2880
  %2882 = vmatprep.subr.mxu0 0.0
  %2883 = vmatpush1.msra.mxu0 0.0
  %2884 = vmatprep.subr.mxu0 0.0
  %2885 = vmatpush1.msra.mxu0 0.0
  %2886 = vmatprep.subr.mxu0 0.0
  %2887 = vmatpush1.msra.mxu0 0.0
  %2888 = vmatprep.subr.mxu0 0.0
  %2889 = vmatpush1.msra.mxu0 0.0
  %2890 = vmatprep.subr.mxu0 0.0
  %2891 = vmatpush1.msra.mxu0 0.0
  %2892 = vmatprep.subr.mxu0 0.0
  %2893 = vmatpush1.msra.mxu0 0.0
  %2894 = vmatprep.subr.mxu0 0.0
  %2895 = vmatpush1.msra.mxu0 0.0
  %2896 = vmatprep.subr.mxu0 0.0
  %2897 = vmatpush1.msra.mxu0 0.0
  %2898 = vmatprep.subr.mxu0 0.0
  %2899 = vmatpush1.msra.mxu0 0.0
  %2900 = vmatprep.subr.mxu0 0.0
  %2901 = vmatpush1.msra.mxu0 0.0
  %2902 = vmatprep.subr.mxu0 0.0
  %2903 = vmatpush1.msra.mxu0 0.0
  %2904 = vmatprep.subr.mxu0 0.0
  %2905 = vmatpush1.msra.mxu0 0.0
  %2906 = vmatprep.subr.mxu0 0.0
  %2907 = vmatpush1.msra.mxu0 0.0
  %2908 = vmatprep.subr.mxu0 0.0
  %2909 = vmatpush1.msra.mxu0 0.0
  %2910 = vmatprep.subr.mxu0 0.0
  %2911 = vmatpush1.msra.mxu0 0.0
  %2912 = vmatprep.subr.mxu0 0.0
  %2913 = vmatpush1.msra.mxu0 0.0
  %2914 = vmatprep.subr.mxu0 0.0
  %2915 = vmatpush1.msra.mxu0 0.0
  %2916 = vmatprep.subr.mxu0 0.0
  %2917 = vmatpush1.msra.mxu0 0.0
  %2918 = vmatprep.subr.mxu0 0.0
  %2919 = vmatpush1.msra.mxu0 0.0
  %2920 = vmatprep.subr.mxu0 0.0
  %2921 = vmatpush1.msra.mxu0 0.0
  %2922 = vmatprep.subr.mxu0 0.0
  %2923 = vmatpush1.msra.mxu0 0.0
  %2924 = vmatprep.subr.mxu0 0.0
  %2925 = vmatpush1.msra.mxu0 0.0
  %2926 = vmatprep.subr.mxu0 0.0
  %2927 = vmatpush1.msra.mxu0 0.0
  %2928 = vmatprep.subr.mxu0 0.0
  %2929 = vmatpush1.msra.mxu0 0.0
  %2930 = vmatprep.subr.mxu0 0.0
  %2931 = vmatpush1.msra.mxu0 0.0
  %2932 = vmatprep.subr.mxu0 0.0
  %2933 = vmatpush1.msra.mxu0 0.0
  %2934 = vmatprep.subr.mxu0 0.0
  %2935 = vmatpush1.msra.mxu0 0.0
  %2936 = vmatprep.subr.mxu0 0.0
  %2937 = vmatpush1.msra.mxu0 0.0
  %2938 = vmatprep.mubr.f32.mxu0 0.0
  %v2939 = vand.u32 %v2105, 4294901760
  %v2940 = vsub.f32 %v2105, %v2939
  %2941 = vmatmul.mubr.f32.gmra.mrb[0].mxu0 %v2940
  %v2942 = vpop.f32.mrb[0].mxu0
  %v2943 = vadd.f32 %v2854, %v2942
  %v2944 = vpop.f32.mrb[0].mxu0
  %v2945 = vadd.f32 %v2856, %v2944
  %2946 = vdwg.mxu0
  %v2947 = vand.u32 %v2091, 4294901760
  %2948 = vmatprep.subr.mxu0 %v2947
  %v2949 = vand.u32 %v2090, 4294901760
  %2950 = vmatpush1.msra.mxu0 %v2949
  %v2951 = vand.u32 %v2095, 4294901760
  %2952 = vmatprep.subr.mxu0 %v2951
  %v2953 = vand.u32 %v2094, 4294901760
  %2954 = vmatpush1.msra.mxu0 %v2953
  %v2955 = vand.u32 %v2099, 4294901760
  %2956 = vmatprep.subr.mxu0 %v2955
  %v2957 = vand.u32 %v2098, 4294901760
  %2958 = vmatpush1.msra.mxu0 %v2957
  %v2959 = vand.u32 %v2117, 4294901760
  %2960 = vmatprep.subr.mxu0 %v2959
  %v2961 = vand.u32 %v2114, 4294901760
  %2962 = vmatpush1.msra.mxu0 %v2961
  %2963 = vmatprep.subr.mxu0 0.0
  %2964 = vmatpush1.msra.mxu0 0.0
  %2965 = vmatprep.subr.mxu0 0.0
  %2966 = vmatpush1.msra.mxu0 0.0
  %2967 = vmatprep.subr.mxu0 0.0
  %2968 = vmatpush1.msra.mxu0 0.0
  %2969 = vmatprep.subr.mxu0 0.0
  %2970 = vmatpush1.msra.mxu0 0.0
  %2971 = vmatprep.subr.mxu0 0.0
  %2972 = vmatpush1.msra.mxu0 0.0
  %2973 = vmatprep.subr.mxu0 0.0
  %2974 = vmatpush1.msra.mxu0 0.0
  %2975 = vmatprep.subr.mxu0 0.0
  %2976 = vmatpush1.msra.mxu0 0.0
  %2977 = vmatprep.subr.mxu0 0.0
  %2978 = vmatpush1.msra.mxu0 0.0
  %2979 = vmatprep.subr.mxu0 0.0
  %2980 = vmatpush1.msra.mxu0 0.0
  %2981 = vmatprep.subr.mxu0 0.0
  %2982 = vmatpush1.msra.mxu0 0.0
  %2983 = vmatprep.subr.mxu0 0.0
  %2984 = vmatpush1.msra.mxu0 0.0
  %2985 = vmatprep.subr.mxu0 0.0
  %2986 = vmatpush1.msra.mxu0 0.0
  %2987 = vmatprep.subr.mxu0 0.0
  %2988 = vmatpush1.msra.mxu0 0.0
  %2989 = vmatprep.subr.mxu0 0.0
  %2990 = vmatpush1.msra.mxu0 0.0
  %2991 = vmatprep.subr.mxu0 0.0
  %2992 = vmatpush1.msra.mxu0 0.0
  %2993 = vmatprep.subr.mxu0 0.0
  %2994 = vmatpush1.msra.mxu0 0.0
  %2995 = vmatprep.subr.mxu0 0.0
  %2996 = vmatpush1.msra.mxu0 0.0
  %2997 = vmatprep.subr.mxu0 0.0
  %2998 = vmatpush1.msra.mxu0 0.0
  %2999 = vmatprep.subr.mxu0 0.0
  %3000 = vmatpush1.msra.mxu0 0.0
  %3001 = vmatprep.subr.mxu0 0.0
  %3002 = vmatpush1.msra.mxu0 0.0
  %3003 = vmatprep.subr.mxu0 0.0
  %3004 = vmatpush1.msra.mxu0 0.0
  %3005 = vmatprep.subr.mxu0 0.0
  %3006 = vmatpush1.msra.mxu0 0.0
  %3007 = vmatprep.subr.mxu0 0.0
  %3008 = vmatpush1.msra.mxu0 0.0
  %3009 = vmatprep.subr.mxu0 0.0
  %3010 = vmatpush1.msra.mxu0 0.0
  %3011 = vmatprep.subr.mxu0 0.0
  %3012 = vmatpush1.msra.mxu0 0.0
  %3013 = vmatprep.subr.mxu0 0.0
  %3014 = vmatpush1.msra.mxu0 0.0
  %3015 = vmatprep.subr.mxu0 0.0
  %3016 = vmatpush1.msra.mxu0 0.0
  %3017 = vmatprep.subr.mxu0 0.0
  %3018 = vmatpush1.msra.mxu0 0.0
  %3019 = vmatprep.mubr.f32.mxu0 0.0
  %v3020 = vand.u32 %v2105, 4294901760
  %v3021 = vsub.f32 %v2105, %v3020
  %v3022 = vand.u32 %v3021, 4294901760
  %3023 = vmatmul.mubr.f32.gmra.mrb[0].mxu0 %v3022
  %v3024 = vpop.f32.mrb[0].mxu0
  %v3025 = vadd.f32 %v2943, %v3024
  %v3026 = vpop.f32.mrb[0].mxu0
  %v3027 = vadd.f32 %v2945, %v3026
  %3028 = vdwg.mxu0
  %v3029 = vand.u32 %v2091, 4294901760
  %v3030 = vsub.f32 %v2091, %v3029
  %v3031 = vand.u32 %v3030, 4294901760
  %3032 = vmatprep.subr.mxu0 %v3031
  %v3033 = vand.u32 %v2090, 4294901760
  %v3034 = vsub.f32 %v2090, %v3033
  %v3035 = vand.u32 %v3034, 4294901760
  %3036 = vmatpush1.msra.mxu0 %v3035
  %v3037 = vand.u32 %v2095, 4294901760
  %v3038 = vsub.f32 %v2095, %v3037
  %v3039 = vand.u32 %v3038, 4294901760
  %3040 = vmatprep.subr.mxu0 %v3039
  %v3041 = vand.u32 %v2094, 4294901760
  %v3042 = vsub.f32 %v2094, %v3041
  %v3043 = vand.u32 %v3042, 4294901760
  %3044 = vmatpush1.msra.mxu0 %v3043
  %v3045 = vand.u32 %v2099, 4294901760
  %v3046 = vsub.f32 %v2099, %v3045
  %v3047 = vand.u32 %v3046, 4294901760
  %3048 = vmatprep.subr.mxu0 %v3047
  %v3049 = vand.u32 %v2098, 4294901760
  %v3050 = vsub.f32 %v2098, %v3049
  %v3051 = vand.u32 %v3050, 4294901760
  %3052 = vmatpush1.msra.mxu0 %v3051
  %v3053 = vand.u32 %v2117, 4294901760
  %v3054 = vsub.f32 %v2117, %v3053
  %v3055 = vand.u32 %v3054, 4294901760
  %3056 = vmatprep.subr.mxu0 %v3055
  %v3057 = vand.u32 %v2114, 4294901760
  %v3058 = vsub.f32 %v2114, %v3057
  %v3059 = vand.u32 %v3058, 4294901760
  %3060 = vmatpush1.msra.mxu0 %v3059
  %3061 = vmatprep.subr.mxu0 0.0
  %3062 = vmatpush1.msra.mxu0 0.0
  %3063 = vmatprep.subr.mxu0 0.0
  %3064 = vmatpush1.msra.mxu0 0.0
  %3065 = vmatprep.subr.mxu0 0.0
  %3066 = vmatpush1.msra.mxu0 0.0
  %3067 = vmatprep.subr.mxu0 0.0
  %3068 = vmatpush1.msra.mxu0 0.0
  %3069 = vmatprep.subr.mxu0 0.0
  %3070 = vmatpush1.msra.mxu0 0.0
  %3071 = vmatprep.subr.mxu0 0.0
  %3072 = vmatpush1.msra.mxu0 0.0
  %3073 = vmatprep.subr.mxu0 0.0
  %3074 = vmatpush1.msra.mxu0 0.0
  %3075 = vmatprep.subr.mxu0 0.0
  %3076 = vmatpush1.msra.mxu0 0.0
  %3077 = vmatprep.subr.mxu0 0.0
  %3078 = vmatpush1.msra.mxu0 0.0
  %3079 = vmatprep.subr.mxu0 0.0
  %3080 = vmatpush1.msra.mxu0 0.0
  %3081 = vmatprep.subr.mxu0 0.0
  %3082 = vmatpush1.msra.mxu0 0.0
  %3083 = vmatprep.subr.mxu0 0.0
  %3084 = vmatpush1.msra.mxu0 0.0
  %3085 = vmatprep.subr.mxu0 0.0
  %3086 = vmatpush1.msra.mxu0 0.0
  %3087 = vmatprep.subr.mxu0 0.0
  %3088 = vmatpush1.msra.mxu0 0.0
  %3089 = vmatprep.subr.mxu0 0.0
  %3090 = vmatpush1.msra.mxu0 0.0
  %3091 = vmatprep.subr.mxu0 0.0
  %3092 = vmatpush1.msra.mxu0 0.0
  %3093 = vmatprep.subr.mxu0 0.0
  %3094 = vmatpush1.msra.mxu0 0.0
  %3095 = vmatprep.subr.mxu0 0.0
  %3096 = vmatpush1.msra.mxu0 0.0
  %3097 = vmatprep.subr.mxu0 0.0
  %3098 = vmatpush1.msra.mxu0 0.0
  %3099 = vmatprep.subr.mxu0 0.0
  %3100 = vmatpush1.msra.mxu0 0.0
  %3101 = vmatprep.subr.mxu0 0.0
  %3102 = vmatpush1.msra.mxu0 0.0
  %3103 = vmatprep.subr.mxu0 0.0
  %3104 = vmatpush1.msra.mxu0 0.0
  %3105 = vmatprep.subr.mxu0 0.0
  %3106 = vmatpush1.msra.mxu0 0.0
  %3107 = vmatprep.subr.mxu0 0.0
  %3108 = vmatpush1.msra.mxu0 0.0
  %3109 = vmatprep.subr.mxu0 0.0
  %3110 = vmatpush1.msra.mxu0 0.0
  %3111 = vmatprep.subr.mxu0 0.0
  %3112 = vmatpush1.msra.mxu0 0.0
  %3113 = vmatprep.subr.mxu0 0.0
  %3114 = vmatpush1.msra.mxu0 0.0
  %3115 = vmatprep.subr.mxu0 0.0
  %3116 = vmatpush1.msra.mxu0 0.0
  %3117 = vmatprep.mubr.f32.mxu0 0.0
  %v3118 = vand.u32 %v2105, 4294901760
  %3119 = vmatmul.mubr.f32.gmra.mrb[0].mxu0 %v3118
  %v3120 = vpop.f32.mrb[0].mxu0
  %v3121 = vadd.f32 %v3025, %v3120
  %v3122 = vpop.f32.mrb[0].mxu0
  %v3123 = vadd.f32 %v3027, %v3122
  %3124 = vdwg.mxu0
  %v3125 = vand.u32 %v2091, 4294901760
  %3126 = vmatprep.subr.mxu0 %v3125
  %v3127 = vand.u32 %v2090, 4294901760
  %3128 = vmatpush1.msra.mxu0 %v3127
  %v3129 = vand.u32 %v2095, 4294901760
  %3130 = vmatprep.subr.mxu0 %v3129
  %v3131 = vand.u32 %v2094, 4294901760
  %3132 = vmatpush1.msra.mxu0 %v3131
  %v3133 = vand.u32 %v2099, 4294901760
  %3134 = vmatprep.subr.mxu0 %v3133
  %v3135 = vand.u32 %v2098, 4294901760
  %3136 = vmatpush1.msra.mxu0 %v3135
  %v3137 = vand.u32 %v2117, 4294901760
  %3138 = vmatprep.subr.mxu0 %v3137
  %v3139 = vand.u32 %v2114, 4294901760
  %3140 = vmatpush1.msra.mxu0 %v3139
  %3141 = vmatprep.subr.mxu0 0.0
  %3142 = vmatpush1.msra.mxu0 0.0
  %3143 = vmatprep.subr.mxu0 0.0
  %3144 = vmatpush1.msra.mxu0 0.0
  %3145 = vmatprep.subr.mxu0 0.0
  %3146 = vmatpush1.msra.mxu0 0.0
  %3147 = vmatprep.subr.mxu0 0.0
  %3148 = vmatpush1.msra.mxu0 0.0
  %3149 = vmatprep.subr.mxu0 0.0
  %3150 = vmatpush1.msra.mxu0 0.0
  %3151 = vmatprep.subr.mxu0 0.0
  %3152 = vmatpush1.msra.mxu0 0.0
  %3153 = vmatprep.subr.mxu0 0.0
  %3154 = vmatpush1.msra.mxu0 0.0
  %3155 = vmatprep.subr.mxu0 0.0
  %3156 = vmatpush1.msra.mxu0 0.0
  %3157 = vmatprep.subr.mxu0 0.0
  %3158 = vmatpush1.msra.mxu0 0.0
  %3159 = vmatprep.subr.mxu0 0.0
  %3160 = vmatpush1.msra.mxu0 0.0
  %3161 = vmatprep.subr.mxu0 0.0
  %3162 = vmatpush1.msra.mxu0 0.0
  %3163 = vmatprep.subr.mxu0 0.0
  %3164 = vmatpush1.msra.mxu0 0.0
  %3165 = vmatprep.subr.mxu0 0.0
  %3166 = vmatpush1.msra.mxu0 0.0
  %3167 = vmatprep.subr.mxu0 0.0
  %3168 = vmatpush1.msra.mxu0 0.0
  %3169 = vmatprep.subr.mxu0 0.0
  %3170 = vmatpush1.msra.mxu0 0.0
  %3171 = vmatprep.subr.mxu0 0.0
  %3172 = vmatpush1.msra.mxu0 0.0
  %3173 = vmatprep.subr.mxu0 0.0
  %3174 = vmatpush1.msra.mxu0 0.0
  %3175 = vmatprep.subr.mxu0 0.0
  %3176 = vmatpush1.msra.mxu0 0.0
  %3177 = vmatprep.subr.mxu0 0.0
  %3178 = vmatpush1.msra.mxu0 0.0
  %3179 = vmatprep.subr.mxu0 0.0
  %3180 = vmatpush1.msra.mxu0 0.0
  %3181 = vmatprep.subr.mxu0 0.0
  %3182 = vmatpush1.msra.mxu0 0.0
  %3183 = vmatprep.subr.mxu0 0.0
  %3184 = vmatpush1.msra.mxu0 0.0
  %3185 = vmatprep.subr.mxu0 0.0
  %3186 = vmatpush1.msra.mxu0 0.0
  %3187 = vmatprep.subr.mxu0 0.0
  %3188 = vmatpush1.msra.mxu0 0.0
  %3189 = vmatprep.subr.mxu0 0.0
  %3190 = vmatpush1.msra.mxu0 0.0
  %3191 = vmatprep.subr.mxu0 0.0
  %3192 = vmatpush1.msra.mxu0 0.0
  %3193 = vmatprep.subr.mxu0 0.0
  %3194 = vmatpush1.msra.mxu0 0.0
  %3195 = vmatprep.subr.mxu0 0.0
  %3196 = vmatpush1.msra.mxu0 0.0
  %3197 = vmatprep.mubr.f32.mxu0 0.0
  %v3198 = vand.u32 %v2105, 4294901760
  %3199 = vmatmul.mubr.f32.gmra.mrb[0].mxu0 %v3198
  %v3200 = vpop.f32.mrb[0].mxu0
  %v3201 = vadd.f32 %v3121, %v3200
  %v3202 = vpop.f32.mrb[0].mxu0
  %v3203 = vadd.f32 %v3123, %v3202
  %3204 = vdwg.mxu0
  %v3205 = vsel %vm499, %v2658, 0.0
  %v3206 = vsel %vm499, %v2660, 0.0
  %v3207 = vadd.f32 %v3205, %v3206
  %v3208 = vsel %vm499, %v3201, 0.0
  %v3209 = vadd.f32 %v3207, %v3208
  %v3210 = vsel %vm499, %v3203, 0.0
  %v3211 = vadd.f32 %v3209, %v3210
  %3212 = vadd.xlane.f32.xlu0 %v3211
  %v3213 = vpop.xlane.xlu0 %3212
  %v3214 = vmul.f32 %v2658, %v2658
  %v3215 = vmul.f32 %v2660, %v2660
  %v3216 = vmul.f32 %v3201, %v3201
  %v3217 = vmul.f32 %v3203, %v3203
  %v3218 = vsel %vm499, %v3214, 0.0
  %v3219 = vsel %vm499, %v3215, 0.0
  %v3220 = vadd.f32 %v3218, %v3219
  %v3221 = vsel %vm499, %v3216, 0.0
  %v3222 = vadd.f32 %v3220, %v3221
  %v3223 = vsel %vm499, %v3217, 0.0
  %v3224 = vadd.f32 %v3222, %v3223
  %3225 = vadd.xlane.f32.xlu0 %v3224
  %v3226 = vpop.xlane.xlu0 %3225
  %v3227 = vmul.f32 %v3213, 0.001953125
  %v3228 = vmul.f32 %v3226, 0.001953125
  %v3229 = vmul.f32 %v3227, %v3227
  %v3230 = vsub.f32 %v3228, %v3229
  %v3231 = vld [vmem:[%s6] sm:$0x7]
  %v3232 = vadd.f32 %v3230, 1e-05
  %v3233 = vrsqrt.pop %v3232
  %v3234 = vmul.f32 %v3231, %v3233
  %v3235 = vsub.f32 %v2658, %v3227
  %v3236 = vsub.f32 %v2660, %v3227
  %v3237 = vsub.f32 %v3201, %v3227
  %v3238 = vsub.f32 %v3203, %v3227
  %3240 = vset.pattern.permute.xlu0 0
  %3241 = vperm.xlu0 %3240, %v3234
  %v3242 = vpop.permute.xlu0 %3241
  %v3244 = vmul.f32 %v3235, %v3242
  %v3245 = vmul.f32 %v3236, %v3242
  %v3246 = vmul.f32 %v3237, %v3242
  %v3247 = vmul.f32 %v3238, %v3242
  %v3248 = vld [vmem:[%s7] sm:$0x7]
  %3250 = vset.pattern.permute.xlu0 0
  %3251 = vperm.xlu0 %3250, %v3248
  %v3252 = vpop.permute.xlu0 %3251
  %v3254 = vadd.f32 %v3244, %v3252
  %v3255 = vadd.f32 %v3245, %v3252
  %v3256 = vadd.f32 %v3246, %v3252
  %v3257 = vadd.f32 %v3247, %v3252
  %v3258 = vadd.f32 %v3254, %v29
  %v3259 = vadd.f32 %v3255, %v33
  %v3260 = vadd.f32 %v3256, %v30
  %v3261 = vadd.f32 %v3257, %v34
  %v3262 = vmax.f32 %v3258, 0.0
  %v3263 = vmax.f32 %v3259, 0.0
  %v3264 = vmax.f32 %v3260, 0.0
  %v3265 = vmax.f32 %v3261, 0.0
  %v3270 = vcombine.low %v3262, %v3263
  %v3271 = vcombine.low %v3264, %v3265
  %3274 = vst [vmem:[%s8] sm:$0x77] %v3270
  %3275 = vst [vmem:[%s8 + $0x8] sm:$0x77] %v3271
  // Predicated region
  $region34: #{resblock_forward.1} parent=0 // pred_check
    _
  $region35: #{resblock_forward.1} parent=0 // pred_check_branch
    %3277 = sbr.rel (0) target = $region37
  $region36: #{resblock_forward.1} parent=0 // pred_region
    _
  $region37: #{resblock_forward.1} parent=0 // pred_fallthru
    _
  // Predicated region
  $region38: #{resblock_forward.1} parent=0 // pred_check
    _
  $region39: #{resblock_forward.1} parent=0 // pred_check_branch
    %3279 = sbr.rel (0) target = $region41
  $region40: #{resblock_forward.1} parent=0 // pred_region
    _
  $region41: #{resblock_forward.1} parent=0 // pred_fallthru
    _

</llo_original>
